<compile_context>
chip_gen: v7x
topology: tpu7x:2x2x1
jax: 0.10.0
libtpu: 0.0.40
codegen_flags: <defaults>
</compile_context>

<pallas_src>
import functools

import jax
import jax.numpy as jnp
from jax import lax
from jax.experimental import pallas as pl
from jax.experimental.pallas import tpu as pltpu


# ----------------------------------------------------------------------------
# Pallas kernels
# ----------------------------------------------------------------------------
def _reduce_kernel(hr_ref, m_ref, t_ref):
    """Accumulate T = HR^T @ M over row tiles of the node axis (grid reduction)."""
    @pl.when(pl.program_id(0) == 0)
    def _():
        t_ref[...] = jnp.zeros_like(t_ref)
    # contract the node (row) dimension of both operands: (tm, nE)^T @ (tm, E)
    t_ref[...] += lax.dot_general(
        hr_ref[...], m_ref[...],
        dimension_numbers=(((0,), (0,)), ((), ())),
        preferred_element_type=jnp.float32)


def _update_kernel(hl_ref, t_ref, m_ref, w1t_ref, b1_ref, o_ref):
    """o = relu( (HL_tile @ T) @ W1^T + b1 + M_tile )."""
    agg = jnp.dot(hl_ref[...], t_ref[...], preferred_element_type=jnp.float32)
    h = jnp.dot(agg, w1t_ref[...], preferred_element_type=jnp.float32) + b1_ref[...]
    o_ref[...] = jnp.maximum(h + m_ref[...], 0.0).astype(o_ref.dtype)


def _update_final_kernel(hl_ref, t_ref, m_ref, w1t_ref, b1_ref,
                         w2t_ref, b2_ref, e_ref):
    """Last layer fused with fc2: e = relu(fc1(HL@T) + M) @ W2^T + b2."""
    agg = jnp.dot(hl_ref[...], t_ref[...], preferred_element_type=jnp.float32)
    h = jnp.dot(agg, w1t_ref[...], preferred_element_type=jnp.float32) + b1_ref[...]
    m_new = jnp.maximum(h + m_ref[...], 0.0)
    e_ref[...] = (jnp.dot(m_new, w2t_ref[...], preferred_element_type=jnp.float32)
                  + b2_ref[...]).astype(e_ref.dtype)


def _linear_kernel(x_ref, wt_ref, b_ref, o_ref):
    """x @ W^T + b (only used when layer_size == 0)."""
    o_ref[...] = (jnp.dot(x_ref[...], wt_ref[...], preferred_element_type=jnp.float32)
                  + b_ref[...]).astype(o_ref.dtype)


# ----------------------------------------------------------------------------
# pallas_call wrappers
# ----------------------------------------------------------------------------
def _choose_tile(n, target=256):
    """Large row tile (amortize ~0.35us/step), but keep >= 2 programs on the
    parallel axis so both TensorCores on a 2-TC chip (v7x) get work."""
    if n >= 2 * target:
        return target
    half = -(-n // 2)                      # ceil(n / 2)
    return max(8, -(-half // 8) * 8)       # round up to a multiple of 8


def _reduce_T(hr, m, *, tm):
    n_pad, ne = hr.shape
    e = m.shape[1]
    return pl.pallas_call(
        _reduce_kernel,
        out_shape=jax.ShapeDtypeStruct((ne, e), jnp.float32),
        grid_spec=pltpu.PrefetchScalarGridSpec(
            num_scalar_prefetch=0,
            grid=(n_pad // tm,),
            in_specs=[
                pl.BlockSpec((tm, ne), lambda i: (i, 0)),   # HR row tile
                pl.BlockSpec((tm, e), lambda i: (i, 0)),    # M row tile
            ],
            out_specs=pl.BlockSpec((ne, e), lambda i: (0, 0)),  # resident acc
        ),
        compiler_params=pltpu.CompilerParams(dimension_semantics=("arbitrary",)),
    )(hr, m)


def _layer_update(hl, T, m, w1t, b1r, *, tm):
    n_pad, ne = hl.shape
    e = m.shape[1]
    return pl.pallas_call(
        _update_kernel,
        out_shape=jax.ShapeDtypeStruct((n_pad, e), jnp.float32),
        grid_spec=pltpu.PrefetchScalarGridSpec(
            num_scalar_prefetch=0,
            grid=(n_pad // tm,),
            in_specs=[
                pl.BlockSpec((tm, ne), lambda i: (i, 0)),   # HL row tile
                pl.BlockSpec((ne, e), lambda i: (0, 0)),    # T (small, resident)
                pl.BlockSpec((tm, e), lambda i: (i, 0)),    # residual M row tile
                pl.BlockSpec((e, e), lambda i: (0, 0)),     # fc1 weight^T
                pl.BlockSpec((1, e), lambda i: (0, 0)),     # fc1 bias
            ],
            out_specs=pl.BlockSpec((tm, e), lambda i: (i, 0)),
        ),
        compiler_params=pltpu.CompilerParams(dimension_semantics=("parallel",)),
    )(hl, T, m, w1t, b1r)


def _layer_update_final(hl, T, m, w1t, b1r, w2t, b2r, *, tm):
    n_pad, ne = hl.shape
    e = m.shape[1]
    e_out = w2t.shape[1]
    return pl.pallas_call(
        _update_final_kernel,
        out_shape=jax.ShapeDtypeStruct((n_pad, e_out), jnp.float32),
        grid_spec=pltpu.PrefetchScalarGridSpec(
            num_scalar_prefetch=0,
            grid=(n_pad // tm,),
            in_specs=[
                pl.BlockSpec((tm, ne), lambda i: (i, 0)),
                pl.BlockSpec((ne, e), lambda i: (0, 0)),
                pl.BlockSpec((tm, e), lambda i: (i, 0)),
                pl.BlockSpec((e, e), lambda i: (0, 0)),
                pl.BlockSpec((1, e), lambda i: (0, 0)),
                pl.BlockSpec((e, e_out), lambda i: (0, 0)),  # fc2 weight^T
                pl.BlockSpec((1, e_out), lambda i: (0, 0)),  # fc2 bias
            ],
            out_specs=pl.BlockSpec((tm, e_out), lambda i: (i, 0)),
        ),
        compiler_params=pltpu.CompilerParams(dimension_semantics=("parallel",)),
    )(hl, T, m, w1t, b1r, w2t, b2r)


def _linear(x, wt, br, *, tm):
    n_pad, e_in = x.shape
    e_out = wt.shape[1]
    return pl.pallas_call(
        _linear_kernel,
        out_shape=jax.ShapeDtypeStruct((n_pad, e_out), jnp.float32),
        grid_spec=pltpu.PrefetchScalarGridSpec(
            num_scalar_prefetch=0,
            grid=(n_pad // tm,),
            in_specs=[
                pl.BlockSpec((tm, e_in), lambda i: (i, 0)),
                pl.BlockSpec((e_in, e_out), lambda i: (0, 0)),
                pl.BlockSpec((1, e_out), lambda i: (0, 0)),
            ],
            out_specs=pl.BlockSpec((tm, e_out), lambda i: (i, 0)),
        ),
        compiler_params=pltpu.CompilerParams(dimension_semantics=("parallel",)),
    )(x, wt, br)


# ----------------------------------------------------------------------------
# Forward pass (glue in plain JAX: degree scalings, padding, final row gather)
# ----------------------------------------------------------------------------
def _factorize(H, k):
    """Return HL, HR with adj/k @ M == HL @ (HR^T @ M); adj as in the module."""
    d = jnp.sum(H, axis=1)                 # node degree (W = I)
    de = jnp.sum(H, axis=0)                # hyperedge degree
    d_inv_sqrt = jnp.where(d > 0, lax.rsqrt(jnp.maximum(d, 1e-30)), 0.0)
    de_inv = jnp.where(de > 0, 1.0 / jnp.maximum(de, 1e-30), 0.0)
    HR = d_inv_sqrt[:, None] * H                       # D^{-1/2} H
    HL = HR * de_inv[None, :] * (1.0 / k)              # D^{-1/2} H De^{-1} / k
    return HL.astype(jnp.float32), HR.astype(jnp.float32)


def dhcf_forward(params, HU, HI, user_list, pos_item_list, neg_item_list,
                 layer_size, k, tm_target=256):
    # Hoisted once (shared across layers and across the user/item sides).
    w1t = jnp.transpose(params["w1"])
    b1r = params["b1"].reshape(1, -1)
    w2t = jnp.transpose(params["w2"])
    b2r = params["b2"].reshape(1, -1)

    def run_side(H, M):
        n, _ = M.shape
        HL, HR = _factorize(H, k)
        tm = _choose_tile(n, tm_target)
        n_pad = -(-n // tm) * tm
        if n_pad != n:
            pad = n_pad - n
            # zero-padded rows of HR contribute nothing to T; padded output
            # rows are sliced away at the end.
            HL = jnp.pad(HL, ((0, pad), (0, 0)))
            HR = jnp.pad(HR, ((0, pad), (0, 0)))
            M = jnp.pad(M, ((0, pad), (0, 0)))
        if layer_size == 0:
            E = _linear(M, w2t, b2r, tm=tm)
        else:
            for layer in range(layer_size):
                T = _reduce_T(HR, M, tm=tm)
                if layer + 1 < layer_size:
                    M = _layer_update(HL, T, M, w1t, b1r, tm=tm)
                else:
                    E = _layer_update_final(HL, T, M, w1t, b1r, w2t, b2r, tm=tm)
        return E[:n]

    EU = run_side(HU, params["emb_user"])
    EI = run_side(HI, params["emb_item"])
    # TODO(synk): final fancy-index row gather kept in plain JAX (XLA gather).
    return EU[user_list, :], EI[pos_item_list, :], EI[neg_item_list, :]


# ----------------------------------------------------------------------------
# Pure-JAX reference (mirrors the PyTorch module: dense normalized adjacency)
# ----------------------------------------------------------------------------
def _normal_adj_dense(H):
    d = jnp.sum(H, axis=1)
    de = jnp.sum(H, axis=0)
    d_inv_sqrt = jnp.where(d > 0, jnp.power(jnp.maximum(d, 1e-30), -0.5), 0.0)
    de_inv = jnp.where(de > 0, 1.0 / jnp.maximum(de, 1e-30), 0.0)
    M = d_inv_sqrt[:, None] * H
    M = M * de_inv[None, :]
    adj = M @ H.T
    adj = adj * d_inv_sqrt[None, :]
    return adj.astype(jnp.float32)


def dhcf_forward_ref(params, HU, HI, user_list, pos_item_list, neg_item_list,
                     layer_size, k):
    user_adj = _normal_adj_dense(HU) / k
    item_adj = _normal_adj_dense(HI) / k
    MU = params["emb_user"]
    MI = params["emb_item"]
    for _ in range(layer_size):
        MU = jnp.maximum((user_adj @ MU) @ params["w1"].T + params["b1"] + MU, 0.0)
        MI = jnp.maximum((item_adj @ MI) @ params["w1"].T + params["b1"] + MI, 0.0)
    EU = MU @ params["w2"].T + params["b2"]
    EI = MI @ params["w2"].T + params["b2"]
    return EU[user_list, :], EI[pos_item_list, :], EI[neg_item_list, :]


if __name__ == "__main__":
    # Small config consistent with the module's __init__ / forward
    user_n, item_n = 128, 128
    n_hedges_u, n_hedges_i = 64, 96
    emb_size, emb_size_end = 32, 16
    layer_size, k = 2, 2.0
    batch = 8

    key = jax.random.PRNGKey(0)
    k1, k2, k3, k4, k5, k6, k7, k8, k9, k10 = jax.random.split(key, 10)

    # Binary hypergraph incidence matrices HU [user_n, |E_u|], HI [item_n, |E_i|]
    HU = (jax.random.uniform(k1, (user_n, n_hedges_u)) < 0.15).astype(jnp.float32)
    HI = (jax.random.uniform(k2, (item_n, n_hedges_i)) < 0.15).astype(jnp.float32)

    params = {
        "emb_user": jax.random.normal(k3, (user_n, emb_size), jnp.float32),
        "emb_item": jax.random.normal(k4, (item_n, emb_size), jnp.float32),
        "w1": jax.random.uniform(k5, (emb_size, emb_size), jnp.float32,
                                 -1.0 / emb_size ** 0.5, 1.0 / emb_size ** 0.5),
        "b1": jax.random.uniform(k6, (emb_size,), jnp.float32,
                                 -1.0 / emb_size ** 0.5, 1.0 / emb_size ** 0.5),
        "w2": jax.random.uniform(k7, (emb_size_end, emb_size), jnp.float32,
                                 -1.0 / emb_size ** 0.5, 1.0 / emb_size ** 0.5),
        "b2": jax.random.uniform(k8, (emb_size_end,), jnp.float32,
                                 -1.0 / emb_size ** 0.5, 1.0 / emb_size ** 0.5),
    }

    user_list = jax.random.randint(k9, (batch,), 0, user_n)
    pos_item_list = jax.random.randint(k10, (batch,), 0, item_n)
    neg_item_list = (pos_item_list + 7) % item_n

    fwd = jax.jit(functools.partial(dhcf_forward, layer_size=layer_size, k=k))
    out = fwd(params, HU, HI, user_list, pos_item_list, neg_item_list)
    out = jax.block_until_ready(out)

    ref = dhcf_forward_ref(params, HU, HI, user_list, pos_item_list,
                           neg_item_list, layer_size, k)
    for o, r in zip(out, ref):
        assert o.shape == r.shape and o.dtype == jnp.float32
        # factorized aggregation reorders the f32 reductions -> small tolerance
        assert jnp.allclose(o, r, atol=1e-3, rtol=1e-3), \
            float(jnp.max(jnp.abs(o - r)))

    print("KERNEL_OK")
</pallas_src>

<mosaic_0001>
module attributes {stable_mosaic.version = 11 : i64} {
  func.func @_reduce_kernel(%arg0: i32, %arg1: memref<64x96xf32, #tpu.memory_space<vmem>>, %arg2: memref<64x32xf32, #tpu.memory_space<vmem>>, %arg3: memref<96x32xf32, #tpu.memory_space<vmem>>) attributes {dimension_semantics = [#tpu.dimension_semantics<arbitrary>], iteration_bounds = array<i64: 2>, scalar_prefetch = 0 : i64, scratch_operands = 0 : i64, tpu.core_type = #tpu.core_type<tc>, window_params = [{transform_indices = @transform_0, window_bounds = array<i64: 64, 96>}, {transform_indices = @transform_1, window_bounds = array<i64: 64, 32>}, {pipeline_mode = #tpu.pipeline_mode<synchronous>, transform_indices = @transform_2, window_bounds = array<i64: 96, 32>}]} {
    %c0_i32 = arith.constant 0 : i32
    %0 = arith.cmpi eq, %arg0, %c0_i32 : i32
    %1 = arith.extui %0 : i1 to i32
    %c0_i32_0 = arith.constant 0 : i32
    %2 = arith.cmpi ne, %1, %c0_i32_0 : i32
    scf.if %2 {
      %cst_8 = arith.constant 0.000000e+00 : f32
      %9 = vector.broadcast %cst_8 : f32 to vector<96x32xf32>
      %c0_9 = arith.constant 0 : index
      %c0_10 = arith.constant 0 : index
      %10 = vector.load %arg3[%c0_9, %c0_10] : memref<96x32xf32, #tpu.memory_space<vmem>>, vector<96x32xf32>
      tpu.vector_store %arg3[%c0_9, %c0_10], %9 {strides = array<i32>} : memref<96x32xf32, #tpu.memory_space<vmem>>, vector<96x32xf32>,
    } else {
    }
    %c0 = arith.constant 0 : index
    %c0_1 = arith.constant 0 : index
    %3 = vector.load %arg3[%c0, %c0_1] : memref<96x32xf32, #tpu.memory_space<vmem>>, vector<96x32xf32>
    %c0_2 = arith.constant 0 : index
    %c0_3 = arith.constant 0 : index
    %4 = vector.load %arg1[%c0_2, %c0_3] : memref<64x96xf32, #tpu.memory_space<vmem>>, vector<64x96xf32>
    %c0_4 = arith.constant 0 : index
    %c0_5 = arith.constant 0 : index
    %5 = vector.load %arg2[%c0_4, %c0_5] : memref<64x32xf32, #tpu.memory_space<vmem>>, vector<64x32xf32>
    %cst = arith.constant dense<0.000000e+00> : vector<96x32xf32>
    %6 = tpu.matmul %4, %5, %cst {dimension_numbers = #tpu.dot_dimension_numbers<[0], [0], [1], [1], [0, 1, 1, 1], [], []>} : vector<64x96xf32>, vector<64x32xf32>, vector<96x32xf32> -> vector<96x32xf32>
    %7 = arith.addf %3, %6 : vector<96x32xf32>
    %c0_6 = arith.constant 0 : index
    %c0_7 = arith.constant 0 : index
    %8 = vector.load %arg3[%c0_6, %c0_7] : memref<96x32xf32, #tpu.memory_space<vmem>>, vector<96x32xf32>
    tpu.vector_store %arg3[%c0_6, %c0_7], %7 {strides = array<i32>} : memref<96x32xf32, #tpu.memory_space<vmem>>, vector<96x32xf32>,
    return
  }
  func.func @transform_0(%arg0: i32) -> (i32, i32) {
    %c0_i32 = arith.constant 0 : i32
    %c0_i32_0 = arith.constant 0 : i32
    return %arg0, %c0_i32 : i32, i32
  }
  func.func @transform_1(%arg0: i32) -> (i32, i32) {
    %c0_i32 = arith.constant 0 : i32
    %c0_i32_0 = arith.constant 0 : i32
    return %arg0, %c0_i32 : i32, i32
  }
  func.func @transform_2(%arg0: i32) -> (i32, i32) {
    %c0_i32 = arith.constant 0 : i32
    %c0_i32_0 = arith.constant 0 : i32
    %c0_i32_1 = arith.constant 0 : i32
    return %c0_i32, %c0_i32_0 : i32, i32
  }
}

module attributes {stable_mosaic.version = 11 : i64} {
  func.func @_update_kernel(%arg0: i32, %arg1: memref<64x96xf32, #tpu.memory_space<vmem>>, %arg2: memref<96x32xf32, #tpu.memory_space<vmem>>, %arg3: memref<64x32xf32, #tpu.memory_space<vmem>>, %arg4: memref<32x32xf32, #tpu.memory_space<vmem>>, %arg5: memref<1x32xf32, #tpu.memory_space<vmem>>, %arg6: memref<64x32xf32, #tpu.memory_space<vmem>>) attributes {dimension_semantics = [#tpu.dimension_semantics<parallel>], iteration_bounds = array<i64: 2>, scalar_prefetch = 0 : i64, scratch_operands = 0 : i64, tpu.core_type = #tpu.core_type<tc>, window_params = [{transform_indices = @transform_0, window_bounds = array<i64: 64, 96>}, {pipeline_mode = #tpu.pipeline_mode<synchronous>, transform_indices = @transform_1, window_bounds = array<i64: 96, 32>}, {transform_indices = @transform_2, window_bounds = array<i64: 64, 32>}, {pipeline_mode = #tpu.pipeline_mode<synchronous>, transform_indices = @transform_3, window_bounds = array<i64: 32, 32>}, {pipeline_mode = #tpu.pipeline_mode<synchronous>, transform_indices = @transform_4, window_bounds = array<i64: 1, 32>}, {transform_indices = @transform_5, window_bounds = array<i64: 64, 32>}]} {
    %c0 = arith.constant 0 : index
    %c0_0 = arith.constant 0 : index
    %0 = vector.load %arg1[%c0, %c0_0] : memref<64x96xf32, #tpu.memory_space<vmem>>, vector<64x96xf32>
    %c0_1 = arith.constant 0 : index
    %c0_2 = arith.constant 0 : index
    %1 = vector.load %arg2[%c0_1, %c0_2] : memref<96x32xf32, #tpu.memory_space<vmem>>, vector<96x32xf32>
    %cst = arith.constant dense<0.000000e+00> : vector<64x32xf32>
    %2 = tpu.matmul %0, %1, %cst {dimension_numbers = #tpu.dot_dimension_numbers<[1], [0], [0], [1], [0, 0, 1, 1], [], []>} : vector<64x96xf32>, vector<96x32xf32>, vector<64x32xf32> -> vector<64x32xf32>
    %c0_3 = arith.constant 0 : index
    %c0_4 = arith.constant 0 : index
    %3 = vector.load %arg4[%c0_3, %c0_4] : memref<32x32xf32, #tpu.memory_space<vmem>>, vector<32x32xf32>
    %cst_5 = arith.constant dense<0.000000e+00> : vector<64x32xf32>
    %4 = tpu.matmul %2, %3, %cst_5 {dimension_numbers = #tpu.dot_dimension_numbers<[1], [0], [0], [1], [0, 0, 1, 1], [], []>} : vector<64x32xf32>, vector<32x32xf32>, vector<64x32xf32> -> vector<64x32xf32>
    %c0_6 = arith.constant 0 : index
    %c0_7 = arith.constant 0 : index
    %5 = vector.load %arg5[%c0_6, %c0_7] : memref<1x32xf32, #tpu.memory_space<vmem>>, vector<1x32xf32>
    %6 = vector.broadcast %5 : vector<1x32xf32> to vector<64x32xf32>
    %7 = arith.addf %4, %6 : vector<64x32xf32>
    %c0_8 = arith.constant 0 : index
    %c0_9 = arith.constant 0 : index
    %8 = vector.load %arg3[%c0_8, %c0_9] : memref<64x32xf32, #tpu.memory_space<vmem>>, vector<64x32xf32>
    %9 = arith.addf %7, %8 : vector<64x32xf32>
    %cst_10 = arith.constant 0.000000e+00 : f32
    %10 = vector.broadcast %cst_10 : f32 to vector<64x32xf32>
    %11 = arith.maximumf %9, %10 : vector<64x32xf32>
    %c0_11 = arith.constant 0 : index
    %c0_12 = arith.constant 0 : index
    %12 = vector.load %arg6[%c0_11, %c0_12] : memref<64x32xf32, #tpu.memory_space<vmem>>, vector<64x32xf32>
    tpu.vector_store %arg6[%c0_11, %c0_12], %11 {strides = array<i32>} : memref<64x32xf32, #tpu.memory_space<vmem>>, vector<64x32xf32>,
    return
  }
  func.func @transform_0(%arg0: i32) -> (i32, i32) {
    %c0_i32 = arith.constant 0 : i32
    %c0_i32_0 = arith.constant 0 : i32
    return %arg0, %c0_i32 : i32, i32
  }
  func.func @transform_1(%arg0: i32) -> (i32, i32) {
    %c0_i32 = arith.constant 0 : i32
    %c0_i32_0 = arith.constant 0 : i32
    %c0_i32_1 = arith.constant 0 : i32
    return %c0_i32, %c0_i32_0 : i32, i32
  }
  func.func @transform_2(%arg0: i32) -> (i32, i32) {
    %c0_i32 = arith.constant 0 : i32
    %c0_i32_0 = arith.constant 0 : i32
    return %arg0, %c0_i32 : i32, i32
  }
  func.func @transform_3(%arg0: i32) -> (i32, i32) {
    %c0_i32 = arith.constant 0 : i32
    %c0_i32_0 = arith.constant 0 : i32
    %c0_i32_1 = arith.constant 0 : i32
    return %c0_i32, %c0_i32_0 : i32, i32
  }
  func.func @transform_4(%arg0: i32) -> (i32, i32) {
    %c0_i32 = arith.constant 0 : i32
    %c0_i32_0 = arith.constant 0 : i32
    %c0_i32_1 = arith.constant 0 : i32
    return %c0_i32, %c0_i32_0 : i32, i32
  }
  func.func @transform_5(%arg0: i32) -> (i32, i32) {
    %c0_i32 = arith.constant 0 : i32
    %c0_i32_0 = arith.constant 0 : i32
    return %arg0, %c0_i32 : i32, i32
  }
}

module attributes {stable_mosaic.version = 11 : i64} {
  func.func @_update_final_kernel(%arg0: i32, %arg1: memref<64x96xf32, #tpu.memory_space<vmem>>, %arg2: memref<96x32xf32, #tpu.memory_space<vmem>>, %arg3: memref<64x32xf32, #tpu.memory_space<vmem>>, %arg4: memref<32x32xf32, #tpu.memory_space<vmem>>, %arg5: memref<1x32xf32, #tpu.memory_space<vmem>>, %arg6: memref<32x16xf32, #tpu.memory_space<vmem>>, %arg7: memref<1x16xf32, #tpu.memory_space<vmem>>, %arg8: memref<64x16xf32, #tpu.memory_space<vmem>>) attributes {dimension_semantics = [#tpu.dimension_semantics<parallel>], iteration_bounds = array<i64: 2>, scalar_prefetch = 0 : i64, scratch_operands = 0 : i64, tpu.core_type = #tpu.core_type<tc>, window_params = [{transform_indices = @transform_0, window_bounds = array<i64: 64, 96>}, {pipeline_mode = #tpu.pipeline_mode<synchronous>, transform_indices = @transform_1, window_bounds = array<i64: 96, 32>}, {transform_indices = @transform_2, window_bounds = array<i64: 64, 32>}, {pipeline_mode = #tpu.pipeline_mode<synchronous>, transform_indices = @transform_3, window_bounds = array<i64: 32, 32>}, {pipeline_mode = #tpu.pipeline_mode<synchronous>, transform_indices = @transform_4, window_bounds = array<i64: 1, 32>}, {pipeline_mode = #tpu.pipeline_mode<synchronous>, transform_indices = @transform_5, window_bounds = array<i64: 32, 16>}, {pipeline_mode = #tpu.pipeline_mode<synchronous>, transform_indices = @transform_6, window_bounds = array<i64: 1, 16>}, {transform_indices = @transform_7, window_bounds = array<i64: 64, 16>}]} {
    %c0 = arith.constant 0 : index
    %c0_0 = arith.constant 0 : index
    %0 = vector.load %arg1[%c0, %c0_0] : memref<64x96xf32, #tpu.memory_space<vmem>>, vector<64x96xf32>
    %c0_1 = arith.constant 0 : index
    %c0_2 = arith.constant 0 : index
    %1 = vector.load %arg2[%c0_1, %c0_2] : memref<96x32xf32, #tpu.memory_space<vmem>>, vector<96x32xf32>
    %cst = arith.constant dense<0.000000e+00> : vector<64x32xf32>
    %2 = tpu.matmul %0, %1, %cst {dimension_numbers = #tpu.dot_dimension_numbers<[1], [0], [0], [1], [0, 0, 1, 1], [], []>} : vector<64x96xf32>, vector<96x32xf32>, vector<64x32xf32> -> vector<64x32xf32>
    %c0_3 = arith.constant 0 : index
    %c0_4 = arith.constant 0 : index
    %3 = vector.load %arg4[%c0_3, %c0_4] : memref<32x32xf32, #tpu.memory_space<vmem>>, vector<32x32xf32>
    %cst_5 = arith.constant dense<0.000000e+00> : vector<64x32xf32>
    %4 = tpu.matmul %2, %3, %cst_5 {dimension_numbers = #tpu.dot_dimension_numbers<[1], [0], [0], [1], [0, 0, 1, 1], [], []>} : vector<64x32xf32>, vector<32x32xf32>, vector<64x32xf32> -> vector<64x32xf32>
    %c0_6 = arith.constant 0 : index
    %c0_7 = arith.constant 0 : index
    %5 = vector.load %arg5[%c0_6, %c0_7] : memref<1x32xf32, #tpu.memory_space<vmem>>, vector<1x32xf32>
    %6 = vector.broadcast %5 : vector<1x32xf32> to vector<64x32xf32>
    %7 = arith.addf %4, %6 : vector<64x32xf32>
    %c0_8 = arith.constant 0 : index
    %c0_9 = arith.constant 0 : index
    %8 = vector.load %arg3[%c0_8, %c0_9] : memref<64x32xf32, #tpu.memory_space<vmem>>, vector<64x32xf32>
    %9 = arith.addf %7, %8 : vector<64x32xf32>
    %cst_10 = arith.constant 0.000000e+00 : f32
    %10 = vector.broadcast %cst_10 : f32 to vector<64x32xf32>
    %11 = arith.maximumf %9, %10 : vector<64x32xf32>
    %c0_11 = arith.constant 0 : index
    %c0_12 = arith.constant 0 : index
    %12 = vector.load %arg6[%c0_11, %c0_12] : memref<32x16xf32, #tpu.memory_space<vmem>>, vector<32x16xf32>
    %cst_13 = arith.constant dense<0.000000e+00> : vector<64x16xf32>
    %13 = tpu.matmul %11, %12, %cst_13 {dimension_numbers = #tpu.dot_dimension_numbers<[1], [0], [0], [1], [0, 0, 1, 1], [], []>} : vector<64x32xf32>, vector<32x16xf32>, vector<64x16xf32> -> vector<64x16xf32>
    %c0_14 = arith.constant 0 : index
    %c0_15 = arith.constant 0 : index
    %14 = vector.load %arg7[%c0_14, %c0_15] : memref<1x16xf32, #tpu.memory_space<vmem>>, vector<1x16xf32>
    %15 = vector.broadcast %14 : vector<1x16xf32> to vector<64x16xf32>
    %16 = arith.addf %13, %15 : vector<64x16xf32>
    %c0_16 = arith.constant 0 : index
    %c0_17 = arith.constant 0 : index
    %17 = vector.load %arg8[%c0_16, %c0_17] : memref<64x16xf32, #tpu.memory_space<vmem>>, vector<64x16xf32>
    tpu.vector_store %arg8[%c0_16, %c0_17], %16 {strides = array<i32>} : memref<64x16xf32, #tpu.memory_space<vmem>>, vector<64x16xf32>,
    return
  }
  func.func @transform_0(%arg0: i32) -> (i32, i32) {
    %c0_i32 = arith.constant 0 : i32
    %c0_i32_0 = arith.constant 0 : i32
    return %arg0, %c0_i32 : i32, i32
  }
  func.func @transform_1(%arg0: i32) -> (i32, i32) {
    %c0_i32 = arith.constant 0 : i32
    %c0_i32_0 = arith.constant 0 : i32
    %c0_i32_1 = arith.constant 0 : i32
    return %c0_i32, %c0_i32_0 : i32, i32
  }
  func.func @transform_2(%arg0: i32) -> (i32, i32) {
    %c0_i32 = arith.constant 0 : i32
    %c0_i32_0 = arith.constant 0 : i32
    return %arg0, %c0_i32 : i32, i32
  }
  func.func @transform_3(%arg0: i32) -> (i32, i32) {
    %c0_i32 = arith.constant 0 : i32
    %c0_i32_0 = arith.constant 0 : i32
    %c0_i32_1 = arith.constant 0 : i32
    return %c0_i32, %c0_i32_0 : i32, i32
  }
  func.func @transform_4(%arg0: i32) -> (i32, i32) {
    %c0_i32 = arith.constant 0 : i32
    %c0_i32_0 = arith.constant 0 : i32
    %c0_i32_1 = arith.constant 0 : i32
    return %c0_i32, %c0_i32_0 : i32, i32
  }
  func.func @transform_5(%arg0: i32) -> (i32, i32) {
    %c0_i32 = arith.constant 0 : i32
    %c0_i32_0 = arith.constant 0 : i32
    %c0_i32_1 = arith.constant 0 : i32
    return %c0_i32, %c0_i32_0 : i32, i32
  }
  func.func @transform_6(%arg0: i32) -> (i32, i32) {
    %c0_i32 = arith.constant 0 : i32
    %c0_i32_0 = arith.constant 0 : i32
    %c0_i32_1 = arith.constant 0 : i32
    return %c0_i32, %c0_i32_0 : i32, i32
  }
  func.func @transform_7(%arg0: i32) -> (i32, i32) {
    %c0_i32 = arith.constant 0 : i32
    %c0_i32_0 = arith.constant 0 : i32
    return %arg0, %c0_i32 : i32, i32
  }
}

module attributes {stable_mosaic.version = 11 : i64} {
  func.func @_reduce_kernel(%arg0: i32, %arg1: memref<64x64xf32, #tpu.memory_space<vmem>>, %arg2: memref<64x32xf32, #tpu.memory_space<vmem>>, %arg3: memref<64x32xf32, #tpu.memory_space<vmem>>) attributes {dimension_semantics = [#tpu.dimension_semantics<arbitrary>], iteration_bounds = array<i64: 2>, scalar_prefetch = 0 : i64, scratch_operands = 0 : i64, tpu.core_type = #tpu.core_type<tc>, window_params = [{transform_indices = @transform_0, window_bounds = array<i64: 64, 64>}, {transform_indices = @transform_1, window_bounds = array<i64: 64, 32>}, {pipeline_mode = #tpu.pipeline_mode<synchronous>, transform_indices = @transform_2, window_bounds = array<i64: 64, 32>}]} {
    %c0_i32 = arith.constant 0 : i32
    %0 = arith.cmpi eq, %arg0, %c0_i32 : i32
    %1 = arith.extui %0 : i1 to i32
    %c0_i32_0 = arith.constant 0 : i32
    %2 = arith.cmpi ne, %1, %c0_i32_0 : i32
    scf.if %2 {
      %cst_8 = arith.constant 0.000000e+00 : f32
      %9 = vector.broadcast %cst_8 : f32 to vector<64x32xf32>
      %c0_9 = arith.constant 0 : index
      %c0_10 = arith.constant 0 : index
      %10 = vector.load %arg3[%c0_9, %c0_10] : memref<64x32xf32, #tpu.memory_space<vmem>>, vector<64x32xf32>
      tpu.vector_store %arg3[%c0_9, %c0_10], %9 {strides = array<i32>} : memref<64x32xf32, #tpu.memory_space<vmem>>, vector<64x32xf32>,
    } else {
    }
    %c0 = arith.constant 0 : index
    %c0_1 = arith.constant 0 : index
    %3 = vector.load %arg3[%c0, %c0_1] : memref<64x32xf32, #tpu.memory_space<vmem>>, vector<64x32xf32>
    %c0_2 = arith.constant 0 : index
    %c0_3 = arith.constant 0 : index
    %4 = vector.load %arg1[%c0_2, %c0_3] : memref<64x64xf32, #tpu.memory_space<vmem>>, vector<64x64xf32>
    %c0_4 = arith.constant 0 : index
    %c0_5 = arith.constant 0 : index
    %5 = vector.load %arg2[%c0_4, %c0_5] : memref<64x32xf32, #tpu.memory_space<vmem>>, vector<64x32xf32>
    %cst = arith.constant dense<0.000000e+00> : vector<64x32xf32>
    %6 = tpu.matmul %4, %5, %cst {dimension_numbers = #tpu.dot_dimension_numbers<[0], [0], [1], [1], [0, 1, 1, 1], [], []>} : vector<64x64xf32>, vector<64x32xf32>, vector<64x32xf32> -> vector<64x32xf32>
    %7 = arith.addf %3, %6 : vector<64x32xf32>
    %c0_6 = arith.constant 0 : index
    %c0_7 = arith.constant 0 : index
    %8 = vector.load %arg3[%c0_6, %c0_7] : memref<64x32xf32, #tpu.memory_space<vmem>>, vector<64x32xf32>
    tpu.vector_store %arg3[%c0_6, %c0_7], %7 {strides = array<i32>} : memref<64x32xf32, #tpu.memory_space<vmem>>, vector<64x32xf32>,
    return
  }
  func.func @transform_0(%arg0: i32) -> (i32, i32) {
    %c0_i32 = arith.constant 0 : i32
    %c0_i32_0 = arith.constant 0 : i32
    return %arg0, %c0_i32 : i32, i32
  }
  func.func @transform_1(%arg0: i32) -> (i32, i32) {
    %c0_i32 = arith.constant 0 : i32
    %c0_i32_0 = arith.constant 0 : i32
    return %arg0, %c0_i32 : i32, i32
  }
  func.func @transform_2(%arg0: i32) -> (i32, i32) {
    %c0_i32 = arith.constant 0 : i32
    %c0_i32_0 = arith.constant 0 : i32
    %c0_i32_1 = arith.constant 0 : i32
    return %c0_i32, %c0_i32_0 : i32, i32
  }
}

module attributes {stable_mosaic.version = 11 : i64} {
  func.func @_update_kernel(%arg0: i32, %arg1: memref<64x64xf32, #tpu.memory_space<vmem>>, %arg2: memref<64x32xf32, #tpu.memory_space<vmem>>, %arg3: memref<64x32xf32, #tpu.memory_space<vmem>>, %arg4: memref<32x32xf32, #tpu.memory_space<vmem>>, %arg5: memref<1x32xf32, #tpu.memory_space<vmem>>, %arg6: memref<64x32xf32, #tpu.memory_space<vmem>>) attributes {dimension_semantics = [#tpu.dimension_semantics<parallel>], iteration_bounds = array<i64: 2>, scalar_prefetch = 0 : i64, scratch_operands = 0 : i64, tpu.core_type = #tpu.core_type<tc>, window_params = [{transform_indices = @transform_0, window_bounds = array<i64: 64, 64>}, {pipeline_mode = #tpu.pipeline_mode<synchronous>, transform_indices = @transform_1, window_bounds = array<i64: 64, 32>}, {transform_indices = @transform_2, window_bounds = array<i64: 64, 32>}, {pipeline_mode = #tpu.pipeline_mode<synchronous>, transform_indices = @transform_3, window_bounds = array<i64: 32, 32>}, {pipeline_mode = #tpu.pipeline_mode<synchronous>, transform_indices = @transform_4, window_bounds = array<i64: 1, 32>}, {transform_indices = @transform_5, window_bounds = array<i64: 64, 32>}]} {
    %c0 = arith.constant 0 : index
    %c0_0 = arith.constant 0 : index
    %0 = vector.load %arg1[%c0, %c0_0] : memref<64x64xf32, #tpu.memory_space<vmem>>, vector<64x64xf32>
    %c0_1 = arith.constant 0 : index
    %c0_2 = arith.constant 0 : index
    %1 = vector.load %arg2[%c0_1, %c0_2] : memref<64x32xf32, #tpu.memory_space<vmem>>, vector<64x32xf32>
    %cst = arith.constant dense<0.000000e+00> : vector<64x32xf32>
    %2 = tpu.matmul %0, %1, %cst {dimension_numbers = #tpu.dot_dimension_numbers<[1], [0], [0], [1], [0, 0, 1, 1], [], []>} : vector<64x64xf32>, vector<64x32xf32>, vector<64x32xf32> -> vector<64x32xf32>
    %c0_3 = arith.constant 0 : index
    %c0_4 = arith.constant 0 : index
    %3 = vector.load %arg4[%c0_3, %c0_4] : memref<32x32xf32, #tpu.memory_space<vmem>>, vector<32x32xf32>
    %cst_5 = arith.constant dense<0.000000e+00> : vector<64x32xf32>
    %4 = tpu.matmul %2, %3, %cst_5 {dimension_numbers = #tpu.dot_dimension_numbers<[1], [0], [0], [1], [0, 0, 1, 1], [], []>} : vector<64x32xf32>, vector<32x32xf32>, vector<64x32xf32> -> vector<64x32xf32>
    %c0_6 = arith.constant 0 : index
    %c0_7 = arith.constant 0 : index
    %5 = vector.load %arg5[%c0_6, %c0_7] : memref<1x32xf32, #tpu.memory_space<vmem>>, vector<1x32xf32>
    %6 = vector.broadcast %5 : vector<1x32xf32> to vector<64x32xf32>
    %7 = arith.addf %4, %6 : vector<64x32xf32>
    %c0_8 = arith.constant 0 : index
    %c0_9 = arith.constant 0 : index
    %8 = vector.load %arg3[%c0_8, %c0_9] : memref<64x32xf32, #tpu.memory_space<vmem>>, vector<64x32xf32>
    %9 = arith.addf %7, %8 : vector<64x32xf32>
    %cst_10 = arith.constant 0.000000e+00 : f32
    %10 = vector.broadcast %cst_10 : f32 to vector<64x32xf32>
    %11 = arith.maximumf %9, %10 : vector<64x32xf32>
    %c0_11 = arith.constant 0 : index
    %c0_12 = arith.constant 0 : index
    %12 = vector.load %arg6[%c0_11, %c0_12] : memref<64x32xf32, #tpu.memory_space<vmem>>, vector<64x32xf32>
    tpu.vector_store %arg6[%c0_11, %c0_12], %11 {strides = array<i32>} : memref<64x32xf32, #tpu.memory_space<vmem>>, vector<64x32xf32>,
    return
  }
  func.func @transform_0(%arg0: i32) -> (i32, i32) {
    %c0_i32 = arith.constant 0 : i32
    %c0_i32_0 = arith.constant 0 : i32
    return %arg0, %c0_i32 : i32, i32
  }
  func.func @transform_1(%arg0: i32) -> (i32, i32) {
    %c0_i32 = arith.constant 0 : i32
    %c0_i32_0 = arith.constant 0 : i32
    %c0_i32_1 = arith.constant 0 : i32
    return %c0_i32, %c0_i32_0 : i32, i32
  }
  func.func @transform_2(%arg0: i32) -> (i32, i32) {
    %c0_i32 = arith.constant 0 : i32
    %c0_i32_0 = arith.constant 0 : i32
    return %arg0, %c0_i32 : i32, i32
  }
  func.func @transform_3(%arg0: i32) -> (i32, i32) {
    %c0_i32 = arith.constant 0 : i32
    %c0_i32_0 = arith.constant 0 : i32
    %c0_i32_1 = arith.constant 0 : i32
    return %c0_i32, %c0_i32_0 : i32, i32
  }
  func.func @transform_4(%arg0: i32) -> (i32, i32) {
    %c0_i32 = arith.constant 0 : i32
    %c0_i32_0 = arith.constant 0 : i32
    %c0_i32_1 = arith.constant 0 : i32
    return %c0_i32, %c0_i32_0 : i32, i32
  }
  func.func @transform_5(%arg0: i32) -> (i32, i32) {
    %c0_i32 = arith.constant 0 : i32
    %c0_i32_0 = arith.constant 0 : i32
    return %arg0, %c0_i32 : i32, i32
  }
}

module attributes {stable_mosaic.version = 11 : i64} {
  func.func @_update_final_kernel(%arg0: i32, %arg1: memref<64x64xf32, #tpu.memory_space<vmem>>, %arg2: memref<64x32xf32, #tpu.memory_space<vmem>>, %arg3: memref<64x32xf32, #tpu.memory_space<vmem>>, %arg4: memref<32x32xf32, #tpu.memory_space<vmem>>, %arg5: memref<1x32xf32, #tpu.memory_space<vmem>>, %arg6: memref<32x16xf32, #tpu.memory_space<vmem>>, %arg7: memref<1x16xf32, #tpu.memory_space<vmem>>, %arg8: memref<64x16xf32, #tpu.memory_space<vmem>>) attributes {dimension_semantics = [#tpu.dimension_semantics<parallel>], iteration_bounds = array<i64: 2>, scalar_prefetch = 0 : i64, scratch_operands = 0 : i64, tpu.core_type = #tpu.core_type<tc>, window_params = [{transform_indices = @transform_0, window_bounds = array<i64: 64, 64>}, {pipeline_mode = #tpu.pipeline_mode<synchronous>, transform_indices = @transform_1, window_bounds = array<i64: 64, 32>}, {transform_indices = @transform_2, window_bounds = array<i64: 64, 32>}, {pipeline_mode = #tpu.pipeline_mode<synchronous>, transform_indices = @transform_3, window_bounds = array<i64: 32, 32>}, {pipeline_mode = #tpu.pipeline_mode<synchronous>, transform_indices = @transform_4, window_bounds = array<i64: 1, 32>}, {pipeline_mode = #tpu.pipeline_mode<synchronous>, transform_indices = @transform_5, window_bounds = array<i64: 32, 16>}, {pipeline_mode = #tpu.pipeline_mode<synchronous>, transform_indices = @transform_6, window_bounds = array<i64: 1, 16>}, {transform_indices = @transform_7, window_bounds = array<i64: 64, 16>}]} {
    %c0 = arith.constant 0 : index
    %c0_0 = arith.constant 0 : index
    %0 = vector.load %arg1[%c0, %c0_0] : memref<64x64xf32, #tpu.memory_space<vmem>>, vector<64x64xf32>
    %c0_1 = arith.constant 0 : index
    %c0_2 = arith.constant 0 : index
    %1 = vector.load %arg2[%c0_1, %c0_2] : memref<64x32xf32, #tpu.memory_space<vmem>>, vector<64x32xf32>
    %cst = arith.constant dense<0.000000e+00> : vector<64x32xf32>
    %2 = tpu.matmul %0, %1, %cst {dimension_numbers = #tpu.dot_dimension_numbers<[1], [0], [0], [1], [0, 0, 1, 1], [], []>} : vector<64x64xf32>, vector<64x32xf32>, vector<64x32xf32> -> vector<64x32xf32>
    %c0_3 = arith.constant 0 : index
    %c0_4 = arith.constant 0 : index
    %3 = vector.load %arg4[%c0_3, %c0_4] : memref<32x32xf32, #tpu.memory_space<vmem>>, vector<32x32xf32>
    %cst_5 = arith.constant dense<0.000000e+00> : vector<64x32xf32>
    %4 = tpu.matmul %2, %3, %cst_5 {dimension_numbers = #tpu.dot_dimension_numbers<[1], [0], [0], [1], [0, 0, 1, 1], [], []>} : vector<64x32xf32>, vector<32x32xf32>, vector<64x32xf32> -> vector<64x32xf32>
    %c0_6 = arith.constant 0 : index
    %c0_7 = arith.constant 0 : index
    %5 = vector.load %arg5[%c0_6, %c0_7] : memref<1x32xf32, #tpu.memory_space<vmem>>, vector<1x32xf32>
    %6 = vector.broadcast %5 : vector<1x32xf32> to vector<64x32xf32>
    %7 = arith.addf %4, %6 : vector<64x32xf32>
    %c0_8 = arith.constant 0 : index
    %c0_9 = arith.constant 0 : index
    %8 = vector.load %arg3[%c0_8, %c0_9] : memref<64x32xf32, #tpu.memory_space<vmem>>, vector<64x32xf32>
    %9 = arith.addf %7, %8 : vector<64x32xf32>
    %cst_10 = arith.constant 0.000000e+00 : f32
    %10 = vector.broadcast %cst_10 : f32 to vector<64x32xf32>
    %11 = arith.maximumf %9, %10 : vector<64x32xf32>
    %c0_11 = arith.constant 0 : index
    %c0_12 = arith.constant 0 : index
    %12 = vector.load %arg6[%c0_11, %c0_12] : memref<32x16xf32, #tpu.memory_space<vmem>>, vector<32x16xf32>
    %cst_13 = arith.constant dense<0.000000e+00> : vector<64x16xf32>
    %13 = tpu.matmul %11, %12, %cst_13 {dimension_numbers = #tpu.dot_dimension_numbers<[1], [0], [0], [1], [0, 0, 1, 1], [], []>} : vector<64x32xf32>, vector<32x16xf32>, vector<64x16xf32> -> vector<64x16xf32>
    %c0_14 = arith.constant 0 : index
    %c0_15 = arith.constant 0 : index
    %14 = vector.load %arg7[%c0_14, %c0_15] : memref<1x16xf32, #tpu.memory_space<vmem>>, vector<1x16xf32>
    %15 = vector.broadcast %14 : vector<1x16xf32> to vector<64x16xf32>
    %16 = arith.addf %13, %15 : vector<64x16xf32>
    %c0_16 = arith.constant 0 : index
    %c0_17 = arith.constant 0 : index
    %17 = vector.load %arg8[%c0_16, %c0_17] : memref<64x16xf32, #tpu.memory_space<vmem>>, vector<64x16xf32>
    tpu.vector_store %arg8[%c0_16, %c0_17], %16 {strides = array<i32>} : memref<64x16xf32, #tpu.memory_space<vmem>>, vector<64x16xf32>,
    return
  }
  func.func @transform_0(%arg0: i32) -> (i32, i32) {
    %c0_i32 = arith.constant 0 : i32
    %c0_i32_0 = arith.constant 0 : i32
    return %arg0, %c0_i32 : i32, i32
  }
  func.func @transform_1(%arg0: i32) -> (i32, i32) {
    %c0_i32 = arith.constant 0 : i32
    %c0_i32_0 = arith.constant 0 : i32
    %c0_i32_1 = arith.constant 0 : i32
    return %c0_i32, %c0_i32_0 : i32, i32
  }
  func.func @transform_2(%arg0: i32) -> (i32, i32) {
    %c0_i32 = arith.constant 0 : i32
    %c0_i32_0 = arith.constant 0 : i32
    return %arg0, %c0_i32 : i32, i32
  }
  func.func @transform_3(%arg0: i32) -> (i32, i32) {
    %c0_i32 = arith.constant 0 : i32
    %c0_i32_0 = arith.constant 0 : i32
    %c0_i32_1 = arith.constant 0 : i32
    return %c0_i32, %c0_i32_0 : i32, i32
  }
  func.func @transform_4(%arg0: i32) -> (i32, i32) {
    %c0_i32 = arith.constant 0 : i32
    %c0_i32_0 = arith.constant 0 : i32
    %c0_i32_1 = arith.constant 0 : i32
    return %c0_i32, %c0_i32_0 : i32, i32
  }
  func.func @transform_5(%arg0: i32) -> (i32, i32) {
    %c0_i32 = arith.constant 0 : i32
    %c0_i32_0 = arith.constant 0 : i32
    %c0_i32_1 = arith.constant 0 : i32
    return %c0_i32, %c0_i32_0 : i32, i32
  }
  func.func @transform_6(%arg0: i32) -> (i32, i32) {
    %c0_i32 = arith.constant 0 : i32
    %c0_i32_0 = arith.constant 0 : i32
    %c0_i32_1 = arith.constant 0 : i32
    return %c0_i32, %c0_i32_0 : i32, i32
  }
  func.func @transform_7(%arg0: i32) -> (i32, i32) {
    %c0_i32 = arith.constant 0 : i32
    %c0_i32_0 = arith.constant 0 : i32
    return %arg0, %c0_i32 : i32, i32
  }
}

</mosaic_0001>

<llo_original>
// kernel: dhcf_forward.13
$region0: #{dhcf_forward.13}
  #allocation0 [shape = 'u32[]', space=smem, size = 0x4, offset = 0x4, fixed_abs, tag = 'smem constant byte address 0x4 - core index']
  #allocation1 [shape = 'u32[144,128]{1,0:T(1,128)}', space=vmem, size = 0x12000, scoped, tag = 'internal scratch']
  %s0 = inlined_call_operand.vmem [shape: f32[128,96], index: 0, kind: input, shape index: {}]
  %s1 = inlined_call_operand.vmem [shape: f32[96,32], index: 1, kind: input, shape index: {}]
  %s2 = inlined_call_operand.vmem [shape: f32[128,32], index: 2, kind: input, shape index: {}]
  %s3 = inlined_call_operand.vmem [shape: f32[32,32], index: 3, kind: input, shape index: {}]
  %s4 = inlined_call_operand.vmem [shape: f32[1,32], index: 4, kind: input, shape index: {}]
  %s5 = inlined_call_operand.vmem [shape: f32[128,32], index: 5, kind: output, shape index: {}]
  %s6 = sld [smem:[#allocation0]]
  $region53: #{dhcf_forward.13} parent=0
    _
  %s8 = ssub.s32 1, %s6
  %s9 = scalar_select 0, %s8, %s6
  loop: start=0, step=1, limit=4
  $region2: #{dhcf_forward.13} parent=0 // loop_pre_header
    _
  $region3: #{dhcf_forward.13} parent=0 // loop_header
    %s11 = sphi 0, %s15
    %p12 = scmp.ge.s32.totalorder %s11, 4
    %s21 = sphi 0, %s23
    %s24 = sphi 0, %s21
    %s25 = sphi 0, %s24
    %s41 = sphi 0, %s25
    %s45 = sphi 0, %s45
    %s47 = sphi 0, %s45
    %s48 = sphi 0, %s47
    %s62 = sphi 0, %s48
    %s68 = sphi 0, %s70
    %s71 = sphi 0, %s68
    %s72 = sphi 0, %s71
    %s88 = sphi 0, %s72
    %s92 = sphi 0, %s92
    %s94 = sphi 0, %s92
    %s95 = sphi 0, %s94
    %s109 = sphi 0, %s95
    %s113 = sphi 0, %s113
    %s115 = sphi 0, %s113
    %s116 = sphi 0, %s115
    %s130 = sphi 0, %s116
    %s136 = sphi 0, %s138
    %s139 = sphi 0, %s136
    %s140 = sphi 0, %s139
    %s156 = sphi 0, %s140
  $region4: #{dhcf_forward.13} parent=0 // loop_header_branch
    %14 = sbr.rel (%p12) target = $region8
  $region5: #{dhcf_forward.13} parent=0 // loop_body
    %s16 = ssub.s32 %s11, 1
    %s17 = ssub.s32 %s11, 2
    %s18 = sadd.s32 %s11, 1
    %s19 = ssub.s32 %s11, %s18
    %p20 = scmp.eq.s32.totalorder %s19, 0
    %s22 = sadd.s32 %s21, 1
    %s23 = scalar_select %p20, %s21, %s22
    %p26 = pneg %p20
    %p27 = scmp.eq.s32.totalorder %s11, 1
    %p28 = por %p26, %p27
    %p29 = scmp.ne.s32.totalorder %s21, %s24
    %p30 = scmp.eq.s32.totalorder %s11, 0
    %p31 = por %p29, %p30
    %p32 = scmp.ne.s32.totalorder %s21, %s24
    %p33 = scmp.eq.s32.totalorder %s16, 1
    %p34 = por %p32, %p33
    %p35 = scmp.ne.s32.totalorder %s24, %s25
    %p36 = scmp.eq.s32.totalorder %s16, 0
    %p37 = por %p35, %p36
    %p38 = scmp.ne.s32.totalorder %s24, %s25
    %p39 = scmp.eq.s32.totalorder %s17, 1
    %p40 = por %p38, %p39
    %p42 = scmp.ne.s32.totalorder %s25, %s41
    %p43 = scmp.eq.s32.totalorder %s17, 0
    %p44 = por %p42, %p43
    %s46 = sadd.s32 %s45, 1
    %p49 = scmp.eq.s32.totalorder %s11, 1
    %p50 = scmp.ne.s32.totalorder %s45, %s47
    %p51 = scmp.eq.s32.totalorder %s11, 0
    %p52 = por %p50, %p51
    %p53 = scmp.ne.s32.totalorder %s45, %s47
    %p54 = scmp.eq.s32.totalorder %s16, 1
    %p55 = por %p53, %p54
    %p56 = scmp.ne.s32.totalorder %s47, %s48
    %p57 = scmp.eq.s32.totalorder %s16, 0
    %p58 = por %p56, %p57
    %p59 = scmp.ne.s32.totalorder %s47, %s48
    %p60 = scmp.eq.s32.totalorder %s17, 1
    %p61 = por %p59, %p60
    %p63 = scmp.ne.s32.totalorder %s48, %s62
    %p64 = scmp.eq.s32.totalorder %s17, 0
    %p65 = por %p63, %p64
    %s66 = ssub.s32 %s11, %s18
    %p67 = scmp.eq.s32.totalorder %s66, 0
    %s69 = sadd.s32 %s68, 1
    %s70 = scalar_select %p67, %s68, %s69
    %p73 = pneg %p67
    %p74 = scmp.eq.s32.totalorder %s11, 1
    %p75 = por %p73, %p74
    %p76 = scmp.ne.s32.totalorder %s68, %s71
    %p77 = scmp.eq.s32.totalorder %s11, 0
    %p78 = por %p76, %p77
    %p79 = scmp.ne.s32.totalorder %s68, %s71
    %p80 = scmp.eq.s32.totalorder %s16, 1
    %p81 = por %p79, %p80
    %p82 = scmp.ne.s32.totalorder %s71, %s72
    %p83 = scmp.eq.s32.totalorder %s16, 0
    %p84 = por %p82, %p83
    %p85 = scmp.ne.s32.totalorder %s71, %s72
    %p86 = scmp.eq.s32.totalorder %s17, 1
    %p87 = por %p85, %p86
    %p89 = scmp.ne.s32.totalorder %s72, %s88
    %p90 = scmp.eq.s32.totalorder %s17, 0
    %p91 = por %p89, %p90
    %s93 = sadd.s32 %s92, 1
    %p96 = scmp.eq.s32.totalorder %s11, 1
    %p97 = scmp.ne.s32.totalorder %s92, %s94
    %p98 = scmp.eq.s32.totalorder %s11, 0
    %p99 = por %p97, %p98
    %p100 = scmp.ne.s32.totalorder %s92, %s94
    %p101 = scmp.eq.s32.totalorder %s16, 1
    %p102 = por %p100, %p101
    %p103 = scmp.ne.s32.totalorder %s94, %s95
    %p104 = scmp.eq.s32.totalorder %s16, 0
    %p105 = por %p103, %p104
    %p106 = scmp.ne.s32.totalorder %s94, %s95
    %p107 = scmp.eq.s32.totalorder %s17, 1
    %p108 = por %p106, %p107
    %p110 = scmp.ne.s32.totalorder %s95, %s109
    %p111 = scmp.eq.s32.totalorder %s17, 0
    %p112 = por %p110, %p111
    %s114 = sadd.s32 %s113, 1
    %p117 = scmp.eq.s32.totalorder %s11, 1
    %p118 = scmp.ne.s32.totalorder %s113, %s115
    %p119 = scmp.eq.s32.totalorder %s11, 0
    %p120 = por %p118, %p119
    %p121 = scmp.ne.s32.totalorder %s113, %s115
    %p122 = scmp.eq.s32.totalorder %s16, 1
    %p123 = por %p121, %p122
    %p124 = scmp.ne.s32.totalorder %s115, %s116
    %p125 = scmp.eq.s32.totalorder %s16, 0
    %p126 = por %p124, %p125
    %p127 = scmp.ne.s32.totalorder %s115, %s116
    %p128 = scmp.eq.s32.totalorder %s17, 1
    %p129 = por %p127, %p128
    %p131 = scmp.ne.s32.totalorder %s116, %s130
    %p132 = scmp.eq.s32.totalorder %s17, 0
    %p133 = por %p131, %p132
    %s134 = ssub.s32 %s11, %s18
    %p135 = scmp.eq.s32.totalorder %s134, 0
    %s137 = sadd.s32 %s136, 1
    %s138 = scalar_select %p135, %s136, %s137
    %p141 = pneg %p135
    %p142 = scmp.eq.s32.totalorder %s11, 1
    %p143 = por %p141, %p142
    %p144 = scmp.ne.s32.totalorder %s136, %s139
    %p145 = scmp.eq.s32.totalorder %s11, 0
    %p146 = por %p144, %p145
    %p147 = scmp.ne.s32.totalorder %s136, %s139
    %p148 = scmp.eq.s32.totalorder %s16, 1
    %p149 = por %p147, %p148
    %p150 = scmp.ne.s32.totalorder %s139, %s140
    %p151 = scmp.eq.s32.totalorder %s16, 0
    %p152 = por %p150, %p151
    %p153 = scmp.ne.s32.totalorder %s139, %s140
    %p154 = scmp.eq.s32.totalorder %s17, 1
    %p155 = por %p153, %p154
    %p157 = scmp.ne.s32.totalorder %s140, %s156
    %p158 = scmp.eq.s32.totalorder %s17, 0
    %p159 = por %p157, %p158
    %p160 = scmp.le.s32.totalorder 1, %s11
    %p161 = scmp.lt.s32.totalorder %s11, 3
    %p162 = pnand %p160, %p161
    %p163 = pneg %p162
    // Predicated region
    $region9: #{dhcf_forward.13} parent=5 // pred_check
      _
    $region10: #{dhcf_forward.13} parent=5 // pred_check_branch
      %165 = sbr.rel (%p162) target = $region12
    $region11: #{dhcf_forward.13} parent=5 // pred_region
      %s166 = ssub.s32 %s11, 1
      // Predicated region
      $region13: #{dhcf_forward.13} parent=11 // pred_check
        %p167 = pneg %p58
      $region14: #{dhcf_forward.13} parent=11 // pred_check_branch
        %169 = sbr.rel (%p167) target = $region16
      $region15: #{dhcf_forward.13} parent=11 // pred_region
        _
      $region16: #{dhcf_forward.13} parent=11 // pred_fallthru
        _
      // Predicated region
      $region17: #{dhcf_forward.13} parent=11 // pred_check
        %p170 = pneg %p105
      $region18: #{dhcf_forward.13} parent=11 // pred_check_branch
        %172 = sbr.rel (%p170) target = $region20
      $region19: #{dhcf_forward.13} parent=11 // pred_region
        _
      $region20: #{dhcf_forward.13} parent=11 // pred_fallthru
        _
      // Predicated region
      $region21: #{dhcf_forward.13} parent=11 // pred_check
        %p173 = pneg %p126
      $region22: #{dhcf_forward.13} parent=11 // pred_check_branch
        %175 = sbr.rel (%p173) target = $region24
      $region23: #{dhcf_forward.13} parent=11 // pred_region
        _
      $region24: #{dhcf_forward.13} parent=11 // pred_fallthru
        _
    $region12: #{dhcf_forward.13} parent=5 // pred_fallthru
      _
    %p176 = scmp.lt.s32.totalorder %s11, 2
    // Predicated region
    $region25: #{dhcf_forward.13} parent=5 // pred_check
      %p177 = pneg %p176
    $region26: #{dhcf_forward.13} parent=5 // pred_check_branch
      %179 = sbr.rel (%p177) target = $region28
    $region27: #{dhcf_forward.13} parent=5 // pred_region
      // Predicated region
      $region29: #{dhcf_forward.13} parent=27 // pred_check
        %p180 = pneg %p31
      $region30: #{dhcf_forward.13} parent=27 // pred_check_branch
        %182 = sbr.rel (%p180) target = $region32
      $region31: #{dhcf_forward.13} parent=27 // pred_region
        %s183 = smul.u32 8, %s11
        %p184 = scmp.lt.s32.totalorder %s183, 15
        %s185 = scalar_select %p184, %s183, 15
        %s186 = smul.addr %s185, 8
        %s187 = scalar_lea.vmem %s0, %s186
        %s188 = smul.u32 8, %s11
      $region32: #{dhcf_forward.13} parent=27 // pred_fallthru
        _
      // Predicated region
      $region33: #{dhcf_forward.13} parent=27 // pred_check
        %p189 = pneg %p78
      $region34: #{dhcf_forward.13} parent=27 // pred_check_branch
        %191 = sbr.rel (%p189) target = $region36
      $region35: #{dhcf_forward.13} parent=27 // pred_region
        %s192 = smul.u32 8, %s11
        %p193 = scmp.lt.s32.totalorder %s192, 15
        %s194 = scalar_select %p193, %s192, 15
        %s195 = smul.addr %s194, 8
        %s196 = scalar_lea.vmem %s2, %s195
        %s197 = smul.u32 8, %s11
      $region36: #{dhcf_forward.13} parent=27 // pred_fallthru
        _
    $region28: #{dhcf_forward.13} parent=5 // pred_fallthru
      _
    %p198 = scmp.le.s32.totalorder 1, %s11
    %p199 = scmp.lt.s32.totalorder %s11, 3
    %p200 = pnand %p198, %p199
    %p201 = pneg %p200
    // Predicated region
    $region37: #{dhcf_forward.13} parent=5 // pred_check
      _
    $region38: #{dhcf_forward.13} parent=5 // pred_check_branch
      %203 = sbr.rel (%p200) target = $region40
    $region39: #{dhcf_forward.13} parent=5 // pred_region
      %s204 = ssub.s32 %s11, 1
      %s205 = smul.u32 8, %s16
      %p206 = scmp.lt.s32.totalorder %s205, 15
      %s207 = scalar_select %p206, %s205, 15
      %s208 = smul.addr %s207, 8
      %s209 = scalar_lea.vmem %s0, %s208
      %p210 = pneg %p37
      %p211 = pneg %p34
      %p212 = pneg %p58
      %p213 = pneg %p55
      %s214 = smul.u32 8, %s16
      %p215 = scmp.lt.s32.totalorder %s214, 15
      %s216 = scalar_select %p215, %s214, 15
      %s217 = smul.addr %s216, 8
      %s218 = scalar_lea.vmem %s2, %s217
      %p219 = pneg %p84
      %p220 = pneg %p81
      %p221 = pneg %p105
      %p222 = pneg %p102
      %p223 = pneg %p126
      %p224 = pneg %p123
      %p225 = pneg %p152
      %p226 = pneg %p149
      %s227 = smul.u32 8, %s16
      %p228 = scmp.lt.s32.totalorder %s227, 15
      %s229 = scalar_select %p228, %s227, 15
      %s230 = smul.addr %s229, 8
      %s231 = scalar_lea.vmem %s5, %s230
      %s232 = smul.u32 8, %s16
      %p233 = scmp.lt.s32.totalorder %s232, 15
      %s234 = scalar_select %p233, %s232, 15
      %s235 = smul.addr %s234, 8
      %s236 = scalar_lea.vmem %s0, %s235
      %s237 = smul.u32 8, %s16
      %s238 = smul.u32 8, %s16
      %p239 = scmp.lt.s32.totalorder %s238, 15
      %s240 = scalar_select %p239, %s238, 15
      %s241 = smul.addr %s240, 8
      %s242 = scalar_lea.vmem %s2, %s241
      %s243 = smul.u32 8, %s16
      %s244 = smul.u32 8, %s16
      %p245 = scmp.lt.s32.totalorder %s244, 15
      %s246 = scalar_select %p245, %s244, 15
      %s247 = smul.addr %s246, 8
      %s248 = scalar_lea.vmem %s5, %s247
      %s249 = smul.u32 8, %s16
      %v250 = vld [vmem:[%s236] sm:$0xff]
      %v251 = vld [vmem:[%s236 + $0x8] sm:$0xff]
      %v252 = vld [vmem:[%s236 + $0x10] sm:$0xff]
      %v253 = vld [vmem:[%s236 + $0x18] sm:$0xff]
      %v254 = vld [vmem:[%s236 + $0x20] sm:$0xff]
      %v255 = vld [vmem:[%s236 + $0x28] sm:$0xff]
      %v256 = vld [vmem:[%s236 + $0x30] sm:$0xff]
      %v257 = vld [vmem:[%s236 + $0x38] sm:$0xff]
      %v258 = vld [vmem:[%s1] sm:$0xff]
      %v259 = vld [vmem:[%s1 + $0x8] sm:$0xff]
      %v260 = vld [vmem:[%s1 + $0x10] sm:$0xff]
      %v261 = vld [vmem:[%s1 + $0x18] sm:$0xff]
      %v262 = vld [vmem:[%s1 + $0x20] sm:$0xff]
      %v263 = vld [vmem:[%s1 + $0x28] sm:$0xff]
      %v264 = vld [vmem:[%s1 + $0x30] sm:$0xff]
      %v265 = vld [vmem:[%s1 + $0x38] sm:$0xff]
      %v266 = vld [vmem:[%s1 + $0x40] sm:$0xff]
      %v267 = vld [vmem:[%s1 + $0x48] sm:$0xff]
      %v268 = vld [vmem:[%s1 + $0x50] sm:$0xff]
      %v269 = vld [vmem:[%s1 + $0x58] sm:$0xff]
      %vm270 = vcmask 785408
      %v272 = vsel %vm270, %v250, 0
      %v275 = vsel %vm270, %v251, 0
      %v278 = vsel %vm270, %v252, 0
      %v281 = vsel %vm270, %v253, 0
      %v284 = vsel %vm270, %v254, 0
      %v287 = vsel %vm270, %v255, 0
      %v290 = vsel %vm270, %v256, 0
      %v293 = vsel %vm270, %v257, 0
      %295 = vmatprep.subr.mxu0 0.0
      %296 = vmatpush1.msra.mxu0 %v258
      %297 = vmatprep.subr.mxu0 0.0
      %298 = vmatpush1.msra.mxu0 %v259
      %299 = vmatprep.subr.mxu0 0.0
      %300 = vmatpush1.msra.mxu0 %v260
      %301 = vmatprep.subr.mxu0 0.0
      %302 = vmatpush1.msra.mxu0 %v261
      %303 = vmatprep.subr.mxu0 0.0
      %304 = vmatpush1.msra.mxu0 %v262
      %305 = vmatprep.subr.mxu0 0.0
      %306 = vmatpush1.msra.mxu0 %v263
      %307 = vmatprep.subr.mxu0 0.0
      %308 = vmatpush1.msra.mxu0 %v264
      %309 = vmatprep.subr.mxu0 0.0
      %310 = vmatpush1.msra.mxu0 %v265
      %311 = vmatprep.subr.mxu0 0.0
      %312 = vmatpush1.msra.mxu0 %v266
      %313 = vmatprep.subr.mxu0 0.0
      %314 = vmatpush1.msra.mxu0 %v267
      %315 = vmatprep.subr.mxu0 0.0
      %316 = vmatpush1.msra.mxu0 %v268
      %317 = vmatprep.subr.mxu0 0.0
      %318 = vmatpush1.msra.mxu0 %v269
      %319 = vmatprep.subr.mxu0 0.0
      %320 = vmatpush1.msra.mxu0 0.0
      %321 = vmatprep.subr.mxu0 0.0
      %322 = vmatpush1.msra.mxu0 0.0
      %323 = vmatprep.subr.mxu0 0.0
      %324 = vmatpush1.msra.mxu0 0.0
      %325 = vmatprep.subr.mxu0 0.0
      %326 = vmatpush1.msra.mxu0 0.0
      %327 = vmatprep.subr.mxu0 0.0
      %328 = vmatpush1.msra.mxu0 0.0
      %329 = vmatprep.subr.mxu0 0.0
      %330 = vmatpush1.msra.mxu0 0.0
      %331 = vmatprep.subr.mxu0 0.0
      %332 = vmatpush1.msra.mxu0 0.0
      %333 = vmatprep.subr.mxu0 0.0
      %334 = vmatpush1.msra.mxu0 0.0
      %335 = vmatprep.subr.mxu0 0.0
      %336 = vmatpush1.msra.mxu0 0.0
      %337 = vmatprep.subr.mxu0 0.0
      %338 = vmatpush1.msra.mxu0 0.0
      %339 = vmatprep.subr.mxu0 0.0
      %340 = vmatpush1.msra.mxu0 0.0
      %341 = vmatprep.subr.mxu0 0.0
      %342 = vmatpush1.msra.mxu0 0.0
      %343 = vmatprep.subr.mxu0 0.0
      %344 = vmatpush1.msra.mxu0 0.0
      %345 = vmatprep.subr.mxu0 0.0
      %346 = vmatpush1.msra.mxu0 0.0
      %347 = vmatprep.subr.mxu0 0.0
      %348 = vmatpush1.msra.mxu0 0.0
      %349 = vmatprep.subr.mxu0 0.0
      %350 = vmatpush1.msra.mxu0 0.0
      %351 = vmatprep.subr.mxu0 0.0
      %352 = vmatpush1.msra.mxu0 0.0
      %353 = vmatprep.subr.mxu0 0.0
      %354 = vmatpush1.msra.mxu0 0.0
      %355 = vmatprep.subr.mxu0 0.0
      %356 = vmatpush1.msra.mxu0 0.0
      %357 = vmatprep.subr.mxu0 0.0
      %358 = vmatpush1.msra.mxu0 0.0
      %359 = vmatprep.mubr.f32.mxu0 0.0
      %360 = vmatmul.mubr.f32.gmra.mrb[0].mxu0 %v272
      %v361 = vpop.f32.mrb[0].mxu0
      %v362 = vadd.f32 0.0, %v361
      %v363 = vpop.f32.mrb[0].mxu0
      %364 = vmatprep.mubr.f32.mxu0 0.0
      %365 = vmatmul.mubr.f32.gmra.mrb[0].mxu0 %v275
      %v366 = vpop.f32.mrb[0].mxu0
      %v367 = vadd.f32 0.0, %v366
      %v368 = vpop.f32.mrb[0].mxu0
      %369 = vmatprep.mubr.f32.mxu0 0.0
      %370 = vmatmul.mubr.f32.gmra.mrb[0].mxu0 %v278
      %v371 = vpop.f32.mrb[0].mxu0
      %v372 = vadd.f32 0.0, %v371
      %v373 = vpop.f32.mrb[0].mxu0
      %374 = vmatprep.mubr.f32.mxu0 0.0
      %375 = vmatmul.mubr.f32.gmra.mrb[0].mxu0 %v281
      %v376 = vpop.f32.mrb[0].mxu0
      %v377 = vadd.f32 0.0, %v376
      %v378 = vpop.f32.mrb[0].mxu0
      %379 = vmatprep.mubr.f32.mxu0 0.0
      %380 = vmatmul.mubr.f32.gmra.mrb[0].mxu0 %v284
      %v381 = vpop.f32.mrb[0].mxu0
      %v382 = vadd.f32 0.0, %v381
      %v383 = vpop.f32.mrb[0].mxu0
      %384 = vmatprep.mubr.f32.mxu0 0.0
      %385 = vmatmul.mubr.f32.gmra.mrb[0].mxu0 %v287
      %v386 = vpop.f32.mrb[0].mxu0
      %v387 = vadd.f32 0.0, %v386
      %v388 = vpop.f32.mrb[0].mxu0
      %389 = vmatprep.mubr.f32.mxu0 0.0
      %390 = vmatmul.mubr.f32.gmra.mrb[0].mxu0 %v290
      %v391 = vpop.f32.mrb[0].mxu0
      %v392 = vadd.f32 0.0, %v391
      %v393 = vpop.f32.mrb[0].mxu0
      %394 = vmatprep.mubr.f32.mxu0 0.0
      %395 = vmatmul.mubr.f32.gmra.mrb[0].mxu0 %v293
      %v396 = vpop.f32.mrb[0].mxu0
      %v397 = vadd.f32 0.0, %v396
      %v398 = vpop.f32.mrb[0].mxu0
      %399 = vdwg.mxu0
      %v400 = vld [vmem:[%s3] sm:$0xff]
      %v401 = vld [vmem:[%s3 + $0x8] sm:$0xff]
      %v402 = vld [vmem:[%s3 + $0x10] sm:$0xff]
      %v403 = vld [vmem:[%s3 + $0x18] sm:$0xff]
      %v404 = vld [vmem:[%s4] sm:$0x1]
      %v406 = vlaneseq
      %v407 = vshrl.u32 %v406, 7
      %v408 = vsub.s32 0, %v407
      %v409 = vrot.slane %v404, %v408
      %vm411 = vcmask 261120
      %v413 = vsel %vm411, %v362, 0
      %v416 = vsel %vm411, %v367, 0
      %v419 = vsel %vm411, %v372, 0
      %v422 = vsel %vm411, %v377, 0
      %v425 = vsel %vm411, %v382, 0
      %v428 = vsel %vm411, %v387, 0
      %v431 = vsel %vm411, %v392, 0
      %v434 = vsel %vm411, %v397, 0
      %436 = vmatprep.subr.mxu0 0.0
      %437 = vmatpush1.msra.mxu0 %v400
      %438 = vmatprep.subr.mxu0 0.0
      %439 = vmatpush1.msra.mxu0 %v401
      %440 = vmatprep.subr.mxu0 0.0
      %441 = vmatpush1.msra.mxu0 %v402
      %442 = vmatprep.subr.mxu0 0.0
      %443 = vmatpush1.msra.mxu0 %v403
      %444 = vmatprep.subr.mxu0 0.0
      %445 = vmatpush1.msra.mxu0 0.0
      %446 = vmatprep.subr.mxu0 0.0
      %447 = vmatpush1.msra.mxu0 0.0
      %448 = vmatprep.subr.mxu0 0.0
      %449 = vmatpush1.msra.mxu0 0.0
      %450 = vmatprep.subr.mxu0 0.0
      %451 = vmatpush1.msra.mxu0 0.0
      %452 = vmatprep.subr.mxu0 0.0
      %453 = vmatpush1.msra.mxu0 0.0
      %454 = vmatprep.subr.mxu0 0.0
      %455 = vmatpush1.msra.mxu0 0.0
      %456 = vmatprep.subr.mxu0 0.0
      %457 = vmatpush1.msra.mxu0 0.0
      %458 = vmatprep.subr.mxu0 0.0
      %459 = vmatpush1.msra.mxu0 0.0
      %460 = vmatprep.subr.mxu0 0.0
      %461 = vmatpush1.msra.mxu0 0.0
      %462 = vmatprep.subr.mxu0 0.0
      %463 = vmatpush1.msra.mxu0 0.0
      %464 = vmatprep.subr.mxu0 0.0
      %465 = vmatpush1.msra.mxu0 0.0
      %466 = vmatprep.subr.mxu0 0.0
      %467 = vmatpush1.msra.mxu0 0.0
      %468 = vmatprep.subr.mxu0 0.0
      %469 = vmatpush1.msra.mxu0 0.0
      %470 = vmatprep.subr.mxu0 0.0
      %471 = vmatpush1.msra.mxu0 0.0
      %472 = vmatprep.subr.mxu0 0.0
      %473 = vmatpush1.msra.mxu0 0.0
      %474 = vmatprep.subr.mxu0 0.0
      %475 = vmatpush1.msra.mxu0 0.0
      %476 = vmatprep.subr.mxu0 0.0
      %477 = vmatpush1.msra.mxu0 0.0
      %478 = vmatprep.subr.mxu0 0.0
      %479 = vmatpush1.msra.mxu0 0.0
      %480 = vmatprep.subr.mxu0 0.0
      %481 = vmatpush1.msra.mxu0 0.0
      %482 = vmatprep.subr.mxu0 0.0
      %483 = vmatpush1.msra.mxu0 0.0
      %484 = vmatprep.subr.mxu0 0.0
      %485 = vmatpush1.msra.mxu0 0.0
      %486 = vmatprep.subr.mxu0 0.0
      %487 = vmatpush1.msra.mxu0 0.0
      %488 = vmatprep.subr.mxu0 0.0
      %489 = vmatpush1.msra.mxu0 0.0
      %490 = vmatprep.subr.mxu0 0.0
      %491 = vmatpush1.msra.mxu0 0.0
      %492 = vmatprep.subr.mxu0 0.0
      %493 = vmatpush1.msra.mxu0 0.0
      %494 = vmatprep.subr.mxu0 0.0
      %495 = vmatpush1.msra.mxu0 0.0
      %496 = vmatprep.subr.mxu0 0.0
      %497 = vmatpush1.msra.mxu0 0.0
      %498 = vmatprep.subr.mxu0 0.0
      %499 = vmatpush1.msra.mxu0 0.0
      %500 = vmatprep.mubr.f32.mxu0 0.0
      %501 = vmatmul.mubr.f32.gmra.mrb[0].mxu0 %v413
      %v502 = vpop.f32.mrb[0].mxu0
      %v503 = vadd.f32 %v409, %v502
      %v504 = vpop.f32.mrb[0].mxu0
      %505 = vmatprep.mubr.f32.mxu0 0.0
      %506 = vmatmul.mubr.f32.gmra.mrb[0].mxu0 %v416
      %v507 = vpop.f32.mrb[0].mxu0
      %v508 = vadd.f32 %v409, %v507
      %v509 = vpop.f32.mrb[0].mxu0
      %510 = vmatprep.mubr.f32.mxu0 0.0
      %511 = vmatmul.mubr.f32.gmra.mrb[0].mxu0 %v419
      %v512 = vpop.f32.mrb[0].mxu0
      %v513 = vadd.f32 %v409, %v512
      %v514 = vpop.f32.mrb[0].mxu0
      %515 = vmatprep.mubr.f32.mxu0 0.0
      %516 = vmatmul.mubr.f32.gmra.mrb[0].mxu0 %v422
      %v517 = vpop.f32.mrb[0].mxu0
      %v518 = vadd.f32 %v409, %v517
      %v519 = vpop.f32.mrb[0].mxu0
      %520 = vmatprep.mubr.f32.mxu0 0.0
      %521 = vmatmul.mubr.f32.gmra.mrb[0].mxu0 %v425
      %v522 = vpop.f32.mrb[0].mxu0
      %v523 = vadd.f32 %v409, %v522
      %v524 = vpop.f32.mrb[0].mxu0
      %525 = vmatprep.mubr.f32.mxu0 0.0
      %526 = vmatmul.mubr.f32.gmra.mrb[0].mxu0 %v428
      %v527 = vpop.f32.mrb[0].mxu0
      %v528 = vadd.f32 %v409, %v527
      %v529 = vpop.f32.mrb[0].mxu0
      %530 = vmatprep.mubr.f32.mxu0 0.0
      %531 = vmatmul.mubr.f32.gmra.mrb[0].mxu0 %v431
      %v532 = vpop.f32.mrb[0].mxu0
      %v533 = vadd.f32 %v409, %v532
      %v534 = vpop.f32.mrb[0].mxu0
      %535 = vmatprep.mubr.f32.mxu0 0.0
      %536 = vmatmul.mubr.f32.gmra.mrb[0].mxu0 %v434
      %v537 = vpop.f32.mrb[0].mxu0
      %v538 = vadd.f32 %v409, %v537
      %v539 = vpop.f32.mrb[0].mxu0
      %540 = vdwg.mxu0
      %v541 = vld [vmem:[%s242] sm:$0xff]
      %v542 = vld [vmem:[%s242 + $0x8] sm:$0xff]
      %v543 = vld [vmem:[%s242 + $0x10] sm:$0xff]
      %v544 = vld [vmem:[%s242 + $0x18] sm:$0xff]
      %v545 = vld [vmem:[%s242 + $0x20] sm:$0xff]
      %v546 = vld [vmem:[%s242 + $0x28] sm:$0xff]
      %v547 = vld [vmem:[%s242 + $0x30] sm:$0xff]
      %v548 = vld [vmem:[%s242 + $0x38] sm:$0xff]
      %v549 = vadd.f32 %v503, %v541
      %v550 = vadd.f32 %v508, %v542
      %v551 = vadd.f32 %v513, %v543
      %v552 = vadd.f32 %v518, %v544
      %v553 = vadd.f32 %v523, %v545
      %v554 = vadd.f32 %v528, %v546
      %v555 = vadd.f32 %v533, %v547
      %v556 = vadd.f32 %v538, %v548
      %v557 = vmax.f32 %v549, 0.0
      %v558 = vmax.f32 %v550, 0.0
      %v559 = vmax.f32 %v551, 0.0
      %v560 = vmax.f32 %v552, 0.0
      %v561 = vmax.f32 %v553, 0.0
      %v562 = vmax.f32 %v554, 0.0
      %v563 = vmax.f32 %v555, 0.0
      %v564 = vmax.f32 %v556, 0.0
      %565 = vst.msk [vmem:[%s248] sm:$0xff] %vm411, %v557
      %566 = vst.msk [vmem:[%s248 + $0x8] sm:$0xff] %vm411, %v558
      %567 = vst.msk [vmem:[%s248 + $0x10] sm:$0xff] %vm411, %v559
      %568 = vst.msk [vmem:[%s248 + $0x18] sm:$0xff] %vm411, %v560
      %569 = vst.msk [vmem:[%s248 + $0x20] sm:$0xff] %vm411, %v561
      %570 = vst.msk [vmem:[%s248 + $0x28] sm:$0xff] %vm411, %v562
      %571 = vst.msk [vmem:[%s248 + $0x30] sm:$0xff] %vm411, %v563
      %572 = vst.msk [vmem:[%s248 + $0x38] sm:$0xff] %vm411, %v564
      %s573 = smul.u32 8, %s16
      %p574 = scmp.lt.s32.totalorder %s573, 15
      %s575 = scalar_select %p574, %s573, 15
      %s576 = smul.addr %s575, 8
      %s577 = scalar_lea.vmem %s5, %s576
      // Predicated region
      $region41: #{dhcf_forward.13} parent=39 // pred_check
        %p578 = pneg %p149
      $region42: #{dhcf_forward.13} parent=39 // pred_check_branch
        %580 = sbr.rel (%p578) target = $region44
      $region43: #{dhcf_forward.13} parent=39 // pred_region
        %s581 = smul.u32 8, %s16
      $region44: #{dhcf_forward.13} parent=39 // pred_fallthru
        _
    $region40: #{dhcf_forward.13} parent=5 // pred_fallthru
      _
    %p582 = scmp.le.s32.totalorder 2, %s11
    // Predicated region
    $region45: #{dhcf_forward.13} parent=5 // pred_check
      %p583 = pneg %p582
    $region46: #{dhcf_forward.13} parent=5 // pred_check_branch
      %585 = sbr.rel (%p583) target = $region48
    $region47: #{dhcf_forward.13} parent=5 // pred_region
      %s586 = ssub.s32 %s11, 2
      // Predicated region
      $region49: #{dhcf_forward.13} parent=47 // pred_check
        %p587 = pneg %p155
      $region50: #{dhcf_forward.13} parent=47 // pred_check_branch
        %589 = sbr.rel (%p587) target = $region52
      $region51: #{dhcf_forward.13} parent=47 // pred_region
        %s590 = smul.u32 8, %s17
        %p591 = scmp.lt.s32.totalorder %s590, 15
        %s592 = scalar_select %p591, %s590, 15
        %s593 = smul.addr %s592, 8
        %s594 = scalar_lea.vmem %s5, %s593
      $region52: #{dhcf_forward.13} parent=47 // pred_fallthru
        _
    $region48: #{dhcf_forward.13} parent=5 // pred_fallthru
      _
  $region6: #{dhcf_forward.13} parent=0 // loop_footer
    %s15 = sadd.s32 1, %s11
  $region7: #{dhcf_forward.13} parent=0 // loop_footer_branch
    %10 = sbr.rel target = $region3
  $region8: #{dhcf_forward.13} parent=0 // loop_exit
    _

// kernel: dhcf_forward.12
$region0: #{dhcf_forward.12}
  #allocation0 [shape = 'u32[]', space=smem, size = 0x4, offset = 0x4, fixed_abs, tag = 'smem constant byte address 0x4 - core index']
  #allocation1 [shape = 'u32[144,128]{1,0:T(1,128)}', space=vmem, size = 0x12000, scoped, tag = 'internal scratch']
  %s0 = inlined_call_operand.vmem [shape: f32[128,96], index: 0, kind: input, shape index: {}]
  %s1 = inlined_call_operand.vmem [shape: f32[128,32], index: 1, kind: input, shape index: {}]
  %s2 = inlined_call_operand.vmem [shape: f32[96,32], index: 2, kind: output, shape index: {}]
  %s3 = sld [smem:[#allocation0]]
  $region45: #{dhcf_forward.12} parent=0
    _
  %s5 = ssub.s32 1, %s3
  %s6 = scalar_select 0, %s5, %s3
  loop: start=0, step=1, limit=4
  $region2: #{dhcf_forward.12} parent=0 // loop_pre_header
    _
  $region3: #{dhcf_forward.12} parent=0 // loop_header
    %s8 = sphi 0, %s12
    %p9 = scmp.ge.s32.totalorder %s8, 4
    %s18 = sphi 0, %s20
    %s21 = sphi 0, %s18
    %s22 = sphi 0, %s21
    %s38 = sphi 0, %s22
    %s44 = sphi 0, %s46
    %s47 = sphi 0, %s44
    %s48 = sphi 0, %s47
    %s64 = sphi 0, %s48
    %s68 = sphi 0, %s68
    %s70 = sphi 0, %s68
    %s71 = sphi 0, %s70
    %s85 = sphi 0, %s71
  $region4: #{dhcf_forward.12} parent=0 // loop_header_branch
    %11 = sbr.rel (%p9) target = $region8
  $region5: #{dhcf_forward.12} parent=0 // loop_body
    %s13 = ssub.s32 %s8, 1
    %s14 = ssub.s32 %s8, 2
    %s15 = sadd.s32 %s8, 1
    %s16 = ssub.s32 %s8, %s15
    %p17 = scmp.eq.s32.totalorder %s16, 0
    %s19 = sadd.s32 %s18, 1
    %s20 = scalar_select %p17, %s18, %s19
    %p23 = pneg %p17
    %p24 = scmp.eq.s32.totalorder %s8, 1
    %p25 = por %p23, %p24
    %p26 = scmp.ne.s32.totalorder %s18, %s21
    %p27 = scmp.eq.s32.totalorder %s8, 0
    %p28 = por %p26, %p27
    %p29 = scmp.ne.s32.totalorder %s18, %s21
    %p30 = scmp.eq.s32.totalorder %s13, 1
    %p31 = por %p29, %p30
    %p32 = scmp.ne.s32.totalorder %s21, %s22
    %p33 = scmp.eq.s32.totalorder %s13, 0
    %p34 = por %p32, %p33
    %p35 = scmp.ne.s32.totalorder %s21, %s22
    %p36 = scmp.eq.s32.totalorder %s14, 1
    %p37 = por %p35, %p36
    %p39 = scmp.ne.s32.totalorder %s22, %s38
    %p40 = scmp.eq.s32.totalorder %s14, 0
    %p41 = por %p39, %p40
    %s42 = ssub.s32 %s8, %s15
    %p43 = scmp.eq.s32.totalorder %s42, 0
    %s45 = sadd.s32 %s44, 1
    %s46 = scalar_select %p43, %s44, %s45
    %p49 = pneg %p43
    %p50 = scmp.eq.s32.totalorder %s8, 1
    %p51 = por %p49, %p50
    %p52 = scmp.ne.s32.totalorder %s44, %s47
    %p53 = scmp.eq.s32.totalorder %s8, 0
    %p54 = por %p52, %p53
    %p55 = scmp.ne.s32.totalorder %s44, %s47
    %p56 = scmp.eq.s32.totalorder %s13, 1
    %p57 = por %p55, %p56
    %p58 = scmp.ne.s32.totalorder %s47, %s48
    %p59 = scmp.eq.s32.totalorder %s13, 0
    %p60 = por %p58, %p59
    %p61 = scmp.ne.s32.totalorder %s47, %s48
    %p62 = scmp.eq.s32.totalorder %s14, 1
    %p63 = por %p61, %p62
    %p65 = scmp.ne.s32.totalorder %s48, %s64
    %p66 = scmp.eq.s32.totalorder %s14, 0
    %p67 = por %p65, %p66
    %s69 = sadd.s32 %s68, 1
    %p72 = scmp.eq.s32.totalorder %s8, 1
    %p73 = scmp.ne.s32.totalorder %s68, %s70
    %p74 = scmp.eq.s32.totalorder %s8, 0
    %p75 = por %p73, %p74
    %p76 = scmp.ne.s32.totalorder %s68, %s70
    %p77 = scmp.eq.s32.totalorder %s13, 1
    %p78 = por %p76, %p77
    %p79 = scmp.ne.s32.totalorder %s70, %s71
    %p80 = scmp.eq.s32.totalorder %s13, 0
    %p81 = por %p79, %p80
    %p82 = scmp.ne.s32.totalorder %s70, %s71
    %p83 = scmp.eq.s32.totalorder %s14, 1
    %p84 = por %p82, %p83
    %p86 = scmp.ne.s32.totalorder %s71, %s85
    %p87 = scmp.eq.s32.totalorder %s14, 0
    %p88 = por %p86, %p87
    %p89 = scmp.le.s32.totalorder 1, %s8
    %p90 = scmp.lt.s32.totalorder %s8, 3
    %p91 = pnand %p89, %p90
    %p92 = pneg %p91
    // Predicated region
    $region9: #{dhcf_forward.12} parent=5 // pred_check
      _
    $region10: #{dhcf_forward.12} parent=5 // pred_check_branch
      %94 = sbr.rel (%p91) target = $region12
    $region11: #{dhcf_forward.12} parent=5 // pred_region
      %s95 = ssub.s32 %s8, 1
    $region12: #{dhcf_forward.12} parent=5 // pred_fallthru
      _
    %p96 = scmp.lt.s32.totalorder %s8, 2
    // Predicated region
    $region13: #{dhcf_forward.12} parent=5 // pred_check
      %p97 = pneg %p96
    $region14: #{dhcf_forward.12} parent=5 // pred_check_branch
      %99 = sbr.rel (%p97) target = $region16
    $region15: #{dhcf_forward.12} parent=5 // pred_region
      // Predicated region
      $region17: #{dhcf_forward.12} parent=15 // pred_check
        %p100 = pneg %p28
      $region18: #{dhcf_forward.12} parent=15 // pred_check_branch
        %102 = sbr.rel (%p100) target = $region20
      $region19: #{dhcf_forward.12} parent=15 // pred_region
        %s103 = smul.u32 8, %s8
        %p104 = scmp.lt.s32.totalorder %s103, 15
        %s105 = scalar_select %p104, %s103, 15
        %s106 = smul.addr %s105, 8
        %s107 = scalar_lea.vmem %s0, %s106
        %s108 = smul.u32 8, %s8
      $region20: #{dhcf_forward.12} parent=15 // pred_fallthru
        _
      // Predicated region
      $region21: #{dhcf_forward.12} parent=15 // pred_check
        %p109 = pneg %p54
      $region22: #{dhcf_forward.12} parent=15 // pred_check_branch
        %111 = sbr.rel (%p109) target = $region24
      $region23: #{dhcf_forward.12} parent=15 // pred_region
        %s112 = smul.u32 8, %s8
        %p113 = scmp.lt.s32.totalorder %s112, 15
        %s114 = scalar_select %p113, %s112, 15
        %s115 = smul.addr %s114, 8
        %s116 = scalar_lea.vmem %s1, %s115
        %s117 = smul.u32 8, %s8
      $region24: #{dhcf_forward.12} parent=15 // pred_fallthru
        _
    $region16: #{dhcf_forward.12} parent=5 // pred_fallthru
      _
    %p118 = scmp.le.s32.totalorder 1, %s8
    %p119 = scmp.lt.s32.totalorder %s8, 3
    %p120 = pnand %p118, %p119
    %p121 = pneg %p120
    // Predicated region
    $region25: #{dhcf_forward.12} parent=5 // pred_check
      _
    $region26: #{dhcf_forward.12} parent=5 // pred_check_branch
      %123 = sbr.rel (%p120) target = $region28
    $region27: #{dhcf_forward.12} parent=5 // pred_region
      %s124 = ssub.s32 %s8, 1
      %s125 = smul.u32 8, %s13
      %p126 = scmp.lt.s32.totalorder %s125, 15
      %s127 = scalar_select %p126, %s125, 15
      %s128 = smul.addr %s127, 8
      %s129 = scalar_lea.vmem %s0, %s128
      %p130 = pneg %p34
      %p131 = pneg %p31
      %s132 = smul.u32 8, %s13
      %p133 = scmp.lt.s32.totalorder %s132, 15
      %s134 = scalar_select %p133, %s132, 15
      %s135 = smul.addr %s134, 8
      %s136 = scalar_lea.vmem %s1, %s135
      %p137 = pneg %p60
      %p138 = pneg %p57
      %p139 = pneg %p81
      %p140 = pneg %p78
      %s141 = smul.u32 8, %s13
      %p142 = scmp.lt.s32.totalorder %s141, 15
      %s143 = scalar_select %p142, %s141, 15
      %s144 = smul.addr %s143, 8
      %s145 = scalar_lea.vmem %s0, %s144
      %s146 = smul.u32 8, %s13
      %s147 = smul.u32 8, %s13
      %p148 = scmp.lt.s32.totalorder %s147, 15
      %s149 = scalar_select %p148, %s147, 15
      %s150 = smul.addr %s149, 8
      %s151 = scalar_lea.vmem %s1, %s150
      %s152 = smul.u32 8, %s13
      %p153 = scmp.eq.s32.totalorder %s13, 0
      // Predicated region
      $region29: #{dhcf_forward.12} parent=27 // pred_check
        %p154 = pneg %p153
      $region30: #{dhcf_forward.12} parent=27 // pred_check_branch
        %156 = sbr.rel (%p154) target = $region32
      $region31: #{dhcf_forward.12} parent=27 // pred_region
        %vm157 = vcmask 261120
        %158 = vst.msk [vmem:[%s2] sm:$0xff] %vm157, 0.0
        %159 = vst.msk [vmem:[%s2 + $0x8] sm:$0xff] %vm157, 0.0
        %160 = vst.msk [vmem:[%s2 + $0x10] sm:$0xff] %vm157, 0.0
        %161 = vst.msk [vmem:[%s2 + $0x18] sm:$0xff] %vm157, 0.0
        %162 = vst.msk [vmem:[%s2 + $0x20] sm:$0xff] %vm157, 0.0
        %163 = vst.msk [vmem:[%s2 + $0x28] sm:$0xff] %vm157, 0.0
        %164 = vst.msk [vmem:[%s2 + $0x30] sm:$0xff] %vm157, 0.0
        %165 = vst.msk [vmem:[%s2 + $0x38] sm:$0xff] %vm157, 0.0
        %166 = vst.msk [vmem:[%s2 + $0x40] sm:$0xff] %vm157, 0.0
        %167 = vst.msk [vmem:[%s2 + $0x48] sm:$0xff] %vm157, 0.0
        %168 = vst.msk [vmem:[%s2 + $0x50] sm:$0xff] %vm157, 0.0
        %169 = vst.msk [vmem:[%s2 + $0x58] sm:$0xff] %vm157, 0.0
      $region32: #{dhcf_forward.12} parent=27 // pred_fallthru
        _
      %v170 = vld [vmem:[%s2] sm:$0xff]
      %v171 = vld [vmem:[%s2 + $0x8] sm:$0xff]
      %v172 = vld [vmem:[%s2 + $0x10] sm:$0xff]
      %v173 = vld [vmem:[%s2 + $0x18] sm:$0xff]
      %v174 = vld [vmem:[%s2 + $0x20] sm:$0xff]
      %v175 = vld [vmem:[%s2 + $0x28] sm:$0xff]
      %v176 = vld [vmem:[%s2 + $0x30] sm:$0xff]
      %v177 = vld [vmem:[%s2 + $0x38] sm:$0xff]
      %v178 = vld [vmem:[%s2 + $0x40] sm:$0xff]
      %v179 = vld [vmem:[%s2 + $0x48] sm:$0xff]
      %v180 = vld [vmem:[%s2 + $0x50] sm:$0xff]
      %v181 = vld [vmem:[%s2 + $0x58] sm:$0xff]
      %v182 = vld [vmem:[%s145] sm:$0xff]
      %v183 = vld [vmem:[%s145 + $0x8] sm:$0xff]
      %v184 = vld [vmem:[%s145 + $0x10] sm:$0xff]
      %v185 = vld [vmem:[%s145 + $0x18] sm:$0xff]
      %v186 = vld [vmem:[%s145 + $0x20] sm:$0xff]
      %v187 = vld [vmem:[%s145 + $0x28] sm:$0xff]
      %v188 = vld [vmem:[%s145 + $0x30] sm:$0xff]
      %v189 = vld [vmem:[%s145 + $0x38] sm:$0xff]
      %v190 = vld [vmem:[%s151] sm:$0xff]
      %v191 = vld [vmem:[%s151 + $0x8] sm:$0xff]
      %v192 = vld [vmem:[%s151 + $0x10] sm:$0xff]
      %v193 = vld [vmem:[%s151 + $0x18] sm:$0xff]
      %v194 = vld [vmem:[%s151 + $0x20] sm:$0xff]
      %v195 = vld [vmem:[%s151 + $0x28] sm:$0xff]
      %v196 = vld [vmem:[%s151 + $0x30] sm:$0xff]
      %v197 = vld [vmem:[%s151 + $0x38] sm:$0xff]
      %198 = vxpose.xlu0.b32.start [1/16] %v182, 128
      %199 = vxpose.xlu0.b32.cont [2/16] %v183, 128
      %200 = vxpose.xlu0.b32.cont [3/16] %v184, 128
      %201 = vxpose.xlu0.b32.cont [4/16] %v185, 128
      %202 = vxpose.xlu0.b32.cont [5/16] %v186, 128
      %203 = vxpose.xlu0.b32.cont [6/16] %v187, 128
      %204 = vxpose.xlu0.b32.cont [7/16] %v188, 128
      %205 = vxpose.xlu0.b32.cont [8/16] %v189, 128
      %206 = vxpose.xlu0.b32.cont [9/16] 0.0, 128
      %207 = vxpose.xlu0.b32.cont [10/16] 0.0, 128
      %208 = vxpose.xlu0.b32.cont [11/16] 0.0, 128
      %209 = vxpose.xlu0.b32.cont [12/16] 0.0, 128
      %210 = vxpose.xlu0.b32.cont [13/16] 0.0, 128
      %211 = vxpose.xlu0.b32.cont [14/16] 0.0, 128
      %212 = vxpose.xlu0.b32.cont [15/16] 0.0, 128
      %213 = vxpose.xlu0.b32.end [16/16] 0.0, 128
      %v214 = vpop.trf.xlu0
      %v215 = vpop.trf.xlu0
      %v216 = vpop.trf.xlu0
      %v217 = vpop.trf.xlu0
      %v218 = vpop.trf.xlu0
      %v219 = vpop.trf.xlu0
      %v220 = vpop.trf.xlu0
      %v221 = vpop.trf.xlu0
      %v222 = vpop.trf.xlu0
      %v223 = vpop.trf.xlu0
      %v224 = vpop.trf.xlu0
      %v225 = vpop.trf.xlu0
      %v226 = vpop.trf.xlu0
      %v227 = vpop.trf.xlu0
      %v228 = vpop.trf.xlu0
      %v229 = vpop.trf.xlu0
      %vm230 = vcmask 523264
      %v232 = vsel %vm230, %v214, 0
      %v235 = vsel %vm230, %v215, 0
      %v238 = vsel %vm230, %v216, 0
      %v241 = vsel %vm230, %v217, 0
      %v244 = vsel %vm230, %v218, 0
      %v247 = vsel %vm230, %v219, 0
      %v250 = vsel %vm230, %v220, 0
      %v253 = vsel %vm230, %v221, 0
      %v256 = vsel %vm230, %v222, 0
      %v259 = vsel %vm230, %v223, 0
      %v262 = vsel %vm230, %v224, 0
      %v265 = vsel %vm230, %v225, 0
      %267 = vmatprep.subr.mxu0 0.0
      %268 = vmatpush1.msra.mxu0 %v190
      %269 = vmatprep.subr.mxu0 0.0
      %270 = vmatpush1.msra.mxu0 %v191
      %271 = vmatprep.subr.mxu0 0.0
      %272 = vmatpush1.msra.mxu0 %v192
      %273 = vmatprep.subr.mxu0 0.0
      %274 = vmatpush1.msra.mxu0 %v193
      %275 = vmatprep.subr.mxu0 0.0
      %276 = vmatpush1.msra.mxu0 %v194
      %277 = vmatprep.subr.mxu0 0.0
      %278 = vmatpush1.msra.mxu0 %v195
      %279 = vmatprep.subr.mxu0 0.0
      %280 = vmatpush1.msra.mxu0 %v196
      %281 = vmatprep.subr.mxu0 0.0
      %282 = vmatpush1.msra.mxu0 %v197
      %283 = vmatprep.subr.mxu0 0.0
      %284 = vmatpush1.msra.mxu0 0.0
      %285 = vmatprep.subr.mxu0 0.0
      %286 = vmatpush1.msra.mxu0 0.0
      %287 = vmatprep.subr.mxu0 0.0
      %288 = vmatpush1.msra.mxu0 0.0
      %289 = vmatprep.subr.mxu0 0.0
      %290 = vmatpush1.msra.mxu0 0.0
      %291 = vmatprep.subr.mxu0 0.0
      %292 = vmatpush1.msra.mxu0 0.0
      %293 = vmatprep.subr.mxu0 0.0
      %294 = vmatpush1.msra.mxu0 0.0
      %295 = vmatprep.subr.mxu0 0.0
      %296 = vmatpush1.msra.mxu0 0.0
      %297 = vmatprep.subr.mxu0 0.0
      %298 = vmatpush1.msra.mxu0 0.0
      %299 = vmatprep.subr.mxu0 0.0
      %300 = vmatpush1.msra.mxu0 0.0
      %301 = vmatprep.subr.mxu0 0.0
      %302 = vmatpush1.msra.mxu0 0.0
      %303 = vmatprep.subr.mxu0 0.0
      %304 = vmatpush1.msra.mxu0 0.0
      %305 = vmatprep.subr.mxu0 0.0
      %306 = vmatpush1.msra.mxu0 0.0
      %307 = vmatprep.subr.mxu0 0.0
      %308 = vmatpush1.msra.mxu0 0.0
      %309 = vmatprep.subr.mxu0 0.0
      %310 = vmatpush1.msra.mxu0 0.0
      %311 = vmatprep.subr.mxu0 0.0
      %312 = vmatpush1.msra.mxu0 0.0
      %313 = vmatprep.subr.mxu0 0.0
      %314 = vmatpush1.msra.mxu0 0.0
      %315 = vmatprep.subr.mxu0 0.0
      %316 = vmatpush1.msra.mxu0 0.0
      %317 = vmatprep.subr.mxu0 0.0
      %318 = vmatpush1.msra.mxu0 0.0
      %319 = vmatprep.subr.mxu0 0.0
      %320 = vmatpush1.msra.mxu0 0.0
      %321 = vmatprep.subr.mxu0 0.0
      %322 = vmatpush1.msra.mxu0 0.0
      %323 = vmatprep.subr.mxu0 0.0
      %324 = vmatpush1.msra.mxu0 0.0
      %325 = vmatprep.subr.mxu0 0.0
      %326 = vmatpush1.msra.mxu0 0.0
      %327 = vmatprep.subr.mxu0 0.0
      %328 = vmatpush1.msra.mxu0 0.0
      %329 = vmatprep.subr.mxu0 0.0
      %330 = vmatpush1.msra.mxu0 0.0
      %331 = vmatprep.mubr.f32.mxu0 0.0
      %332 = vmatmul.mubr.f32.gmra.mrb[0].mxu0 %v232
      %v333 = vpop.f32.mrb[0].mxu0
      %v334 = vadd.f32 0.0, %v333
      %v335 = vpop.f32.mrb[0].mxu0
      %336 = vmatprep.mubr.f32.mxu0 0.0
      %337 = vmatmul.mubr.f32.gmra.mrb[0].mxu0 %v235
      %v338 = vpop.f32.mrb[0].mxu0
      %v339 = vadd.f32 0.0, %v338
      %v340 = vpop.f32.mrb[0].mxu0
      %341 = vmatprep.mubr.f32.mxu0 0.0
      %342 = vmatmul.mubr.f32.gmra.mrb[0].mxu0 %v238
      %v343 = vpop.f32.mrb[0].mxu0
      %v344 = vadd.f32 0.0, %v343
      %v345 = vpop.f32.mrb[0].mxu0
      %346 = vmatprep.mubr.f32.mxu0 0.0
      %347 = vmatmul.mubr.f32.gmra.mrb[0].mxu0 %v241
      %v348 = vpop.f32.mrb[0].mxu0
      %v349 = vadd.f32 0.0, %v348
      %v350 = vpop.f32.mrb[0].mxu0
      %351 = vmatprep.mubr.f32.mxu0 0.0
      %352 = vmatmul.mubr.f32.gmra.mrb[0].mxu0 %v244
      %v353 = vpop.f32.mrb[0].mxu0
      %v354 = vadd.f32 0.0, %v353
      %v355 = vpop.f32.mrb[0].mxu0
      %356 = vmatprep.mubr.f32.mxu0 0.0
      %357 = vmatmul.mubr.f32.gmra.mrb[0].mxu0 %v247
      %v358 = vpop.f32.mrb[0].mxu0
      %v359 = vadd.f32 0.0, %v358
      %v360 = vpop.f32.mrb[0].mxu0
      %361 = vmatprep.mubr.f32.mxu0 0.0
      %362 = vmatmul.mubr.f32.gmra.mrb[0].mxu0 %v250
      %v363 = vpop.f32.mrb[0].mxu0
      %v364 = vadd.f32 0.0, %v363
      %v365 = vpop.f32.mrb[0].mxu0
      %366 = vmatprep.mubr.f32.mxu0 0.0
      %367 = vmatmul.mubr.f32.gmra.mrb[0].mxu0 %v253
      %v368 = vpop.f32.mrb[0].mxu0
      %v369 = vadd.f32 0.0, %v368
      %v370 = vpop.f32.mrb[0].mxu0
      %371 = vmatprep.mubr.f32.mxu0 0.0
      %372 = vmatmul.mubr.f32.gmra.mrb[0].mxu0 %v256
      %v373 = vpop.f32.mrb[0].mxu0
      %v374 = vadd.f32 0.0, %v373
      %v375 = vpop.f32.mrb[0].mxu0
      %376 = vmatprep.mubr.f32.mxu0 0.0
      %377 = vmatmul.mubr.f32.gmra.mrb[0].mxu0 %v259
      %v378 = vpop.f32.mrb[0].mxu0
      %v379 = vadd.f32 0.0, %v378
      %v380 = vpop.f32.mrb[0].mxu0
      %381 = vmatprep.mubr.f32.mxu0 0.0
      %382 = vmatmul.mubr.f32.gmra.mrb[0].mxu0 %v262
      %v383 = vpop.f32.mrb[0].mxu0
      %v384 = vadd.f32 0.0, %v383
      %v385 = vpop.f32.mrb[0].mxu0
      %386 = vmatprep.mubr.f32.mxu0 0.0
      %387 = vmatmul.mubr.f32.gmra.mrb[0].mxu0 %v265
      %v388 = vpop.f32.mrb[0].mxu0
      %v389 = vadd.f32 0.0, %v388
      %v390 = vpop.f32.mrb[0].mxu0
      %391 = vdwg.mxu0
      %v392 = vadd.f32 %v170, %v334
      %v393 = vadd.f32 %v171, %v339
      %v394 = vadd.f32 %v172, %v344
      %v395 = vadd.f32 %v173, %v349
      %v396 = vadd.f32 %v174, %v354
      %v397 = vadd.f32 %v175, %v359
      %v398 = vadd.f32 %v176, %v364
      %v399 = vadd.f32 %v177, %v369
      %v400 = vadd.f32 %v178, %v374
      %v401 = vadd.f32 %v179, %v379
      %v402 = vadd.f32 %v180, %v384
      %v403 = vadd.f32 %v181, %v389
      %vm404 = vcmask 261120
      %405 = vst.msk [vmem:[%s2] sm:$0xff] %vm404, %v392
      %406 = vst.msk [vmem:[%s2 + $0x8] sm:$0xff] %vm404, %v393
      %407 = vst.msk [vmem:[%s2 + $0x10] sm:$0xff] %vm404, %v394
      %408 = vst.msk [vmem:[%s2 + $0x18] sm:$0xff] %vm404, %v395
      %409 = vst.msk [vmem:[%s2 + $0x20] sm:$0xff] %vm404, %v396
      %410 = vst.msk [vmem:[%s2 + $0x28] sm:$0xff] %vm404, %v397
      %411 = vst.msk [vmem:[%s2 + $0x30] sm:$0xff] %vm404, %v398
      %412 = vst.msk [vmem:[%s2 + $0x38] sm:$0xff] %vm404, %v399
      %413 = vst.msk [vmem:[%s2 + $0x40] sm:$0xff] %vm404, %v400
      %414 = vst.msk [vmem:[%s2 + $0x48] sm:$0xff] %vm404, %v401
      %415 = vst.msk [vmem:[%s2 + $0x50] sm:$0xff] %vm404, %v402
      %416 = vst.msk [vmem:[%s2 + $0x58] sm:$0xff] %vm404, %v403
      // Predicated region
      $region33: #{dhcf_forward.12} parent=27 // pred_check
        %p417 = pneg %p78
      $region34: #{dhcf_forward.12} parent=27 // pred_check_branch
        %419 = sbr.rel (%p417) target = $region36
      $region35: #{dhcf_forward.12} parent=27 // pred_region
        _
      $region36: #{dhcf_forward.12} parent=27 // pred_fallthru
        _
      // Predicated region
      $region37: #{dhcf_forward.12} parent=27 // pred_check
        %p420 = pneg %p78
      $region38: #{dhcf_forward.12} parent=27 // pred_check_branch
        %422 = sbr.rel (%p420) target = $region40
      $region39: #{dhcf_forward.12} parent=27 // pred_region
        _
      $region40: #{dhcf_forward.12} parent=27 // pred_fallthru
        _
    $region28: #{dhcf_forward.12} parent=5 // pred_fallthru
      _
    %p423 = scmp.le.s32.totalorder 2, %s8
    // Predicated region
    $region41: #{dhcf_forward.12} parent=5 // pred_check
      %p424 = pneg %p423
    $region42: #{dhcf_forward.12} parent=5 // pred_check_branch
      %426 = sbr.rel (%p424) target = $region44
    $region43: #{dhcf_forward.12} parent=5 // pred_region
      %s427 = ssub.s32 %s8, 2
    $region44: #{dhcf_forward.12} parent=5 // pred_fallthru
      _
  $region6: #{dhcf_forward.12} parent=0 // loop_footer
    %s12 = sadd.s32 1, %s8
  $region7: #{dhcf_forward.12} parent=0 // loop_footer_branch
    %7 = sbr.rel target = $region3
  $region8: #{dhcf_forward.12} parent=0 // loop_exit
    _

// kernel: dhcf_forward.15
$region0: #{dhcf_forward.15}
  #allocation0 [shape = 'u32[]', space=smem, size = 0x4, offset = 0x4, fixed_abs, tag = 'smem constant byte address 0x4 - core index']
  #allocation1 [shape = 'u32[144,128]{1,0:T(1,128)}', space=vmem, size = 0x12000, scoped, tag = 'internal scratch']
  %s0 = inlined_call_operand.vmem [shape: f32[128,96], index: 0, kind: input, shape index: {}]
  %s1 = inlined_call_operand.vmem [shape: f32[96,32], index: 1, kind: input, shape index: {}]
  %s2 = inlined_call_operand.vmem [shape: f32[128,32], index: 2, kind: input, shape index: {}]
  %s3 = inlined_call_operand.vmem [shape: f32[32,32], index: 3, kind: input, shape index: {}]
  %s4 = inlined_call_operand.vmem [shape: f32[1,32], index: 4, kind: input, shape index: {}]
  %s5 = inlined_call_operand.vmem [shape: f32[32,16], index: 5, kind: input, shape index: {}]
  %s6 = inlined_call_operand.vmem [shape: f32[1,16], index: 6, kind: input, shape index: {}]
  %s7 = inlined_call_operand.vmem [shape: f32[128,16], index: 7, kind: output, shape index: {}]
  %s8 = sld [smem:[#allocation0]]
  $region61: #{dhcf_forward.15} parent=0
    _
  %s10 = ssub.s32 1, %s8
  %s11 = scalar_select 0, %s10, %s8
  loop: start=0, step=1, limit=4
  $region2: #{dhcf_forward.15} parent=0 // loop_pre_header
    _
  $region3: #{dhcf_forward.15} parent=0 // loop_header
    %s13 = sphi 0, %s17
    %p14 = scmp.ge.s32.totalorder %s13, 4
    %s23 = sphi 0, %s25
    %s26 = sphi 0, %s23
    %s27 = sphi 0, %s26
    %s43 = sphi 0, %s27
    %s47 = sphi 0, %s47
    %s49 = sphi 0, %s47
    %s50 = sphi 0, %s49
    %s64 = sphi 0, %s50
    %s70 = sphi 0, %s72
    %s73 = sphi 0, %s70
    %s74 = sphi 0, %s73
    %s90 = sphi 0, %s74
    %s94 = sphi 0, %s94
    %s96 = sphi 0, %s94
    %s97 = sphi 0, %s96
    %s111 = sphi 0, %s97
    %s115 = sphi 0, %s115
    %s117 = sphi 0, %s115
    %s118 = sphi 0, %s117
    %s132 = sphi 0, %s118
    %s136 = sphi 0, %s136
    %s138 = sphi 0, %s136
    %s139 = sphi 0, %s138
    %s153 = sphi 0, %s139
    %s157 = sphi 0, %s157
    %s159 = sphi 0, %s157
    %s160 = sphi 0, %s159
    %s174 = sphi 0, %s160
    %s180 = sphi 0, %s182
    %s183 = sphi 0, %s180
    %s184 = sphi 0, %s183
    %s200 = sphi 0, %s184
  $region4: #{dhcf_forward.15} parent=0 // loop_header_branch
    %16 = sbr.rel (%p14) target = $region8
  $region5: #{dhcf_forward.15} parent=0 // loop_body
    %s18 = ssub.s32 %s13, 1
    %s19 = ssub.s32 %s13, 2
    %s20 = sadd.s32 %s13, 1
    %s21 = ssub.s32 %s13, %s20
    %p22 = scmp.eq.s32.totalorder %s21, 0
    %s24 = sadd.s32 %s23, 1
    %s25 = scalar_select %p22, %s23, %s24
    %p28 = pneg %p22
    %p29 = scmp.eq.s32.totalorder %s13, 1
    %p30 = por %p28, %p29
    %p31 = scmp.ne.s32.totalorder %s23, %s26
    %p32 = scmp.eq.s32.totalorder %s13, 0
    %p33 = por %p31, %p32
    %p34 = scmp.ne.s32.totalorder %s23, %s26
    %p35 = scmp.eq.s32.totalorder %s18, 1
    %p36 = por %p34, %p35
    %p37 = scmp.ne.s32.totalorder %s26, %s27
    %p38 = scmp.eq.s32.totalorder %s18, 0
    %p39 = por %p37, %p38
    %p40 = scmp.ne.s32.totalorder %s26, %s27
    %p41 = scmp.eq.s32.totalorder %s19, 1
    %p42 = por %p40, %p41
    %p44 = scmp.ne.s32.totalorder %s27, %s43
    %p45 = scmp.eq.s32.totalorder %s19, 0
    %p46 = por %p44, %p45
    %s48 = sadd.s32 %s47, 1
    %p51 = scmp.eq.s32.totalorder %s13, 1
    %p52 = scmp.ne.s32.totalorder %s47, %s49
    %p53 = scmp.eq.s32.totalorder %s13, 0
    %p54 = por %p52, %p53
    %p55 = scmp.ne.s32.totalorder %s47, %s49
    %p56 = scmp.eq.s32.totalorder %s18, 1
    %p57 = por %p55, %p56
    %p58 = scmp.ne.s32.totalorder %s49, %s50
    %p59 = scmp.eq.s32.totalorder %s18, 0
    %p60 = por %p58, %p59
    %p61 = scmp.ne.s32.totalorder %s49, %s50
    %p62 = scmp.eq.s32.totalorder %s19, 1
    %p63 = por %p61, %p62
    %p65 = scmp.ne.s32.totalorder %s50, %s64
    %p66 = scmp.eq.s32.totalorder %s19, 0
    %p67 = por %p65, %p66
    %s68 = ssub.s32 %s13, %s20
    %p69 = scmp.eq.s32.totalorder %s68, 0
    %s71 = sadd.s32 %s70, 1
    %s72 = scalar_select %p69, %s70, %s71
    %p75 = pneg %p69
    %p76 = scmp.eq.s32.totalorder %s13, 1
    %p77 = por %p75, %p76
    %p78 = scmp.ne.s32.totalorder %s70, %s73
    %p79 = scmp.eq.s32.totalorder %s13, 0
    %p80 = por %p78, %p79
    %p81 = scmp.ne.s32.totalorder %s70, %s73
    %p82 = scmp.eq.s32.totalorder %s18, 1
    %p83 = por %p81, %p82
    %p84 = scmp.ne.s32.totalorder %s73, %s74
    %p85 = scmp.eq.s32.totalorder %s18, 0
    %p86 = por %p84, %p85
    %p87 = scmp.ne.s32.totalorder %s73, %s74
    %p88 = scmp.eq.s32.totalorder %s19, 1
    %p89 = por %p87, %p88
    %p91 = scmp.ne.s32.totalorder %s74, %s90
    %p92 = scmp.eq.s32.totalorder %s19, 0
    %p93 = por %p91, %p92
    %s95 = sadd.s32 %s94, 1
    %p98 = scmp.eq.s32.totalorder %s13, 1
    %p99 = scmp.ne.s32.totalorder %s94, %s96
    %p100 = scmp.eq.s32.totalorder %s13, 0
    %p101 = por %p99, %p100
    %p102 = scmp.ne.s32.totalorder %s94, %s96
    %p103 = scmp.eq.s32.totalorder %s18, 1
    %p104 = por %p102, %p103
    %p105 = scmp.ne.s32.totalorder %s96, %s97
    %p106 = scmp.eq.s32.totalorder %s18, 0
    %p107 = por %p105, %p106
    %p108 = scmp.ne.s32.totalorder %s96, %s97
    %p109 = scmp.eq.s32.totalorder %s19, 1
    %p110 = por %p108, %p109
    %p112 = scmp.ne.s32.totalorder %s97, %s111
    %p113 = scmp.eq.s32.totalorder %s19, 0
    %p114 = por %p112, %p113
    %s116 = sadd.s32 %s115, 1
    %p119 = scmp.eq.s32.totalorder %s13, 1
    %p120 = scmp.ne.s32.totalorder %s115, %s117
    %p121 = scmp.eq.s32.totalorder %s13, 0
    %p122 = por %p120, %p121
    %p123 = scmp.ne.s32.totalorder %s115, %s117
    %p124 = scmp.eq.s32.totalorder %s18, 1
    %p125 = por %p123, %p124
    %p126 = scmp.ne.s32.totalorder %s117, %s118
    %p127 = scmp.eq.s32.totalorder %s18, 0
    %p128 = por %p126, %p127
    %p129 = scmp.ne.s32.totalorder %s117, %s118
    %p130 = scmp.eq.s32.totalorder %s19, 1
    %p131 = por %p129, %p130
    %p133 = scmp.ne.s32.totalorder %s118, %s132
    %p134 = scmp.eq.s32.totalorder %s19, 0
    %p135 = por %p133, %p134
    %s137 = sadd.s32 %s136, 1
    %p140 = scmp.eq.s32.totalorder %s13, 1
    %p141 = scmp.ne.s32.totalorder %s136, %s138
    %p142 = scmp.eq.s32.totalorder %s13, 0
    %p143 = por %p141, %p142
    %p144 = scmp.ne.s32.totalorder %s136, %s138
    %p145 = scmp.eq.s32.totalorder %s18, 1
    %p146 = por %p144, %p145
    %p147 = scmp.ne.s32.totalorder %s138, %s139
    %p148 = scmp.eq.s32.totalorder %s18, 0
    %p149 = por %p147, %p148
    %p150 = scmp.ne.s32.totalorder %s138, %s139
    %p151 = scmp.eq.s32.totalorder %s19, 1
    %p152 = por %p150, %p151
    %p154 = scmp.ne.s32.totalorder %s139, %s153
    %p155 = scmp.eq.s32.totalorder %s19, 0
    %p156 = por %p154, %p155
    %s158 = sadd.s32 %s157, 1
    %p161 = scmp.eq.s32.totalorder %s13, 1
    %p162 = scmp.ne.s32.totalorder %s157, %s159
    %p163 = scmp.eq.s32.totalorder %s13, 0
    %p164 = por %p162, %p163
    %p165 = scmp.ne.s32.totalorder %s157, %s159
    %p166 = scmp.eq.s32.totalorder %s18, 1
    %p167 = por %p165, %p166
    %p168 = scmp.ne.s32.totalorder %s159, %s160
    %p169 = scmp.eq.s32.totalorder %s18, 0
    %p170 = por %p168, %p169
    %p171 = scmp.ne.s32.totalorder %s159, %s160
    %p172 = scmp.eq.s32.totalorder %s19, 1
    %p173 = por %p171, %p172
    %p175 = scmp.ne.s32.totalorder %s160, %s174
    %p176 = scmp.eq.s32.totalorder %s19, 0
    %p177 = por %p175, %p176
    %s178 = ssub.s32 %s13, %s20
    %p179 = scmp.eq.s32.totalorder %s178, 0
    %s181 = sadd.s32 %s180, 1
    %s182 = scalar_select %p179, %s180, %s181
    %p185 = pneg %p179
    %p186 = scmp.eq.s32.totalorder %s13, 1
    %p187 = por %p185, %p186
    %p188 = scmp.ne.s32.totalorder %s180, %s183
    %p189 = scmp.eq.s32.totalorder %s13, 0
    %p190 = por %p188, %p189
    %p191 = scmp.ne.s32.totalorder %s180, %s183
    %p192 = scmp.eq.s32.totalorder %s18, 1
    %p193 = por %p191, %p192
    %p194 = scmp.ne.s32.totalorder %s183, %s184
    %p195 = scmp.eq.s32.totalorder %s18, 0
    %p196 = por %p194, %p195
    %p197 = scmp.ne.s32.totalorder %s183, %s184
    %p198 = scmp.eq.s32.totalorder %s19, 1
    %p199 = por %p197, %p198
    %p201 = scmp.ne.s32.totalorder %s184, %s200
    %p202 = scmp.eq.s32.totalorder %s19, 0
    %p203 = por %p201, %p202
    %p204 = scmp.le.s32.totalorder 1, %s13
    %p205 = scmp.lt.s32.totalorder %s13, 3
    %p206 = pnand %p204, %p205
    %p207 = pneg %p206
    // Predicated region
    $region9: #{dhcf_forward.15} parent=5 // pred_check
      _
    $region10: #{dhcf_forward.15} parent=5 // pred_check_branch
      %209 = sbr.rel (%p206) target = $region12
    $region11: #{dhcf_forward.15} parent=5 // pred_region
      %s210 = ssub.s32 %s13, 1
      // Predicated region
      $region13: #{dhcf_forward.15} parent=11 // pred_check
        %p211 = pneg %p60
      $region14: #{dhcf_forward.15} parent=11 // pred_check_branch
        %213 = sbr.rel (%p211) target = $region16
      $region15: #{dhcf_forward.15} parent=11 // pred_region
        _
      $region16: #{dhcf_forward.15} parent=11 // pred_fallthru
        _
      // Predicated region
      $region17: #{dhcf_forward.15} parent=11 // pred_check
        %p214 = pneg %p107
      $region18: #{dhcf_forward.15} parent=11 // pred_check_branch
        %216 = sbr.rel (%p214) target = $region20
      $region19: #{dhcf_forward.15} parent=11 // pred_region
        _
      $region20: #{dhcf_forward.15} parent=11 // pred_fallthru
        _
      // Predicated region
      $region21: #{dhcf_forward.15} parent=11 // pred_check
        %p217 = pneg %p128
      $region22: #{dhcf_forward.15} parent=11 // pred_check_branch
        %219 = sbr.rel (%p217) target = $region24
      $region23: #{dhcf_forward.15} parent=11 // pred_region
        _
      $region24: #{dhcf_forward.15} parent=11 // pred_fallthru
        _
      // Predicated region
      $region25: #{dhcf_forward.15} parent=11 // pred_check
        %p220 = pneg %p149
      $region26: #{dhcf_forward.15} parent=11 // pred_check_branch
        %222 = sbr.rel (%p220) target = $region28
      $region27: #{dhcf_forward.15} parent=11 // pred_region
        _
      $region28: #{dhcf_forward.15} parent=11 // pred_fallthru
        _
      // Predicated region
      $region29: #{dhcf_forward.15} parent=11 // pred_check
        %p223 = pneg %p170
      $region30: #{dhcf_forward.15} parent=11 // pred_check_branch
        %225 = sbr.rel (%p223) target = $region32
      $region31: #{dhcf_forward.15} parent=11 // pred_region
        _
      $region32: #{dhcf_forward.15} parent=11 // pred_fallthru
        _
    $region12: #{dhcf_forward.15} parent=5 // pred_fallthru
      _
    %p226 = scmp.lt.s32.totalorder %s13, 2
    // Predicated region
    $region33: #{dhcf_forward.15} parent=5 // pred_check
      %p227 = pneg %p226
    $region34: #{dhcf_forward.15} parent=5 // pred_check_branch
      %229 = sbr.rel (%p227) target = $region36
    $region35: #{dhcf_forward.15} parent=5 // pred_region
      // Predicated region
      $region37: #{dhcf_forward.15} parent=35 // pred_check
        %p230 = pneg %p33
      $region38: #{dhcf_forward.15} parent=35 // pred_check_branch
        %232 = sbr.rel (%p230) target = $region40
      $region39: #{dhcf_forward.15} parent=35 // pred_region
        %s233 = smul.u32 8, %s13
        %p234 = scmp.lt.s32.totalorder %s233, 15
        %s235 = scalar_select %p234, %s233, 15
        %s236 = smul.addr %s235, 8
        %s237 = scalar_lea.vmem %s0, %s236
        %s238 = smul.u32 8, %s13
      $region40: #{dhcf_forward.15} parent=35 // pred_fallthru
        _
      // Predicated region
      $region41: #{dhcf_forward.15} parent=35 // pred_check
        %p239 = pneg %p80
      $region42: #{dhcf_forward.15} parent=35 // pred_check_branch
        %241 = sbr.rel (%p239) target = $region44
      $region43: #{dhcf_forward.15} parent=35 // pred_region
        %s242 = smul.u32 8, %s13
        %p243 = scmp.lt.s32.totalorder %s242, 15
        %s244 = scalar_select %p243, %s242, 15
        %s245 = smul.addr %s244, 8
        %s246 = scalar_lea.vmem %s2, %s245
        %s247 = smul.u32 8, %s13
      $region44: #{dhcf_forward.15} parent=35 // pred_fallthru
        _
    $region36: #{dhcf_forward.15} parent=5 // pred_fallthru
      _
    %p248 = scmp.le.s32.totalorder 1, %s13
    %p249 = scmp.lt.s32.totalorder %s13, 3
    %p250 = pnand %p248, %p249
    %p251 = pneg %p250
    // Predicated region
    $region45: #{dhcf_forward.15} parent=5 // pred_check
      _
    $region46: #{dhcf_forward.15} parent=5 // pred_check_branch
      %253 = sbr.rel (%p250) target = $region48
    $region47: #{dhcf_forward.15} parent=5 // pred_region
      %s254 = ssub.s32 %s13, 1
      %s255 = smul.u32 8, %s18
      %p256 = scmp.lt.s32.totalorder %s255, 15
      %s257 = scalar_select %p256, %s255, 15
      %s258 = smul.addr %s257, 8
      %s259 = scalar_lea.vmem %s0, %s258
      %p260 = pneg %p39
      %p261 = pneg %p36
      %p262 = pneg %p60
      %p263 = pneg %p57
      %s264 = smul.u32 8, %s18
      %p265 = scmp.lt.s32.totalorder %s264, 15
      %s266 = scalar_select %p265, %s264, 15
      %s267 = smul.addr %s266, 8
      %s268 = scalar_lea.vmem %s2, %s267
      %p269 = pneg %p86
      %p270 = pneg %p83
      %p271 = pneg %p107
      %p272 = pneg %p104
      %p273 = pneg %p128
      %p274 = pneg %p125
      %p275 = pneg %p149
      %p276 = pneg %p146
      %p277 = pneg %p170
      %p278 = pneg %p167
      %p279 = pneg %p196
      %p280 = pneg %p193
      %s281 = smul.u32 8, %s18
      %p282 = scmp.lt.s32.totalorder %s281, 15
      %s283 = scalar_select %p282, %s281, 15
      %s284 = smul.addr %s283, 8
      %s285 = scalar_lea.vmem %s7, %s284
      %s286 = smul.u32 8, %s18
      %p287 = scmp.lt.s32.totalorder %s286, 15
      %s288 = scalar_select %p287, %s286, 15
      %s289 = smul.addr %s288, 8
      %s290 = scalar_lea.vmem %s0, %s289
      %s291 = smul.u32 8, %s18
      %s292 = smul.u32 8, %s18
      %p293 = scmp.lt.s32.totalorder %s292, 15
      %s294 = scalar_select %p293, %s292, 15
      %s295 = smul.addr %s294, 8
      %s296 = scalar_lea.vmem %s2, %s295
      %s297 = smul.u32 8, %s18
      %s298 = smul.u32 8, %s18
      %p299 = scmp.lt.s32.totalorder %s298, 15
      %s300 = scalar_select %p299, %s298, 15
      %s301 = smul.addr %s300, 8
      %s302 = scalar_lea.vmem %s7, %s301
      %s303 = smul.u32 8, %s18
      %v304 = vld [vmem:[%s290] sm:$0xff]
      %v305 = vld [vmem:[%s290 + $0x8] sm:$0xff]
      %v306 = vld [vmem:[%s290 + $0x10] sm:$0xff]
      %v307 = vld [vmem:[%s290 + $0x18] sm:$0xff]
      %v308 = vld [vmem:[%s290 + $0x20] sm:$0xff]
      %v309 = vld [vmem:[%s290 + $0x28] sm:$0xff]
      %v310 = vld [vmem:[%s290 + $0x30] sm:$0xff]
      %v311 = vld [vmem:[%s290 + $0x38] sm:$0xff]
      %v312 = vld [vmem:[%s1] sm:$0xff]
      %v313 = vld [vmem:[%s1 + $0x8] sm:$0xff]
      %v314 = vld [vmem:[%s1 + $0x10] sm:$0xff]
      %v315 = vld [vmem:[%s1 + $0x18] sm:$0xff]
      %v316 = vld [vmem:[%s1 + $0x20] sm:$0xff]
      %v317 = vld [vmem:[%s1 + $0x28] sm:$0xff]
      %v318 = vld [vmem:[%s1 + $0x30] sm:$0xff]
      %v319 = vld [vmem:[%s1 + $0x38] sm:$0xff]
      %v320 = vld [vmem:[%s1 + $0x40] sm:$0xff]
      %v321 = vld [vmem:[%s1 + $0x48] sm:$0xff]
      %v322 = vld [vmem:[%s1 + $0x50] sm:$0xff]
      %v323 = vld [vmem:[%s1 + $0x58] sm:$0xff]
      %vm324 = vcmask 785408
      %v326 = vsel %vm324, %v304, 0
      %v329 = vsel %vm324, %v305, 0
      %v332 = vsel %vm324, %v306, 0
      %v335 = vsel %vm324, %v307, 0
      %v338 = vsel %vm324, %v308, 0
      %v341 = vsel %vm324, %v309, 0
      %v344 = vsel %vm324, %v310, 0
      %v347 = vsel %vm324, %v311, 0
      %349 = vmatprep.subr.mxu0 0.0
      %350 = vmatpush1.msra.mxu0 %v312
      %351 = vmatprep.subr.mxu0 0.0
      %352 = vmatpush1.msra.mxu0 %v313
      %353 = vmatprep.subr.mxu0 0.0
      %354 = vmatpush1.msra.mxu0 %v314
      %355 = vmatprep.subr.mxu0 0.0
      %356 = vmatpush1.msra.mxu0 %v315
      %357 = vmatprep.subr.mxu0 0.0
      %358 = vmatpush1.msra.mxu0 %v316
      %359 = vmatprep.subr.mxu0 0.0
      %360 = vmatpush1.msra.mxu0 %v317
      %361 = vmatprep.subr.mxu0 0.0
      %362 = vmatpush1.msra.mxu0 %v318
      %363 = vmatprep.subr.mxu0 0.0
      %364 = vmatpush1.msra.mxu0 %v319
      %365 = vmatprep.subr.mxu0 0.0
      %366 = vmatpush1.msra.mxu0 %v320
      %367 = vmatprep.subr.mxu0 0.0
      %368 = vmatpush1.msra.mxu0 %v321
      %369 = vmatprep.subr.mxu0 0.0
      %370 = vmatpush1.msra.mxu0 %v322
      %371 = vmatprep.subr.mxu0 0.0
      %372 = vmatpush1.msra.mxu0 %v323
      %373 = vmatprep.subr.mxu0 0.0
      %374 = vmatpush1.msra.mxu0 0.0
      %375 = vmatprep.subr.mxu0 0.0
      %376 = vmatpush1.msra.mxu0 0.0
      %377 = vmatprep.subr.mxu0 0.0
      %378 = vmatpush1.msra.mxu0 0.0
      %379 = vmatprep.subr.mxu0 0.0
      %380 = vmatpush1.msra.mxu0 0.0
      %381 = vmatprep.subr.mxu0 0.0
      %382 = vmatpush1.msra.mxu0 0.0
      %383 = vmatprep.subr.mxu0 0.0
      %384 = vmatpush1.msra.mxu0 0.0
      %385 = vmatprep.subr.mxu0 0.0
      %386 = vmatpush1.msra.mxu0 0.0
      %387 = vmatprep.subr.mxu0 0.0
      %388 = vmatpush1.msra.mxu0 0.0
      %389 = vmatprep.subr.mxu0 0.0
      %390 = vmatpush1.msra.mxu0 0.0
      %391 = vmatprep.subr.mxu0 0.0
      %392 = vmatpush1.msra.mxu0 0.0
      %393 = vmatprep.subr.mxu0 0.0
      %394 = vmatpush1.msra.mxu0 0.0
      %395 = vmatprep.subr.mxu0 0.0
      %396 = vmatpush1.msra.mxu0 0.0
      %397 = vmatprep.subr.mxu0 0.0
      %398 = vmatpush1.msra.mxu0 0.0
      %399 = vmatprep.subr.mxu0 0.0
      %400 = vmatpush1.msra.mxu0 0.0
      %401 = vmatprep.subr.mxu0 0.0
      %402 = vmatpush1.msra.mxu0 0.0
      %403 = vmatprep.subr.mxu0 0.0
      %404 = vmatpush1.msra.mxu0 0.0
      %405 = vmatprep.subr.mxu0 0.0
      %406 = vmatpush1.msra.mxu0 0.0
      %407 = vmatprep.subr.mxu0 0.0
      %408 = vmatpush1.msra.mxu0 0.0
      %409 = vmatprep.subr.mxu0 0.0
      %410 = vmatpush1.msra.mxu0 0.0
      %411 = vmatprep.subr.mxu0 0.0
      %412 = vmatpush1.msra.mxu0 0.0
      %413 = vmatprep.mubr.f32.mxu0 0.0
      %414 = vmatmul.mubr.f32.gmra.mrb[0].mxu0 %v326
      %v415 = vpop.f32.mrb[0].mxu0
      %v416 = vadd.f32 0.0, %v415
      %v417 = vpop.f32.mrb[0].mxu0
      %418 = vmatprep.mubr.f32.mxu0 0.0
      %419 = vmatmul.mubr.f32.gmra.mrb[0].mxu0 %v329
      %v420 = vpop.f32.mrb[0].mxu0
      %v421 = vadd.f32 0.0, %v420
      %v422 = vpop.f32.mrb[0].mxu0
      %423 = vmatprep.mubr.f32.mxu0 0.0
      %424 = vmatmul.mubr.f32.gmra.mrb[0].mxu0 %v332
      %v425 = vpop.f32.mrb[0].mxu0
      %v426 = vadd.f32 0.0, %v425
      %v427 = vpop.f32.mrb[0].mxu0
      %428 = vmatprep.mubr.f32.mxu0 0.0
      %429 = vmatmul.mubr.f32.gmra.mrb[0].mxu0 %v335
      %v430 = vpop.f32.mrb[0].mxu0
      %v431 = vadd.f32 0.0, %v430
      %v432 = vpop.f32.mrb[0].mxu0
      %433 = vmatprep.mubr.f32.mxu0 0.0
      %434 = vmatmul.mubr.f32.gmra.mrb[0].mxu0 %v338
      %v435 = vpop.f32.mrb[0].mxu0
      %v436 = vadd.f32 0.0, %v435
      %v437 = vpop.f32.mrb[0].mxu0
      %438 = vmatprep.mubr.f32.mxu0 0.0
      %439 = vmatmul.mubr.f32.gmra.mrb[0].mxu0 %v341
      %v440 = vpop.f32.mrb[0].mxu0
      %v441 = vadd.f32 0.0, %v440
      %v442 = vpop.f32.mrb[0].mxu0
      %443 = vmatprep.mubr.f32.mxu0 0.0
      %444 = vmatmul.mubr.f32.gmra.mrb[0].mxu0 %v344
      %v445 = vpop.f32.mrb[0].mxu0
      %v446 = vadd.f32 0.0, %v445
      %v447 = vpop.f32.mrb[0].mxu0
      %448 = vmatprep.mubr.f32.mxu0 0.0
      %449 = vmatmul.mubr.f32.gmra.mrb[0].mxu0 %v347
      %v450 = vpop.f32.mrb[0].mxu0
      %v451 = vadd.f32 0.0, %v450
      %v452 = vpop.f32.mrb[0].mxu0
      %453 = vdwg.mxu0
      %v454 = vld [vmem:[%s3] sm:$0xff]
      %v455 = vld [vmem:[%s3 + $0x8] sm:$0xff]
      %v456 = vld [vmem:[%s3 + $0x10] sm:$0xff]
      %v457 = vld [vmem:[%s3 + $0x18] sm:$0xff]
      %v458 = vld [vmem:[%s4] sm:$0x1]
      %v460 = vlaneseq
      %v461 = vshrl.u32 %v460, 7
      %v462 = vsub.s32 0, %v461
      %v463 = vrot.slane %v458, %v462
      %vm465 = vcmask 261120
      %v467 = vsel %vm465, %v416, 0
      %v470 = vsel %vm465, %v421, 0
      %v473 = vsel %vm465, %v426, 0
      %v476 = vsel %vm465, %v431, 0
      %v479 = vsel %vm465, %v436, 0
      %v482 = vsel %vm465, %v441, 0
      %v485 = vsel %vm465, %v446, 0
      %v488 = vsel %vm465, %v451, 0
      %490 = vmatprep.subr.mxu0 0.0
      %491 = vmatpush1.msra.mxu0 %v454
      %492 = vmatprep.subr.mxu0 0.0
      %493 = vmatpush1.msra.mxu0 %v455
      %494 = vmatprep.subr.mxu0 0.0
      %495 = vmatpush1.msra.mxu0 %v456
      %496 = vmatprep.subr.mxu0 0.0
      %497 = vmatpush1.msra.mxu0 %v457
      %498 = vmatprep.subr.mxu0 0.0
      %499 = vmatpush1.msra.mxu0 0.0
      %500 = vmatprep.subr.mxu0 0.0
      %501 = vmatpush1.msra.mxu0 0.0
      %502 = vmatprep.subr.mxu0 0.0
      %503 = vmatpush1.msra.mxu0 0.0
      %504 = vmatprep.subr.mxu0 0.0
      %505 = vmatpush1.msra.mxu0 0.0
      %506 = vmatprep.subr.mxu0 0.0
      %507 = vmatpush1.msra.mxu0 0.0
      %508 = vmatprep.subr.mxu0 0.0
      %509 = vmatpush1.msra.mxu0 0.0
      %510 = vmatprep.subr.mxu0 0.0
      %511 = vmatpush1.msra.mxu0 0.0
      %512 = vmatprep.subr.mxu0 0.0
      %513 = vmatpush1.msra.mxu0 0.0
      %514 = vmatprep.subr.mxu0 0.0
      %515 = vmatpush1.msra.mxu0 0.0
      %516 = vmatprep.subr.mxu0 0.0
      %517 = vmatpush1.msra.mxu0 0.0
      %518 = vmatprep.subr.mxu0 0.0
      %519 = vmatpush1.msra.mxu0 0.0
      %520 = vmatprep.subr.mxu0 0.0
      %521 = vmatpush1.msra.mxu0 0.0
      %522 = vmatprep.subr.mxu0 0.0
      %523 = vmatpush1.msra.mxu0 0.0
      %524 = vmatprep.subr.mxu0 0.0
      %525 = vmatpush1.msra.mxu0 0.0
      %526 = vmatprep.subr.mxu0 0.0
      %527 = vmatpush1.msra.mxu0 0.0
      %528 = vmatprep.subr.mxu0 0.0
      %529 = vmatpush1.msra.mxu0 0.0
      %530 = vmatprep.subr.mxu0 0.0
      %531 = vmatpush1.msra.mxu0 0.0
      %532 = vmatprep.subr.mxu0 0.0
      %533 = vmatpush1.msra.mxu0 0.0
      %534 = vmatprep.subr.mxu0 0.0
      %535 = vmatpush1.msra.mxu0 0.0
      %536 = vmatprep.subr.mxu0 0.0
      %537 = vmatpush1.msra.mxu0 0.0
      %538 = vmatprep.subr.mxu0 0.0
      %539 = vmatpush1.msra.mxu0 0.0
      %540 = vmatprep.subr.mxu0 0.0
      %541 = vmatpush1.msra.mxu0 0.0
      %542 = vmatprep.subr.mxu0 0.0
      %543 = vmatpush1.msra.mxu0 0.0
      %544 = vmatprep.subr.mxu0 0.0
      %545 = vmatpush1.msra.mxu0 0.0
      %546 = vmatprep.subr.mxu0 0.0
      %547 = vmatpush1.msra.mxu0 0.0
      %548 = vmatprep.subr.mxu0 0.0
      %549 = vmatpush1.msra.mxu0 0.0
      %550 = vmatprep.subr.mxu0 0.0
      %551 = vmatpush1.msra.mxu0 0.0
      %552 = vmatprep.subr.mxu0 0.0
      %553 = vmatpush1.msra.mxu0 0.0
      %554 = vmatprep.mubr.f32.mxu0 0.0
      %555 = vmatmul.mubr.f32.gmra.mrb[0].mxu0 %v467
      %v556 = vpop.f32.mrb[0].mxu0
      %v557 = vadd.f32 %v463, %v556
      %v558 = vpop.f32.mrb[0].mxu0
      %559 = vmatprep.mubr.f32.mxu0 0.0
      %560 = vmatmul.mubr.f32.gmra.mrb[0].mxu0 %v470
      %v561 = vpop.f32.mrb[0].mxu0
      %v562 = vadd.f32 %v463, %v561
      %v563 = vpop.f32.mrb[0].mxu0
      %564 = vmatprep.mubr.f32.mxu0 0.0
      %565 = vmatmul.mubr.f32.gmra.mrb[0].mxu0 %v473
      %v566 = vpop.f32.mrb[0].mxu0
      %v567 = vadd.f32 %v463, %v566
      %v568 = vpop.f32.mrb[0].mxu0
      %569 = vmatprep.mubr.f32.mxu0 0.0
      %570 = vmatmul.mubr.f32.gmra.mrb[0].mxu0 %v476
      %v571 = vpop.f32.mrb[0].mxu0
      %v572 = vadd.f32 %v463, %v571
      %v573 = vpop.f32.mrb[0].mxu0
      %574 = vmatprep.mubr.f32.mxu0 0.0
      %575 = vmatmul.mubr.f32.gmra.mrb[0].mxu0 %v479
      %v576 = vpop.f32.mrb[0].mxu0
      %v577 = vadd.f32 %v463, %v576
      %v578 = vpop.f32.mrb[0].mxu0
      %579 = vmatprep.mubr.f32.mxu0 0.0
      %580 = vmatmul.mubr.f32.gmra.mrb[0].mxu0 %v482
      %v581 = vpop.f32.mrb[0].mxu0
      %v582 = vadd.f32 %v463, %v581
      %v583 = vpop.f32.mrb[0].mxu0
      %584 = vmatprep.mubr.f32.mxu0 0.0
      %585 = vmatmul.mubr.f32.gmra.mrb[0].mxu0 %v485
      %v586 = vpop.f32.mrb[0].mxu0
      %v587 = vadd.f32 %v463, %v586
      %v588 = vpop.f32.mrb[0].mxu0
      %589 = vmatprep.mubr.f32.mxu0 0.0
      %590 = vmatmul.mubr.f32.gmra.mrb[0].mxu0 %v488
      %v591 = vpop.f32.mrb[0].mxu0
      %v592 = vadd.f32 %v463, %v591
      %v593 = vpop.f32.mrb[0].mxu0
      %594 = vdwg.mxu0
      %v595 = vld [vmem:[%s296] sm:$0xff]
      %v596 = vld [vmem:[%s296 + $0x8] sm:$0xff]
      %v597 = vld [vmem:[%s296 + $0x10] sm:$0xff]
      %v598 = vld [vmem:[%s296 + $0x18] sm:$0xff]
      %v599 = vld [vmem:[%s296 + $0x20] sm:$0xff]
      %v600 = vld [vmem:[%s296 + $0x28] sm:$0xff]
      %v601 = vld [vmem:[%s296 + $0x30] sm:$0xff]
      %v602 = vld [vmem:[%s296 + $0x38] sm:$0xff]
      %v603 = vadd.f32 %v557, %v595
      %v604 = vadd.f32 %v562, %v596
      %v605 = vadd.f32 %v567, %v597
      %v606 = vadd.f32 %v572, %v598
      %v607 = vadd.f32 %v577, %v599
      %v608 = vadd.f32 %v582, %v600
      %v609 = vadd.f32 %v587, %v601
      %v610 = vadd.f32 %v592, %v602
      %v611 = vmax.f32 %v603, 0.0
      %v612 = vmax.f32 %v604, 0.0
      %v613 = vmax.f32 %v605, 0.0
      %v614 = vmax.f32 %v606, 0.0
      %v615 = vmax.f32 %v607, 0.0
      %v616 = vmax.f32 %v608, 0.0
      %v617 = vmax.f32 %v609, 0.0
      %v618 = vmax.f32 %v610, 0.0
      %v619 = vld [vmem:[%s5] sm:$0xff]
      %v620 = vld [vmem:[%s5 + $0x8] sm:$0xff]
      %v621 = vld [vmem:[%s5 + $0x10] sm:$0xff]
      %v622 = vld [vmem:[%s5 + $0x18] sm:$0xff]
      %v623 = vld [vmem:[%s6] sm:$0x1]
      %v625 = vlaneseq
      %v626 = vshrl.u32 %v625, 7
      %v627 = vsub.s32 0, %v626
      %v628 = vrot.slane %v623, %v627
      %v631 = vsel %vm465, %v611, 0
      %v634 = vsel %vm465, %v612, 0
      %v637 = vsel %vm465, %v613, 0
      %v640 = vsel %vm465, %v614, 0
      %v643 = vsel %vm465, %v615, 0
      %v646 = vsel %vm465, %v616, 0
      %v649 = vsel %vm465, %v617, 0
      %v652 = vsel %vm465, %v618, 0
      %654 = vmatprep.subr.mxu0 0.0
      %655 = vmatpush1.msra.mxu0 %v619
      %656 = vmatprep.subr.mxu0 0.0
      %657 = vmatpush1.msra.mxu0 %v620
      %658 = vmatprep.subr.mxu0 0.0
      %659 = vmatpush1.msra.mxu0 %v621
      %660 = vmatprep.subr.mxu0 0.0
      %661 = vmatpush1.msra.mxu0 %v622
      %662 = vmatprep.subr.mxu0 0.0
      %663 = vmatpush1.msra.mxu0 0.0
      %664 = vmatprep.subr.mxu0 0.0
      %665 = vmatpush1.msra.mxu0 0.0
      %666 = vmatprep.subr.mxu0 0.0
      %667 = vmatpush1.msra.mxu0 0.0
      %668 = vmatprep.subr.mxu0 0.0
      %669 = vmatpush1.msra.mxu0 0.0
      %670 = vmatprep.subr.mxu0 0.0
      %671 = vmatpush1.msra.mxu0 0.0
      %672 = vmatprep.subr.mxu0 0.0
      %673 = vmatpush1.msra.mxu0 0.0
      %674 = vmatprep.subr.mxu0 0.0
      %675 = vmatpush1.msra.mxu0 0.0
      %676 = vmatprep.subr.mxu0 0.0
      %677 = vmatpush1.msra.mxu0 0.0
      %678 = vmatprep.subr.mxu0 0.0
      %679 = vmatpush1.msra.mxu0 0.0
      %680 = vmatprep.subr.mxu0 0.0
      %681 = vmatpush1.msra.mxu0 0.0
      %682 = vmatprep.subr.mxu0 0.0
      %683 = vmatpush1.msra.mxu0 0.0
      %684 = vmatprep.subr.mxu0 0.0
      %685 = vmatpush1.msra.mxu0 0.0
      %686 = vmatprep.subr.mxu0 0.0
      %687 = vmatpush1.msra.mxu0 0.0
      %688 = vmatprep.subr.mxu0 0.0
      %689 = vmatpush1.msra.mxu0 0.0
      %690 = vmatprep.subr.mxu0 0.0
      %691 = vmatpush1.msra.mxu0 0.0
      %692 = vmatprep.subr.mxu0 0.0
      %693 = vmatpush1.msra.mxu0 0.0
      %694 = vmatprep.subr.mxu0 0.0
      %695 = vmatpush1.msra.mxu0 0.0
      %696 = vmatprep.subr.mxu0 0.0
      %697 = vmatpush1.msra.mxu0 0.0
      %698 = vmatprep.subr.mxu0 0.0
      %699 = vmatpush1.msra.mxu0 0.0
      %700 = vmatprep.subr.mxu0 0.0
      %701 = vmatpush1.msra.mxu0 0.0
      %702 = vmatprep.subr.mxu0 0.0
      %703 = vmatpush1.msra.mxu0 0.0
      %704 = vmatprep.subr.mxu0 0.0
      %705 = vmatpush1.msra.mxu0 0.0
      %706 = vmatprep.subr.mxu0 0.0
      %707 = vmatpush1.msra.mxu0 0.0
      %708 = vmatprep.subr.mxu0 0.0
      %709 = vmatpush1.msra.mxu0 0.0
      %710 = vmatprep.subr.mxu0 0.0
      %711 = vmatpush1.msra.mxu0 0.0
      %712 = vmatprep.subr.mxu0 0.0
      %713 = vmatpush1.msra.mxu0 0.0
      %714 = vmatprep.subr.mxu0 0.0
      %715 = vmatpush1.msra.mxu0 0.0
      %716 = vmatprep.subr.mxu0 0.0
      %717 = vmatpush1.msra.mxu0 0.0
      %718 = vmatprep.mubr.f32.mxu0 0.0
      %719 = vmatmul.mubr.f32.gmra.mrb[0].mxu0 %v631
      %v720 = vpop.f32.mrb[0].mxu0
      %v721 = vadd.f32 %v628, %v720
      %v722 = vpop.f32.mrb[0].mxu0
      %723 = vmatprep.mubr.f32.mxu0 0.0
      %724 = vmatmul.mubr.f32.gmra.mrb[0].mxu0 %v634
      %v725 = vpop.f32.mrb[0].mxu0
      %v726 = vadd.f32 %v628, %v725
      %v727 = vpop.f32.mrb[0].mxu0
      %728 = vmatprep.mubr.f32.mxu0 0.0
      %729 = vmatmul.mubr.f32.gmra.mrb[0].mxu0 %v637
      %v730 = vpop.f32.mrb[0].mxu0
      %v731 = vadd.f32 %v628, %v730
      %v732 = vpop.f32.mrb[0].mxu0
      %733 = vmatprep.mubr.f32.mxu0 0.0
      %734 = vmatmul.mubr.f32.gmra.mrb[0].mxu0 %v640
      %v735 = vpop.f32.mrb[0].mxu0
      %v736 = vadd.f32 %v628, %v735
      %v737 = vpop.f32.mrb[0].mxu0
      %738 = vmatprep.mubr.f32.mxu0 0.0
      %739 = vmatmul.mubr.f32.gmra.mrb[0].mxu0 %v643
      %v740 = vpop.f32.mrb[0].mxu0
      %v741 = vadd.f32 %v628, %v740
      %v742 = vpop.f32.mrb[0].mxu0
      %743 = vmatprep.mubr.f32.mxu0 0.0
      %744 = vmatmul.mubr.f32.gmra.mrb[0].mxu0 %v646
      %v745 = vpop.f32.mrb[0].mxu0
      %v746 = vadd.f32 %v628, %v745
      %v747 = vpop.f32.mrb[0].mxu0
      %748 = vmatprep.mubr.f32.mxu0 0.0
      %749 = vmatmul.mubr.f32.gmra.mrb[0].mxu0 %v649
      %v750 = vpop.f32.mrb[0].mxu0
      %v751 = vadd.f32 %v628, %v750
      %v752 = vpop.f32.mrb[0].mxu0
      %753 = vmatprep.mubr.f32.mxu0 0.0
      %754 = vmatmul.mubr.f32.gmra.mrb[0].mxu0 %v652
      %v755 = vpop.f32.mrb[0].mxu0
      %v756 = vadd.f32 %v628, %v755
      %v757 = vpop.f32.mrb[0].mxu0
      %758 = vdwg.mxu0
      %vm759 = vcmask 130048
      %760 = vst.msk [vmem:[%s302] sm:$0xff] %vm759, %v721
      %761 = vst.msk [vmem:[%s302 + $0x8] sm:$0xff] %vm759, %v726
      %762 = vst.msk [vmem:[%s302 + $0x10] sm:$0xff] %vm759, %v731
      %763 = vst.msk [vmem:[%s302 + $0x18] sm:$0xff] %vm759, %v736
      %764 = vst.msk [vmem:[%s302 + $0x20] sm:$0xff] %vm759, %v741
      %765 = vst.msk [vmem:[%s302 + $0x28] sm:$0xff] %vm759, %v746
      %766 = vst.msk [vmem:[%s302 + $0x30] sm:$0xff] %vm759, %v751
      %767 = vst.msk [vmem:[%s302 + $0x38] sm:$0xff] %vm759, %v756
      %s768 = smul.u32 8, %s18
      %p769 = scmp.lt.s32.totalorder %s768, 15
      %s770 = scalar_select %p769, %s768, 15
      %s771 = smul.addr %s770, 8
      %s772 = scalar_lea.vmem %s7, %s771
      // Predicated region
      $region49: #{dhcf_forward.15} parent=47 // pred_check
        %p773 = pneg %p193
      $region50: #{dhcf_forward.15} parent=47 // pred_check_branch
        %775 = sbr.rel (%p773) target = $region52
      $region51: #{dhcf_forward.15} parent=47 // pred_region
        %s776 = smul.u32 8, %s18
      $region52: #{dhcf_forward.15} parent=47 // pred_fallthru
        _
    $region48: #{dhcf_forward.15} parent=5 // pred_fallthru
      _
    %p777 = scmp.le.s32.totalorder 2, %s13
    // Predicated region
    $region53: #{dhcf_forward.15} parent=5 // pred_check
      %p778 = pneg %p777
    $region54: #{dhcf_forward.15} parent=5 // pred_check_branch
      %780 = sbr.rel (%p778) target = $region56
    $region55: #{dhcf_forward.15} parent=5 // pred_region
      %s781 = ssub.s32 %s13, 2
      // Predicated region
      $region57: #{dhcf_forward.15} parent=55 // pred_check
        %p782 = pneg %p199
      $region58: #{dhcf_forward.15} parent=55 // pred_check_branch
        %784 = sbr.rel (%p782) target = $region60
      $region59: #{dhcf_forward.15} parent=55 // pred_region
        %s785 = smul.u32 8, %s19
        %p786 = scmp.lt.s32.totalorder %s785, 15
        %s787 = scalar_select %p786, %s785, 15
        %s788 = smul.addr %s787, 8
        %s789 = scalar_lea.vmem %s7, %s788
      $region60: #{dhcf_forward.15} parent=55 // pred_fallthru
        _
    $region56: #{dhcf_forward.15} parent=5 // pred_fallthru
      _
  $region6: #{dhcf_forward.15} parent=0 // loop_footer
    %s17 = sadd.s32 1, %s13
  $region7: #{dhcf_forward.15} parent=0 // loop_footer_branch
    %12 = sbr.rel target = $region3
  $region8: #{dhcf_forward.15} parent=0 // loop_exit
    _

// kernel: dhcf_forward.8
$region0: #{dhcf_forward.8}
  #allocation0 [shape = 'u32[]', space=smem, size = 0x4, offset = 0x4, fixed_abs, tag = 'smem constant byte address 0x4 - core index']
  #allocation1 [shape = 'u32[144,128]{1,0:T(1,128)}', space=vmem, size = 0x12000, scoped, tag = 'internal scratch']
  %s0 = inlined_call_operand.vmem [shape: f32[128,64], index: 0, kind: input, shape index: {}]
  %s1 = inlined_call_operand.vmem [shape: f32[128,32], index: 1, kind: input, shape index: {}]
  %s2 = inlined_call_operand.vmem [shape: f32[64,32], index: 2, kind: output, shape index: {}]
  %s3 = sld [smem:[#allocation0]]
  $region45: #{dhcf_forward.8} parent=0
    _
  %s5 = ssub.s32 1, %s3
  %s6 = scalar_select 0, %s5, %s3
  loop: start=0, step=1, limit=4
  $region2: #{dhcf_forward.8} parent=0 // loop_pre_header
    _
  $region3: #{dhcf_forward.8} parent=0 // loop_header
    %s8 = sphi 0, %s12
    %p9 = scmp.ge.s32.totalorder %s8, 4
    %s18 = sphi 0, %s20
    %s21 = sphi 0, %s18
    %s22 = sphi 0, %s21
    %s38 = sphi 0, %s22
    %s44 = sphi 0, %s46
    %s47 = sphi 0, %s44
    %s48 = sphi 0, %s47
    %s64 = sphi 0, %s48
    %s68 = sphi 0, %s68
    %s70 = sphi 0, %s68
    %s71 = sphi 0, %s70
    %s85 = sphi 0, %s71
  $region4: #{dhcf_forward.8} parent=0 // loop_header_branch
    %11 = sbr.rel (%p9) target = $region8
  $region5: #{dhcf_forward.8} parent=0 // loop_body
    %s13 = ssub.s32 %s8, 1
    %s14 = ssub.s32 %s8, 2
    %s15 = sadd.s32 %s8, 1
    %s16 = ssub.s32 %s8, %s15
    %p17 = scmp.eq.s32.totalorder %s16, 0
    %s19 = sadd.s32 %s18, 1
    %s20 = scalar_select %p17, %s18, %s19
    %p23 = pneg %p17
    %p24 = scmp.eq.s32.totalorder %s8, 1
    %p25 = por %p23, %p24
    %p26 = scmp.ne.s32.totalorder %s18, %s21
    %p27 = scmp.eq.s32.totalorder %s8, 0
    %p28 = por %p26, %p27
    %p29 = scmp.ne.s32.totalorder %s18, %s21
    %p30 = scmp.eq.s32.totalorder %s13, 1
    %p31 = por %p29, %p30
    %p32 = scmp.ne.s32.totalorder %s21, %s22
    %p33 = scmp.eq.s32.totalorder %s13, 0
    %p34 = por %p32, %p33
    %p35 = scmp.ne.s32.totalorder %s21, %s22
    %p36 = scmp.eq.s32.totalorder %s14, 1
    %p37 = por %p35, %p36
    %p39 = scmp.ne.s32.totalorder %s22, %s38
    %p40 = scmp.eq.s32.totalorder %s14, 0
    %p41 = por %p39, %p40
    %s42 = ssub.s32 %s8, %s15
    %p43 = scmp.eq.s32.totalorder %s42, 0
    %s45 = sadd.s32 %s44, 1
    %s46 = scalar_select %p43, %s44, %s45
    %p49 = pneg %p43
    %p50 = scmp.eq.s32.totalorder %s8, 1
    %p51 = por %p49, %p50
    %p52 = scmp.ne.s32.totalorder %s44, %s47
    %p53 = scmp.eq.s32.totalorder %s8, 0
    %p54 = por %p52, %p53
    %p55 = scmp.ne.s32.totalorder %s44, %s47
    %p56 = scmp.eq.s32.totalorder %s13, 1
    %p57 = por %p55, %p56
    %p58 = scmp.ne.s32.totalorder %s47, %s48
    %p59 = scmp.eq.s32.totalorder %s13, 0
    %p60 = por %p58, %p59
    %p61 = scmp.ne.s32.totalorder %s47, %s48
    %p62 = scmp.eq.s32.totalorder %s14, 1
    %p63 = por %p61, %p62
    %p65 = scmp.ne.s32.totalorder %s48, %s64
    %p66 = scmp.eq.s32.totalorder %s14, 0
    %p67 = por %p65, %p66
    %s69 = sadd.s32 %s68, 1
    %p72 = scmp.eq.s32.totalorder %s8, 1
    %p73 = scmp.ne.s32.totalorder %s68, %s70
    %p74 = scmp.eq.s32.totalorder %s8, 0
    %p75 = por %p73, %p74
    %p76 = scmp.ne.s32.totalorder %s68, %s70
    %p77 = scmp.eq.s32.totalorder %s13, 1
    %p78 = por %p76, %p77
    %p79 = scmp.ne.s32.totalorder %s70, %s71
    %p80 = scmp.eq.s32.totalorder %s13, 0
    %p81 = por %p79, %p80
    %p82 = scmp.ne.s32.totalorder %s70, %s71
    %p83 = scmp.eq.s32.totalorder %s14, 1
    %p84 = por %p82, %p83
    %p86 = scmp.ne.s32.totalorder %s71, %s85
    %p87 = scmp.eq.s32.totalorder %s14, 0
    %p88 = por %p86, %p87
    %p89 = scmp.le.s32.totalorder 1, %s8
    %p90 = scmp.lt.s32.totalorder %s8, 3
    %p91 = pnand %p89, %p90
    %p92 = pneg %p91
    // Predicated region
    $region9: #{dhcf_forward.8} parent=5 // pred_check
      _
    $region10: #{dhcf_forward.8} parent=5 // pred_check_branch
      %94 = sbr.rel (%p91) target = $region12
    $region11: #{dhcf_forward.8} parent=5 // pred_region
      %s95 = ssub.s32 %s8, 1
    $region12: #{dhcf_forward.8} parent=5 // pred_fallthru
      _
    %p96 = scmp.lt.s32.totalorder %s8, 2
    // Predicated region
    $region13: #{dhcf_forward.8} parent=5 // pred_check
      %p97 = pneg %p96
    $region14: #{dhcf_forward.8} parent=5 // pred_check_branch
      %99 = sbr.rel (%p97) target = $region16
    $region15: #{dhcf_forward.8} parent=5 // pred_region
      // Predicated region
      $region17: #{dhcf_forward.8} parent=15 // pred_check
        %p100 = pneg %p28
      $region18: #{dhcf_forward.8} parent=15 // pred_check_branch
        %102 = sbr.rel (%p100) target = $region20
      $region19: #{dhcf_forward.8} parent=15 // pred_region
        %s103 = smul.u32 8, %s8
        %p104 = scmp.lt.s32.totalorder %s103, 15
        %s105 = scalar_select %p104, %s103, 15
        %s106 = smul.addr %s105, 8
        %s107 = scalar_lea.vmem %s0, %s106
        %s108 = smul.u32 8, %s8
      $region20: #{dhcf_forward.8} parent=15 // pred_fallthru
        _
      // Predicated region
      $region21: #{dhcf_forward.8} parent=15 // pred_check
        %p109 = pneg %p54
      $region22: #{dhcf_forward.8} parent=15 // pred_check_branch
        %111 = sbr.rel (%p109) target = $region24
      $region23: #{dhcf_forward.8} parent=15 // pred_region
        %s112 = smul.u32 8, %s8
        %p113 = scmp.lt.s32.totalorder %s112, 15
        %s114 = scalar_select %p113, %s112, 15
        %s115 = smul.addr %s114, 8
        %s116 = scalar_lea.vmem %s1, %s115
        %s117 = smul.u32 8, %s8
      $region24: #{dhcf_forward.8} parent=15 // pred_fallthru
        _
    $region16: #{dhcf_forward.8} parent=5 // pred_fallthru
      _
    %p118 = scmp.le.s32.totalorder 1, %s8
    %p119 = scmp.lt.s32.totalorder %s8, 3
    %p120 = pnand %p118, %p119
    %p121 = pneg %p120
    // Predicated region
    $region25: #{dhcf_forward.8} parent=5 // pred_check
      _
    $region26: #{dhcf_forward.8} parent=5 // pred_check_branch
      %123 = sbr.rel (%p120) target = $region28
    $region27: #{dhcf_forward.8} parent=5 // pred_region
      %s124 = ssub.s32 %s8, 1
      %s125 = smul.u32 8, %s13
      %p126 = scmp.lt.s32.totalorder %s125, 15
      %s127 = scalar_select %p126, %s125, 15
      %s128 = smul.addr %s127, 8
      %s129 = scalar_lea.vmem %s0, %s128
      %p130 = pneg %p34
      %p131 = pneg %p31
      %s132 = smul.u32 8, %s13
      %p133 = scmp.lt.s32.totalorder %s132, 15
      %s134 = scalar_select %p133, %s132, 15
      %s135 = smul.addr %s134, 8
      %s136 = scalar_lea.vmem %s1, %s135
      %p137 = pneg %p60
      %p138 = pneg %p57
      %p139 = pneg %p81
      %p140 = pneg %p78
      %s141 = smul.u32 8, %s13
      %p142 = scmp.lt.s32.totalorder %s141, 15
      %s143 = scalar_select %p142, %s141, 15
      %s144 = smul.addr %s143, 8
      %s145 = scalar_lea.vmem %s0, %s144
      %s146 = smul.u32 8, %s13
      %s147 = smul.u32 8, %s13
      %p148 = scmp.lt.s32.totalorder %s147, 15
      %s149 = scalar_select %p148, %s147, 15
      %s150 = smul.addr %s149, 8
      %s151 = scalar_lea.vmem %s1, %s150
      %s152 = smul.u32 8, %s13
      %p153 = scmp.eq.s32.totalorder %s13, 0
      // Predicated region
      $region29: #{dhcf_forward.8} parent=27 // pred_check
        %p154 = pneg %p153
      $region30: #{dhcf_forward.8} parent=27 // pred_check_branch
        %156 = sbr.rel (%p154) target = $region32
      $region31: #{dhcf_forward.8} parent=27 // pred_region
        %vm157 = vcmask 261120
        %158 = vst.msk [vmem:[%s2] sm:$0xff] %vm157, 0.0
        %159 = vst.msk [vmem:[%s2 + $0x8] sm:$0xff] %vm157, 0.0
        %160 = vst.msk [vmem:[%s2 + $0x10] sm:$0xff] %vm157, 0.0
        %161 = vst.msk [vmem:[%s2 + $0x18] sm:$0xff] %vm157, 0.0
        %162 = vst.msk [vmem:[%s2 + $0x20] sm:$0xff] %vm157, 0.0
        %163 = vst.msk [vmem:[%s2 + $0x28] sm:$0xff] %vm157, 0.0
        %164 = vst.msk [vmem:[%s2 + $0x30] sm:$0xff] %vm157, 0.0
        %165 = vst.msk [vmem:[%s2 + $0x38] sm:$0xff] %vm157, 0.0
      $region32: #{dhcf_forward.8} parent=27 // pred_fallthru
        _
      %v166 = vld [vmem:[%s2] sm:$0xff]
      %v167 = vld [vmem:[%s2 + $0x8] sm:$0xff]
      %v168 = vld [vmem:[%s2 + $0x10] sm:$0xff]
      %v169 = vld [vmem:[%s2 + $0x18] sm:$0xff]
      %v170 = vld [vmem:[%s2 + $0x20] sm:$0xff]
      %v171 = vld [vmem:[%s2 + $0x28] sm:$0xff]
      %v172 = vld [vmem:[%s2 + $0x30] sm:$0xff]
      %v173 = vld [vmem:[%s2 + $0x38] sm:$0xff]
      %v174 = vld [vmem:[%s145] sm:$0xff]
      %v175 = vld [vmem:[%s145 + $0x8] sm:$0xff]
      %v176 = vld [vmem:[%s145 + $0x10] sm:$0xff]
      %v177 = vld [vmem:[%s145 + $0x18] sm:$0xff]
      %v178 = vld [vmem:[%s145 + $0x20] sm:$0xff]
      %v179 = vld [vmem:[%s145 + $0x28] sm:$0xff]
      %v180 = vld [vmem:[%s145 + $0x30] sm:$0xff]
      %v181 = vld [vmem:[%s145 + $0x38] sm:$0xff]
      %v182 = vld [vmem:[%s151] sm:$0xff]
      %v183 = vld [vmem:[%s151 + $0x8] sm:$0xff]
      %v184 = vld [vmem:[%s151 + $0x10] sm:$0xff]
      %v185 = vld [vmem:[%s151 + $0x18] sm:$0xff]
      %v186 = vld [vmem:[%s151 + $0x20] sm:$0xff]
      %v187 = vld [vmem:[%s151 + $0x28] sm:$0xff]
      %v188 = vld [vmem:[%s151 + $0x30] sm:$0xff]
      %v189 = vld [vmem:[%s151 + $0x38] sm:$0xff]
      %190 = vxpose.xlu0.b32.start [1/16] %v174, 128
      %191 = vxpose.xlu0.b32.cont [2/16] %v175, 128
      %192 = vxpose.xlu0.b32.cont [3/16] %v176, 128
      %193 = vxpose.xlu0.b32.cont [4/16] %v177, 128
      %194 = vxpose.xlu0.b32.cont [5/16] %v178, 128
      %195 = vxpose.xlu0.b32.cont [6/16] %v179, 128
      %196 = vxpose.xlu0.b32.cont [7/16] %v180, 128
      %197 = vxpose.xlu0.b32.cont [8/16] %v181, 128
      %198 = vxpose.xlu0.b32.cont [9/16] 0.0, 128
      %199 = vxpose.xlu0.b32.cont [10/16] 0.0, 128
      %200 = vxpose.xlu0.b32.cont [11/16] 0.0, 128
      %201 = vxpose.xlu0.b32.cont [12/16] 0.0, 128
      %202 = vxpose.xlu0.b32.cont [13/16] 0.0, 128
      %203 = vxpose.xlu0.b32.cont [14/16] 0.0, 128
      %204 = vxpose.xlu0.b32.cont [15/16] 0.0, 128
      %205 = vxpose.xlu0.b32.end [16/16] 0.0, 128
      %v206 = vpop.trf.xlu0
      %v207 = vpop.trf.xlu0
      %v208 = vpop.trf.xlu0
      %v209 = vpop.trf.xlu0
      %v210 = vpop.trf.xlu0
      %v211 = vpop.trf.xlu0
      %v212 = vpop.trf.xlu0
      %v213 = vpop.trf.xlu0
      %v214 = vpop.trf.xlu0
      %v215 = vpop.trf.xlu0
      %v216 = vpop.trf.xlu0
      %v217 = vpop.trf.xlu0
      %v218 = vpop.trf.xlu0
      %v219 = vpop.trf.xlu0
      %v220 = vpop.trf.xlu0
      %v221 = vpop.trf.xlu0
      %vm222 = vcmask 523264
      %v224 = vsel %vm222, %v206, 0
      %v227 = vsel %vm222, %v207, 0
      %v230 = vsel %vm222, %v208, 0
      %v233 = vsel %vm222, %v209, 0
      %v236 = vsel %vm222, %v210, 0
      %v239 = vsel %vm222, %v211, 0
      %v242 = vsel %vm222, %v212, 0
      %v245 = vsel %vm222, %v213, 0
      %247 = vmatprep.subr.mxu0 0.0
      %248 = vmatpush1.msra.mxu0 %v182
      %249 = vmatprep.subr.mxu0 0.0
      %250 = vmatpush1.msra.mxu0 %v183
      %251 = vmatprep.subr.mxu0 0.0
      %252 = vmatpush1.msra.mxu0 %v184
      %253 = vmatprep.subr.mxu0 0.0
      %254 = vmatpush1.msra.mxu0 %v185
      %255 = vmatprep.subr.mxu0 0.0
      %256 = vmatpush1.msra.mxu0 %v186
      %257 = vmatprep.subr.mxu0 0.0
      %258 = vmatpush1.msra.mxu0 %v187
      %259 = vmatprep.subr.mxu0 0.0
      %260 = vmatpush1.msra.mxu0 %v188
      %261 = vmatprep.subr.mxu0 0.0
      %262 = vmatpush1.msra.mxu0 %v189
      %263 = vmatprep.subr.mxu0 0.0
      %264 = vmatpush1.msra.mxu0 0.0
      %265 = vmatprep.subr.mxu0 0.0
      %266 = vmatpush1.msra.mxu0 0.0
      %267 = vmatprep.subr.mxu0 0.0
      %268 = vmatpush1.msra.mxu0 0.0
      %269 = vmatprep.subr.mxu0 0.0
      %270 = vmatpush1.msra.mxu0 0.0
      %271 = vmatprep.subr.mxu0 0.0
      %272 = vmatpush1.msra.mxu0 0.0
      %273 = vmatprep.subr.mxu0 0.0
      %274 = vmatpush1.msra.mxu0 0.0
      %275 = vmatprep.subr.mxu0 0.0
      %276 = vmatpush1.msra.mxu0 0.0
      %277 = vmatprep.subr.mxu0 0.0
      %278 = vmatpush1.msra.mxu0 0.0
      %279 = vmatprep.subr.mxu0 0.0
      %280 = vmatpush1.msra.mxu0 0.0
      %281 = vmatprep.subr.mxu0 0.0
      %282 = vmatpush1.msra.mxu0 0.0
      %283 = vmatprep.subr.mxu0 0.0
      %284 = vmatpush1.msra.mxu0 0.0
      %285 = vmatprep.subr.mxu0 0.0
      %286 = vmatpush1.msra.mxu0 0.0
      %287 = vmatprep.subr.mxu0 0.0
      %288 = vmatpush1.msra.mxu0 0.0
      %289 = vmatprep.subr.mxu0 0.0
      %290 = vmatpush1.msra.mxu0 0.0
      %291 = vmatprep.subr.mxu0 0.0
      %292 = vmatpush1.msra.mxu0 0.0
      %293 = vmatprep.subr.mxu0 0.0
      %294 = vmatpush1.msra.mxu0 0.0
      %295 = vmatprep.subr.mxu0 0.0
      %296 = vmatpush1.msra.mxu0 0.0
      %297 = vmatprep.subr.mxu0 0.0
      %298 = vmatpush1.msra.mxu0 0.0
      %299 = vmatprep.subr.mxu0 0.0
      %300 = vmatpush1.msra.mxu0 0.0
      %301 = vmatprep.subr.mxu0 0.0
      %302 = vmatpush1.msra.mxu0 0.0
      %303 = vmatprep.subr.mxu0 0.0
      %304 = vmatpush1.msra.mxu0 0.0
      %305 = vmatprep.subr.mxu0 0.0
      %306 = vmatpush1.msra.mxu0 0.0
      %307 = vmatprep.subr.mxu0 0.0
      %308 = vmatpush1.msra.mxu0 0.0
      %309 = vmatprep.subr.mxu0 0.0
      %310 = vmatpush1.msra.mxu0 0.0
      %311 = vmatprep.mubr.f32.mxu0 0.0
      %312 = vmatmul.mubr.f32.gmra.mrb[0].mxu0 %v224
      %v313 = vpop.f32.mrb[0].mxu0
      %v314 = vadd.f32 0.0, %v313
      %v315 = vpop.f32.mrb[0].mxu0
      %316 = vmatprep.mubr.f32.mxu0 0.0
      %317 = vmatmul.mubr.f32.gmra.mrb[0].mxu0 %v227
      %v318 = vpop.f32.mrb[0].mxu0
      %v319 = vadd.f32 0.0, %v318
      %v320 = vpop.f32.mrb[0].mxu0
      %321 = vmatprep.mubr.f32.mxu0 0.0
      %322 = vmatmul.mubr.f32.gmra.mrb[0].mxu0 %v230
      %v323 = vpop.f32.mrb[0].mxu0
      %v324 = vadd.f32 0.0, %v323
      %v325 = vpop.f32.mrb[0].mxu0
      %326 = vmatprep.mubr.f32.mxu0 0.0
      %327 = vmatmul.mubr.f32.gmra.mrb[0].mxu0 %v233
      %v328 = vpop.f32.mrb[0].mxu0
      %v329 = vadd.f32 0.0, %v328
      %v330 = vpop.f32.mrb[0].mxu0
      %331 = vmatprep.mubr.f32.mxu0 0.0
      %332 = vmatmul.mubr.f32.gmra.mrb[0].mxu0 %v236
      %v333 = vpop.f32.mrb[0].mxu0
      %v334 = vadd.f32 0.0, %v333
      %v335 = vpop.f32.mrb[0].mxu0
      %336 = vmatprep.mubr.f32.mxu0 0.0
      %337 = vmatmul.mubr.f32.gmra.mrb[0].mxu0 %v239
      %v338 = vpop.f32.mrb[0].mxu0
      %v339 = vadd.f32 0.0, %v338
      %v340 = vpop.f32.mrb[0].mxu0
      %341 = vmatprep.mubr.f32.mxu0 0.0
      %342 = vmatmul.mubr.f32.gmra.mrb[0].mxu0 %v242
      %v343 = vpop.f32.mrb[0].mxu0
      %v344 = vadd.f32 0.0, %v343
      %v345 = vpop.f32.mrb[0].mxu0
      %346 = vmatprep.mubr.f32.mxu0 0.0
      %347 = vmatmul.mubr.f32.gmra.mrb[0].mxu0 %v245
      %v348 = vpop.f32.mrb[0].mxu0
      %v349 = vadd.f32 0.0, %v348
      %v350 = vpop.f32.mrb[0].mxu0
      %351 = vdwg.mxu0
      %v352 = vadd.f32 %v166, %v314
      %v353 = vadd.f32 %v167, %v319
      %v354 = vadd.f32 %v168, %v324
      %v355 = vadd.f32 %v169, %v329
      %v356 = vadd.f32 %v170, %v334
      %v357 = vadd.f32 %v171, %v339
      %v358 = vadd.f32 %v172, %v344
      %v359 = vadd.f32 %v173, %v349
      %vm360 = vcmask 261120
      %361 = vst.msk [vmem:[%s2] sm:$0xff] %vm360, %v352
      %362 = vst.msk [vmem:[%s2 + $0x8] sm:$0xff] %vm360, %v353
      %363 = vst.msk [vmem:[%s2 + $0x10] sm:$0xff] %vm360, %v354
      %364 = vst.msk [vmem:[%s2 + $0x18] sm:$0xff] %vm360, %v355
      %365 = vst.msk [vmem:[%s2 + $0x20] sm:$0xff] %vm360, %v356
      %366 = vst.msk [vmem:[%s2 + $0x28] sm:$0xff] %vm360, %v357
      %367 = vst.msk [vmem:[%s2 + $0x30] sm:$0xff] %vm360, %v358
      %368 = vst.msk [vmem:[%s2 + $0x38] sm:$0xff] %vm360, %v359
      // Predicated region
      $region33: #{dhcf_forward.8} parent=27 // pred_check
        %p369 = pneg %p78
      $region34: #{dhcf_forward.8} parent=27 // pred_check_branch
        %371 = sbr.rel (%p369) target = $region36
      $region35: #{dhcf_forward.8} parent=27 // pred_region
        _
      $region36: #{dhcf_forward.8} parent=27 // pred_fallthru
        _
      // Predicated region
      $region37: #{dhcf_forward.8} parent=27 // pred_check
        %p372 = pneg %p78
      $region38: #{dhcf_forward.8} parent=27 // pred_check_branch
        %374 = sbr.rel (%p372) target = $region40
      $region39: #{dhcf_forward.8} parent=27 // pred_region
        _
      $region40: #{dhcf_forward.8} parent=27 // pred_fallthru
        _
    $region28: #{dhcf_forward.8} parent=5 // pred_fallthru
      _
    %p375 = scmp.le.s32.totalorder 2, %s8
    // Predicated region
    $region41: #{dhcf_forward.8} parent=5 // pred_check
      %p376 = pneg %p375
    $region42: #{dhcf_forward.8} parent=5 // pred_check_branch
      %378 = sbr.rel (%p376) target = $region44
    $region43: #{dhcf_forward.8} parent=5 // pred_region
      %s379 = ssub.s32 %s8, 2
    $region44: #{dhcf_forward.8} parent=5 // pred_fallthru
      _
  $region6: #{dhcf_forward.8} parent=0 // loop_footer
    %s12 = sadd.s32 1, %s8
  $region7: #{dhcf_forward.8} parent=0 // loop_footer_branch
    %7 = sbr.rel target = $region3
  $region8: #{dhcf_forward.8} parent=0 // loop_exit
    _

// kernel: dhcf_forward.9
$region0: #{dhcf_forward.9}
  #allocation0 [shape = 'u32[]', space=smem, size = 0x4, offset = 0x4, fixed_abs, tag = 'smem constant byte address 0x4 - core index']
  #allocation1 [shape = 'u32[144,128]{1,0:T(1,128)}', space=vmem, size = 0x12000, scoped, tag = 'internal scratch']
  %s0 = inlined_call_operand.vmem [shape: f32[128,64], index: 0, kind: input, shape index: {}]
  %s1 = inlined_call_operand.vmem [shape: f32[64,32], index: 1, kind: input, shape index: {}]
  %s2 = inlined_call_operand.vmem [shape: f32[128,32], index: 2, kind: input, shape index: {}]
  %s3 = inlined_call_operand.vmem [shape: f32[32,32], index: 3, kind: input, shape index: {}]
  %s4 = inlined_call_operand.vmem [shape: f32[1,32], index: 4, kind: input, shape index: {}]
  %s5 = inlined_call_operand.vmem [shape: f32[128,32], index: 5, kind: output, shape index: {}]
  %s6 = sld [smem:[#allocation0]]
  $region53: #{dhcf_forward.9} parent=0
    _
  %s8 = ssub.s32 1, %s6
  %s9 = scalar_select 0, %s8, %s6
  loop: start=0, step=1, limit=4
  $region2: #{dhcf_forward.9} parent=0 // loop_pre_header
    _
  $region3: #{dhcf_forward.9} parent=0 // loop_header
    %s11 = sphi 0, %s15
    %p12 = scmp.ge.s32.totalorder %s11, 4
    %s21 = sphi 0, %s23
    %s24 = sphi 0, %s21
    %s25 = sphi 0, %s24
    %s41 = sphi 0, %s25
    %s45 = sphi 0, %s45
    %s47 = sphi 0, %s45
    %s48 = sphi 0, %s47
    %s62 = sphi 0, %s48
    %s68 = sphi 0, %s70
    %s71 = sphi 0, %s68
    %s72 = sphi 0, %s71
    %s88 = sphi 0, %s72
    %s92 = sphi 0, %s92
    %s94 = sphi 0, %s92
    %s95 = sphi 0, %s94
    %s109 = sphi 0, %s95
    %s113 = sphi 0, %s113
    %s115 = sphi 0, %s113
    %s116 = sphi 0, %s115
    %s130 = sphi 0, %s116
    %s136 = sphi 0, %s138
    %s139 = sphi 0, %s136
    %s140 = sphi 0, %s139
    %s156 = sphi 0, %s140
  $region4: #{dhcf_forward.9} parent=0 // loop_header_branch
    %14 = sbr.rel (%p12) target = $region8
  $region5: #{dhcf_forward.9} parent=0 // loop_body
    %s16 = ssub.s32 %s11, 1
    %s17 = ssub.s32 %s11, 2
    %s18 = sadd.s32 %s11, 1
    %s19 = ssub.s32 %s11, %s18
    %p20 = scmp.eq.s32.totalorder %s19, 0
    %s22 = sadd.s32 %s21, 1
    %s23 = scalar_select %p20, %s21, %s22
    %p26 = pneg %p20
    %p27 = scmp.eq.s32.totalorder %s11, 1
    %p28 = por %p26, %p27
    %p29 = scmp.ne.s32.totalorder %s21, %s24
    %p30 = scmp.eq.s32.totalorder %s11, 0
    %p31 = por %p29, %p30
    %p32 = scmp.ne.s32.totalorder %s21, %s24
    %p33 = scmp.eq.s32.totalorder %s16, 1
    %p34 = por %p32, %p33
    %p35 = scmp.ne.s32.totalorder %s24, %s25
    %p36 = scmp.eq.s32.totalorder %s16, 0
    %p37 = por %p35, %p36
    %p38 = scmp.ne.s32.totalorder %s24, %s25
    %p39 = scmp.eq.s32.totalorder %s17, 1
    %p40 = por %p38, %p39
    %p42 = scmp.ne.s32.totalorder %s25, %s41
    %p43 = scmp.eq.s32.totalorder %s17, 0
    %p44 = por %p42, %p43
    %s46 = sadd.s32 %s45, 1
    %p49 = scmp.eq.s32.totalorder %s11, 1
    %p50 = scmp.ne.s32.totalorder %s45, %s47
    %p51 = scmp.eq.s32.totalorder %s11, 0
    %p52 = por %p50, %p51
    %p53 = scmp.ne.s32.totalorder %s45, %s47
    %p54 = scmp.eq.s32.totalorder %s16, 1
    %p55 = por %p53, %p54
    %p56 = scmp.ne.s32.totalorder %s47, %s48
    %p57 = scmp.eq.s32.totalorder %s16, 0
    %p58 = por %p56, %p57
    %p59 = scmp.ne.s32.totalorder %s47, %s48
    %p60 = scmp.eq.s32.totalorder %s17, 1
    %p61 = por %p59, %p60
    %p63 = scmp.ne.s32.totalorder %s48, %s62
    %p64 = scmp.eq.s32.totalorder %s17, 0
    %p65 = por %p63, %p64
    %s66 = ssub.s32 %s11, %s18
    %p67 = scmp.eq.s32.totalorder %s66, 0
    %s69 = sadd.s32 %s68, 1
    %s70 = scalar_select %p67, %s68, %s69
    %p73 = pneg %p67
    %p74 = scmp.eq.s32.totalorder %s11, 1
    %p75 = por %p73, %p74
    %p76 = scmp.ne.s32.totalorder %s68, %s71
    %p77 = scmp.eq.s32.totalorder %s11, 0
    %p78 = por %p76, %p77
    %p79 = scmp.ne.s32.totalorder %s68, %s71
    %p80 = scmp.eq.s32.totalorder %s16, 1
    %p81 = por %p79, %p80
    %p82 = scmp.ne.s32.totalorder %s71, %s72
    %p83 = scmp.eq.s32.totalorder %s16, 0
    %p84 = por %p82, %p83
    %p85 = scmp.ne.s32.totalorder %s71, %s72
    %p86 = scmp.eq.s32.totalorder %s17, 1
    %p87 = por %p85, %p86
    %p89 = scmp.ne.s32.totalorder %s72, %s88
    %p90 = scmp.eq.s32.totalorder %s17, 0
    %p91 = por %p89, %p90
    %s93 = sadd.s32 %s92, 1
    %p96 = scmp.eq.s32.totalorder %s11, 1
    %p97 = scmp.ne.s32.totalorder %s92, %s94
    %p98 = scmp.eq.s32.totalorder %s11, 0
    %p99 = por %p97, %p98
    %p100 = scmp.ne.s32.totalorder %s92, %s94
    %p101 = scmp.eq.s32.totalorder %s16, 1
    %p102 = por %p100, %p101
    %p103 = scmp.ne.s32.totalorder %s94, %s95
    %p104 = scmp.eq.s32.totalorder %s16, 0
    %p105 = por %p103, %p104
    %p106 = scmp.ne.s32.totalorder %s94, %s95
    %p107 = scmp.eq.s32.totalorder %s17, 1
    %p108 = por %p106, %p107
    %p110 = scmp.ne.s32.totalorder %s95, %s109
    %p111 = scmp.eq.s32.totalorder %s17, 0
    %p112 = por %p110, %p111
    %s114 = sadd.s32 %s113, 1
    %p117 = scmp.eq.s32.totalorder %s11, 1
    %p118 = scmp.ne.s32.totalorder %s113, %s115
    %p119 = scmp.eq.s32.totalorder %s11, 0
    %p120 = por %p118, %p119
    %p121 = scmp.ne.s32.totalorder %s113, %s115
    %p122 = scmp.eq.s32.totalorder %s16, 1
    %p123 = por %p121, %p122
    %p124 = scmp.ne.s32.totalorder %s115, %s116
    %p125 = scmp.eq.s32.totalorder %s16, 0
    %p126 = por %p124, %p125
    %p127 = scmp.ne.s32.totalorder %s115, %s116
    %p128 = scmp.eq.s32.totalorder %s17, 1
    %p129 = por %p127, %p128
    %p131 = scmp.ne.s32.totalorder %s116, %s130
    %p132 = scmp.eq.s32.totalorder %s17, 0
    %p133 = por %p131, %p132
    %s134 = ssub.s32 %s11, %s18
    %p135 = scmp.eq.s32.totalorder %s134, 0
    %s137 = sadd.s32 %s136, 1
    %s138 = scalar_select %p135, %s136, %s137
    %p141 = pneg %p135
    %p142 = scmp.eq.s32.totalorder %s11, 1
    %p143 = por %p141, %p142
    %p144 = scmp.ne.s32.totalorder %s136, %s139
    %p145 = scmp.eq.s32.totalorder %s11, 0
    %p146 = por %p144, %p145
    %p147 = scmp.ne.s32.totalorder %s136, %s139
    %p148 = scmp.eq.s32.totalorder %s16, 1
    %p149 = por %p147, %p148
    %p150 = scmp.ne.s32.totalorder %s139, %s140
    %p151 = scmp.eq.s32.totalorder %s16, 0
    %p152 = por %p150, %p151
    %p153 = scmp.ne.s32.totalorder %s139, %s140
    %p154 = scmp.eq.s32.totalorder %s17, 1
    %p155 = por %p153, %p154
    %p157 = scmp.ne.s32.totalorder %s140, %s156
    %p158 = scmp.eq.s32.totalorder %s17, 0
    %p159 = por %p157, %p158
    %p160 = scmp.le.s32.totalorder 1, %s11
    %p161 = scmp.lt.s32.totalorder %s11, 3
    %p162 = pnand %p160, %p161
    %p163 = pneg %p162
    // Predicated region
    $region9: #{dhcf_forward.9} parent=5 // pred_check
      _
    $region10: #{dhcf_forward.9} parent=5 // pred_check_branch
      %165 = sbr.rel (%p162) target = $region12
    $region11: #{dhcf_forward.9} parent=5 // pred_region
      %s166 = ssub.s32 %s11, 1
      // Predicated region
      $region13: #{dhcf_forward.9} parent=11 // pred_check
        %p167 = pneg %p58
      $region14: #{dhcf_forward.9} parent=11 // pred_check_branch
        %169 = sbr.rel (%p167) target = $region16
      $region15: #{dhcf_forward.9} parent=11 // pred_region
        _
      $region16: #{dhcf_forward.9} parent=11 // pred_fallthru
        _
      // Predicated region
      $region17: #{dhcf_forward.9} parent=11 // pred_check
        %p170 = pneg %p105
      $region18: #{dhcf_forward.9} parent=11 // pred_check_branch
        %172 = sbr.rel (%p170) target = $region20
      $region19: #{dhcf_forward.9} parent=11 // pred_region
        _
      $region20: #{dhcf_forward.9} parent=11 // pred_fallthru
        _
      // Predicated region
      $region21: #{dhcf_forward.9} parent=11 // pred_check
        %p173 = pneg %p126
      $region22: #{dhcf_forward.9} parent=11 // pred_check_branch
        %175 = sbr.rel (%p173) target = $region24
      $region23: #{dhcf_forward.9} parent=11 // pred_region
        _
      $region24: #{dhcf_forward.9} parent=11 // pred_fallthru
        _
    $region12: #{dhcf_forward.9} parent=5 // pred_fallthru
      _
    %p176 = scmp.lt.s32.totalorder %s11, 2
    // Predicated region
    $region25: #{dhcf_forward.9} parent=5 // pred_check
      %p177 = pneg %p176
    $region26: #{dhcf_forward.9} parent=5 // pred_check_branch
      %179 = sbr.rel (%p177) target = $region28
    $region27: #{dhcf_forward.9} parent=5 // pred_region
      // Predicated region
      $region29: #{dhcf_forward.9} parent=27 // pred_check
        %p180 = pneg %p31
      $region30: #{dhcf_forward.9} parent=27 // pred_check_branch
        %182 = sbr.rel (%p180) target = $region32
      $region31: #{dhcf_forward.9} parent=27 // pred_region
        %s183 = smul.u32 8, %s11
        %p184 = scmp.lt.s32.totalorder %s183, 15
        %s185 = scalar_select %p184, %s183, 15
        %s186 = smul.addr %s185, 8
        %s187 = scalar_lea.vmem %s0, %s186
        %s188 = smul.u32 8, %s11
      $region32: #{dhcf_forward.9} parent=27 // pred_fallthru
        _
      // Predicated region
      $region33: #{dhcf_forward.9} parent=27 // pred_check
        %p189 = pneg %p78
      $region34: #{dhcf_forward.9} parent=27 // pred_check_branch
        %191 = sbr.rel (%p189) target = $region36
      $region35: #{dhcf_forward.9} parent=27 // pred_region
        %s192 = smul.u32 8, %s11
        %p193 = scmp.lt.s32.totalorder %s192, 15
        %s194 = scalar_select %p193, %s192, 15
        %s195 = smul.addr %s194, 8
        %s196 = scalar_lea.vmem %s2, %s195
        %s197 = smul.u32 8, %s11
      $region36: #{dhcf_forward.9} parent=27 // pred_fallthru
        _
    $region28: #{dhcf_forward.9} parent=5 // pred_fallthru
      _
    %p198 = scmp.le.s32.totalorder 1, %s11
    %p199 = scmp.lt.s32.totalorder %s11, 3
    %p200 = pnand %p198, %p199
    %p201 = pneg %p200
    // Predicated region
    $region37: #{dhcf_forward.9} parent=5 // pred_check
      _
    $region38: #{dhcf_forward.9} parent=5 // pred_check_branch
      %203 = sbr.rel (%p200) target = $region40
    $region39: #{dhcf_forward.9} parent=5 // pred_region
      %s204 = ssub.s32 %s11, 1
      %s205 = smul.u32 8, %s16
      %p206 = scmp.lt.s32.totalorder %s205, 15
      %s207 = scalar_select %p206, %s205, 15
      %s208 = smul.addr %s207, 8
      %s209 = scalar_lea.vmem %s0, %s208
      %p210 = pneg %p37
      %p211 = pneg %p34
      %p212 = pneg %p58
      %p213 = pneg %p55
      %s214 = smul.u32 8, %s16
      %p215 = scmp.lt.s32.totalorder %s214, 15
      %s216 = scalar_select %p215, %s214, 15
      %s217 = smul.addr %s216, 8
      %s218 = scalar_lea.vmem %s2, %s217
      %p219 = pneg %p84
      %p220 = pneg %p81
      %p221 = pneg %p105
      %p222 = pneg %p102
      %p223 = pneg %p126
      %p224 = pneg %p123
      %p225 = pneg %p152
      %p226 = pneg %p149
      %s227 = smul.u32 8, %s16
      %p228 = scmp.lt.s32.totalorder %s227, 15
      %s229 = scalar_select %p228, %s227, 15
      %s230 = smul.addr %s229, 8
      %s231 = scalar_lea.vmem %s5, %s230
      %s232 = smul.u32 8, %s16
      %p233 = scmp.lt.s32.totalorder %s232, 15
      %s234 = scalar_select %p233, %s232, 15
      %s235 = smul.addr %s234, 8
      %s236 = scalar_lea.vmem %s0, %s235
      %s237 = smul.u32 8, %s16
      %s238 = smul.u32 8, %s16
      %p239 = scmp.lt.s32.totalorder %s238, 15
      %s240 = scalar_select %p239, %s238, 15
      %s241 = smul.addr %s240, 8
      %s242 = scalar_lea.vmem %s2, %s241
      %s243 = smul.u32 8, %s16
      %s244 = smul.u32 8, %s16
      %p245 = scmp.lt.s32.totalorder %s244, 15
      %s246 = scalar_select %p245, %s244, 15
      %s247 = smul.addr %s246, 8
      %s248 = scalar_lea.vmem %s5, %s247
      %s249 = smul.u32 8, %s16
      %v250 = vld [vmem:[%s236] sm:$0xff]
      %v251 = vld [vmem:[%s236 + $0x8] sm:$0xff]
      %v252 = vld [vmem:[%s236 + $0x10] sm:$0xff]
      %v253 = vld [vmem:[%s236 + $0x18] sm:$0xff]
      %v254 = vld [vmem:[%s236 + $0x20] sm:$0xff]
      %v255 = vld [vmem:[%s236 + $0x28] sm:$0xff]
      %v256 = vld [vmem:[%s236 + $0x30] sm:$0xff]
      %v257 = vld [vmem:[%s236 + $0x38] sm:$0xff]
      %v258 = vld [vmem:[%s1] sm:$0xff]
      %v259 = vld [vmem:[%s1 + $0x8] sm:$0xff]
      %v260 = vld [vmem:[%s1 + $0x10] sm:$0xff]
      %v261 = vld [vmem:[%s1 + $0x18] sm:$0xff]
      %v262 = vld [vmem:[%s1 + $0x20] sm:$0xff]
      %v263 = vld [vmem:[%s1 + $0x28] sm:$0xff]
      %v264 = vld [vmem:[%s1 + $0x30] sm:$0xff]
      %v265 = vld [vmem:[%s1 + $0x38] sm:$0xff]
      %vm266 = vcmask 523264
      %v268 = vsel %vm266, %v250, 0
      %v271 = vsel %vm266, %v251, 0
      %v274 = vsel %vm266, %v252, 0
      %v277 = vsel %vm266, %v253, 0
      %v280 = vsel %vm266, %v254, 0
      %v283 = vsel %vm266, %v255, 0
      %v286 = vsel %vm266, %v256, 0
      %v289 = vsel %vm266, %v257, 0
      %291 = vmatprep.subr.mxu0 0.0
      %292 = vmatpush1.msra.mxu0 %v258
      %293 = vmatprep.subr.mxu0 0.0
      %294 = vmatpush1.msra.mxu0 %v259
      %295 = vmatprep.subr.mxu0 0.0
      %296 = vmatpush1.msra.mxu0 %v260
      %297 = vmatprep.subr.mxu0 0.0
      %298 = vmatpush1.msra.mxu0 %v261
      %299 = vmatprep.subr.mxu0 0.0
      %300 = vmatpush1.msra.mxu0 %v262
      %301 = vmatprep.subr.mxu0 0.0
      %302 = vmatpush1.msra.mxu0 %v263
      %303 = vmatprep.subr.mxu0 0.0
      %304 = vmatpush1.msra.mxu0 %v264
      %305 = vmatprep.subr.mxu0 0.0
      %306 = vmatpush1.msra.mxu0 %v265
      %307 = vmatprep.subr.mxu0 0.0
      %308 = vmatpush1.msra.mxu0 0.0
      %309 = vmatprep.subr.mxu0 0.0
      %310 = vmatpush1.msra.mxu0 0.0
      %311 = vmatprep.subr.mxu0 0.0
      %312 = vmatpush1.msra.mxu0 0.0
      %313 = vmatprep.subr.mxu0 0.0
      %314 = vmatpush1.msra.mxu0 0.0
      %315 = vmatprep.subr.mxu0 0.0
      %316 = vmatpush1.msra.mxu0 0.0
      %317 = vmatprep.subr.mxu0 0.0
      %318 = vmatpush1.msra.mxu0 0.0
      %319 = vmatprep.subr.mxu0 0.0
      %320 = vmatpush1.msra.mxu0 0.0
      %321 = vmatprep.subr.mxu0 0.0
      %322 = vmatpush1.msra.mxu0 0.0
      %323 = vmatprep.subr.mxu0 0.0
      %324 = vmatpush1.msra.mxu0 0.0
      %325 = vmatprep.subr.mxu0 0.0
      %326 = vmatpush1.msra.mxu0 0.0
      %327 = vmatprep.subr.mxu0 0.0
      %328 = vmatpush1.msra.mxu0 0.0
      %329 = vmatprep.subr.mxu0 0.0
      %330 = vmatpush1.msra.mxu0 0.0
      %331 = vmatprep.subr.mxu0 0.0
      %332 = vmatpush1.msra.mxu0 0.0
      %333 = vmatprep.subr.mxu0 0.0
      %334 = vmatpush1.msra.mxu0 0.0
      %335 = vmatprep.subr.mxu0 0.0
      %336 = vmatpush1.msra.mxu0 0.0
      %337 = vmatprep.subr.mxu0 0.0
      %338 = vmatpush1.msra.mxu0 0.0
      %339 = vmatprep.subr.mxu0 0.0
      %340 = vmatpush1.msra.mxu0 0.0
      %341 = vmatprep.subr.mxu0 0.0
      %342 = vmatpush1.msra.mxu0 0.0
      %343 = vmatprep.subr.mxu0 0.0
      %344 = vmatpush1.msra.mxu0 0.0
      %345 = vmatprep.subr.mxu0 0.0
      %346 = vmatpush1.msra.mxu0 0.0
      %347 = vmatprep.subr.mxu0 0.0
      %348 = vmatpush1.msra.mxu0 0.0
      %349 = vmatprep.subr.mxu0 0.0
      %350 = vmatpush1.msra.mxu0 0.0
      %351 = vmatprep.subr.mxu0 0.0
      %352 = vmatpush1.msra.mxu0 0.0
      %353 = vmatprep.subr.mxu0 0.0
      %354 = vmatpush1.msra.mxu0 0.0
      %355 = vmatprep.mubr.f32.mxu0 0.0
      %356 = vmatmul.mubr.f32.gmra.mrb[0].mxu0 %v268
      %v357 = vpop.f32.mrb[0].mxu0
      %v358 = vadd.f32 0.0, %v357
      %v359 = vpop.f32.mrb[0].mxu0
      %360 = vmatprep.mubr.f32.mxu0 0.0
      %361 = vmatmul.mubr.f32.gmra.mrb[0].mxu0 %v271
      %v362 = vpop.f32.mrb[0].mxu0
      %v363 = vadd.f32 0.0, %v362
      %v364 = vpop.f32.mrb[0].mxu0
      %365 = vmatprep.mubr.f32.mxu0 0.0
      %366 = vmatmul.mubr.f32.gmra.mrb[0].mxu0 %v274
      %v367 = vpop.f32.mrb[0].mxu0
      %v368 = vadd.f32 0.0, %v367
      %v369 = vpop.f32.mrb[0].mxu0
      %370 = vmatprep.mubr.f32.mxu0 0.0
      %371 = vmatmul.mubr.f32.gmra.mrb[0].mxu0 %v277
      %v372 = vpop.f32.mrb[0].mxu0
      %v373 = vadd.f32 0.0, %v372
      %v374 = vpop.f32.mrb[0].mxu0
      %375 = vmatprep.mubr.f32.mxu0 0.0
      %376 = vmatmul.mubr.f32.gmra.mrb[0].mxu0 %v280
      %v377 = vpop.f32.mrb[0].mxu0
      %v378 = vadd.f32 0.0, %v377
      %v379 = vpop.f32.mrb[0].mxu0
      %380 = vmatprep.mubr.f32.mxu0 0.0
      %381 = vmatmul.mubr.f32.gmra.mrb[0].mxu0 %v283
      %v382 = vpop.f32.mrb[0].mxu0
      %v383 = vadd.f32 0.0, %v382
      %v384 = vpop.f32.mrb[0].mxu0
      %385 = vmatprep.mubr.f32.mxu0 0.0
      %386 = vmatmul.mubr.f32.gmra.mrb[0].mxu0 %v286
      %v387 = vpop.f32.mrb[0].mxu0
      %v388 = vadd.f32 0.0, %v387
      %v389 = vpop.f32.mrb[0].mxu0
      %390 = vmatprep.mubr.f32.mxu0 0.0
      %391 = vmatmul.mubr.f32.gmra.mrb[0].mxu0 %v289
      %v392 = vpop.f32.mrb[0].mxu0
      %v393 = vadd.f32 0.0, %v392
      %v394 = vpop.f32.mrb[0].mxu0
      %395 = vdwg.mxu0
      %v396 = vld [vmem:[%s3] sm:$0xff]
      %v397 = vld [vmem:[%s3 + $0x8] sm:$0xff]
      %v398 = vld [vmem:[%s3 + $0x10] sm:$0xff]
      %v399 = vld [vmem:[%s3 + $0x18] sm:$0xff]
      %v400 = vld [vmem:[%s4] sm:$0x1]
      %v402 = vlaneseq
      %v403 = vshrl.u32 %v402, 7
      %v404 = vsub.s32 0, %v403
      %v405 = vrot.slane %v400, %v404
      %vm407 = vcmask 261120
      %v409 = vsel %vm407, %v358, 0
      %v412 = vsel %vm407, %v363, 0
      %v415 = vsel %vm407, %v368, 0
      %v418 = vsel %vm407, %v373, 0
      %v421 = vsel %vm407, %v378, 0
      %v424 = vsel %vm407, %v383, 0
      %v427 = vsel %vm407, %v388, 0
      %v430 = vsel %vm407, %v393, 0
      %432 = vmatprep.subr.mxu0 0.0
      %433 = vmatpush1.msra.mxu0 %v396
      %434 = vmatprep.subr.mxu0 0.0
      %435 = vmatpush1.msra.mxu0 %v397
      %436 = vmatprep.subr.mxu0 0.0
      %437 = vmatpush1.msra.mxu0 %v398
      %438 = vmatprep.subr.mxu0 0.0
      %439 = vmatpush1.msra.mxu0 %v399
      %440 = vmatprep.subr.mxu0 0.0
      %441 = vmatpush1.msra.mxu0 0.0
      %442 = vmatprep.subr.mxu0 0.0
      %443 = vmatpush1.msra.mxu0 0.0
      %444 = vmatprep.subr.mxu0 0.0
      %445 = vmatpush1.msra.mxu0 0.0
      %446 = vmatprep.subr.mxu0 0.0
      %447 = vmatpush1.msra.mxu0 0.0
      %448 = vmatprep.subr.mxu0 0.0
      %449 = vmatpush1.msra.mxu0 0.0
      %450 = vmatprep.subr.mxu0 0.0
      %451 = vmatpush1.msra.mxu0 0.0
      %452 = vmatprep.subr.mxu0 0.0
      %453 = vmatpush1.msra.mxu0 0.0
      %454 = vmatprep.subr.mxu0 0.0
      %455 = vmatpush1.msra.mxu0 0.0
      %456 = vmatprep.subr.mxu0 0.0
      %457 = vmatpush1.msra.mxu0 0.0
      %458 = vmatprep.subr.mxu0 0.0
      %459 = vmatpush1.msra.mxu0 0.0
      %460 = vmatprep.subr.mxu0 0.0
      %461 = vmatpush1.msra.mxu0 0.0
      %462 = vmatprep.subr.mxu0 0.0
      %463 = vmatpush1.msra.mxu0 0.0
      %464 = vmatprep.subr.mxu0 0.0
      %465 = vmatpush1.msra.mxu0 0.0
      %466 = vmatprep.subr.mxu0 0.0
      %467 = vmatpush1.msra.mxu0 0.0
      %468 = vmatprep.subr.mxu0 0.0
      %469 = vmatpush1.msra.mxu0 0.0
      %470 = vmatprep.subr.mxu0 0.0
      %471 = vmatpush1.msra.mxu0 0.0
      %472 = vmatprep.subr.mxu0 0.0
      %473 = vmatpush1.msra.mxu0 0.0
      %474 = vmatprep.subr.mxu0 0.0
      %475 = vmatpush1.msra.mxu0 0.0
      %476 = vmatprep.subr.mxu0 0.0
      %477 = vmatpush1.msra.mxu0 0.0
      %478 = vmatprep.subr.mxu0 0.0
      %479 = vmatpush1.msra.mxu0 0.0
      %480 = vmatprep.subr.mxu0 0.0
      %481 = vmatpush1.msra.mxu0 0.0
      %482 = vmatprep.subr.mxu0 0.0
      %483 = vmatpush1.msra.mxu0 0.0
      %484 = vmatprep.subr.mxu0 0.0
      %485 = vmatpush1.msra.mxu0 0.0
      %486 = vmatprep.subr.mxu0 0.0
      %487 = vmatpush1.msra.mxu0 0.0
      %488 = vmatprep.subr.mxu0 0.0
      %489 = vmatpush1.msra.mxu0 0.0
      %490 = vmatprep.subr.mxu0 0.0
      %491 = vmatpush1.msra.mxu0 0.0
      %492 = vmatprep.subr.mxu0 0.0
      %493 = vmatpush1.msra.mxu0 0.0
      %494 = vmatprep.subr.mxu0 0.0
      %495 = vmatpush1.msra.mxu0 0.0
      %496 = vmatprep.mubr.f32.mxu0 0.0
      %497 = vmatmul.mubr.f32.gmra.mrb[0].mxu0 %v409
      %v498 = vpop.f32.mrb[0].mxu0
      %v499 = vadd.f32 %v405, %v498
      %v500 = vpop.f32.mrb[0].mxu0
      %501 = vmatprep.mubr.f32.mxu0 0.0
      %502 = vmatmul.mubr.f32.gmra.mrb[0].mxu0 %v412
      %v503 = vpop.f32.mrb[0].mxu0
      %v504 = vadd.f32 %v405, %v503
      %v505 = vpop.f32.mrb[0].mxu0
      %506 = vmatprep.mubr.f32.mxu0 0.0
      %507 = vmatmul.mubr.f32.gmra.mrb[0].mxu0 %v415
      %v508 = vpop.f32.mrb[0].mxu0
      %v509 = vadd.f32 %v405, %v508
      %v510 = vpop.f32.mrb[0].mxu0
      %511 = vmatprep.mubr.f32.mxu0 0.0
      %512 = vmatmul.mubr.f32.gmra.mrb[0].mxu0 %v418
      %v513 = vpop.f32.mrb[0].mxu0
      %v514 = vadd.f32 %v405, %v513
      %v515 = vpop.f32.mrb[0].mxu0
      %516 = vmatprep.mubr.f32.mxu0 0.0
      %517 = vmatmul.mubr.f32.gmra.mrb[0].mxu0 %v421
      %v518 = vpop.f32.mrb[0].mxu0
      %v519 = vadd.f32 %v405, %v518
      %v520 = vpop.f32.mrb[0].mxu0
      %521 = vmatprep.mubr.f32.mxu0 0.0
      %522 = vmatmul.mubr.f32.gmra.mrb[0].mxu0 %v424
      %v523 = vpop.f32.mrb[0].mxu0
      %v524 = vadd.f32 %v405, %v523
      %v525 = vpop.f32.mrb[0].mxu0
      %526 = vmatprep.mubr.f32.mxu0 0.0
      %527 = vmatmul.mubr.f32.gmra.mrb[0].mxu0 %v427
      %v528 = vpop.f32.mrb[0].mxu0
      %v529 = vadd.f32 %v405, %v528
      %v530 = vpop.f32.mrb[0].mxu0
      %531 = vmatprep.mubr.f32.mxu0 0.0
      %532 = vmatmul.mubr.f32.gmra.mrb[0].mxu0 %v430
      %v533 = vpop.f32.mrb[0].mxu0
      %v534 = vadd.f32 %v405, %v533
      %v535 = vpop.f32.mrb[0].mxu0
      %536 = vdwg.mxu0
      %v537 = vld [vmem:[%s242] sm:$0xff]
      %v538 = vld [vmem:[%s242 + $0x8] sm:$0xff]
      %v539 = vld [vmem:[%s242 + $0x10] sm:$0xff]
      %v540 = vld [vmem:[%s242 + $0x18] sm:$0xff]
      %v541 = vld [vmem:[%s242 + $0x20] sm:$0xff]
      %v542 = vld [vmem:[%s242 + $0x28] sm:$0xff]
      %v543 = vld [vmem:[%s242 + $0x30] sm:$0xff]
      %v544 = vld [vmem:[%s242 + $0x38] sm:$0xff]
      %v545 = vadd.f32 %v499, %v537
      %v546 = vadd.f32 %v504, %v538
      %v547 = vadd.f32 %v509, %v539
      %v548 = vadd.f32 %v514, %v540
      %v549 = vadd.f32 %v519, %v541
      %v550 = vadd.f32 %v524, %v542
      %v551 = vadd.f32 %v529, %v543
      %v552 = vadd.f32 %v534, %v544
      %v553 = vmax.f32 %v545, 0.0
      %v554 = vmax.f32 %v546, 0.0
      %v555 = vmax.f32 %v547, 0.0
      %v556 = vmax.f32 %v548, 0.0
      %v557 = vmax.f32 %v549, 0.0
      %v558 = vmax.f32 %v550, 0.0
      %v559 = vmax.f32 %v551, 0.0
      %v560 = vmax.f32 %v552, 0.0
      %561 = vst.msk [vmem:[%s248] sm:$0xff] %vm407, %v553
      %562 = vst.msk [vmem:[%s248 + $0x8] sm:$0xff] %vm407, %v554
      %563 = vst.msk [vmem:[%s248 + $0x10] sm:$0xff] %vm407, %v555
      %564 = vst.msk [vmem:[%s248 + $0x18] sm:$0xff] %vm407, %v556
      %565 = vst.msk [vmem:[%s248 + $0x20] sm:$0xff] %vm407, %v557
      %566 = vst.msk [vmem:[%s248 + $0x28] sm:$0xff] %vm407, %v558
      %567 = vst.msk [vmem:[%s248 + $0x30] sm:$0xff] %vm407, %v559
      %568 = vst.msk [vmem:[%s248 + $0x38] sm:$0xff] %vm407, %v560
      %s569 = smul.u32 8, %s16
      %p570 = scmp.lt.s32.totalorder %s569, 15
      %s571 = scalar_select %p570, %s569, 15
      %s572 = smul.addr %s571, 8
      %s573 = scalar_lea.vmem %s5, %s572
      // Predicated region
      $region41: #{dhcf_forward.9} parent=39 // pred_check
        %p574 = pneg %p149
      $region42: #{dhcf_forward.9} parent=39 // pred_check_branch
        %576 = sbr.rel (%p574) target = $region44
      $region43: #{dhcf_forward.9} parent=39 // pred_region
        %s577 = smul.u32 8, %s16
      $region44: #{dhcf_forward.9} parent=39 // pred_fallthru
        _
    $region40: #{dhcf_forward.9} parent=5 // pred_fallthru
      _
    %p578 = scmp.le.s32.totalorder 2, %s11
    // Predicated region
    $region45: #{dhcf_forward.9} parent=5 // pred_check
      %p579 = pneg %p578
    $region46: #{dhcf_forward.9} parent=5 // pred_check_branch
      %581 = sbr.rel (%p579) target = $region48
    $region47: #{dhcf_forward.9} parent=5 // pred_region
      %s582 = ssub.s32 %s11, 2
      // Predicated region
      $region49: #{dhcf_forward.9} parent=47 // pred_check
        %p583 = pneg %p155
      $region50: #{dhcf_forward.9} parent=47 // pred_check_branch
        %585 = sbr.rel (%p583) target = $region52
      $region51: #{dhcf_forward.9} parent=47 // pred_region
        %s586 = smul.u32 8, %s17
        %p587 = scmp.lt.s32.totalorder %s586, 15
        %s588 = scalar_select %p587, %s586, 15
        %s589 = smul.addr %s588, 8
        %s590 = scalar_lea.vmem %s5, %s589
      $region52: #{dhcf_forward.9} parent=47 // pred_fallthru
        _
    $region48: #{dhcf_forward.9} parent=5 // pred_fallthru
      _
  $region6: #{dhcf_forward.9} parent=0 // loop_footer
    %s15 = sadd.s32 1, %s11
  $region7: #{dhcf_forward.9} parent=0 // loop_footer_branch
    %10 = sbr.rel target = $region3
  $region8: #{dhcf_forward.9} parent=0 // loop_exit
    _

// kernel: dhcf_forward.11
$region0: #{dhcf_forward.11}
  #allocation0 [shape = 'u32[]', space=smem, size = 0x4, offset = 0x4, fixed_abs, tag = 'smem constant byte address 0x4 - core index']
  #allocation1 [shape = 'u32[144,128]{1,0:T(1,128)}', space=vmem, size = 0x12000, scoped, tag = 'internal scratch']
  %s0 = inlined_call_operand.vmem [shape: f32[128,64], index: 0, kind: input, shape index: {}]
  %s1 = inlined_call_operand.vmem [shape: f32[64,32], index: 1, kind: input, shape index: {}]
  %s2 = inlined_call_operand.vmem [shape: f32[128,32], index: 2, kind: input, shape index: {}]
  %s3 = inlined_call_operand.vmem [shape: f32[32,32], index: 3, kind: input, shape index: {}]
  %s4 = inlined_call_operand.vmem [shape: f32[1,32], index: 4, kind: input, shape index: {}]
  %s5 = inlined_call_operand.vmem [shape: f32[32,16], index: 5, kind: input, shape index: {}]
  %s6 = inlined_call_operand.vmem [shape: f32[1,16], index: 6, kind: input, shape index: {}]
  %s7 = inlined_call_operand.vmem [shape: f32[128,16], index: 7, kind: output, shape index: {}]
  %s8 = sld [smem:[#allocation0]]
  $region61: #{dhcf_forward.11} parent=0
    _
  %s10 = ssub.s32 1, %s8
  %s11 = scalar_select 0, %s10, %s8
  loop: start=0, step=1, limit=4
  $region2: #{dhcf_forward.11} parent=0 // loop_pre_header
    _
  $region3: #{dhcf_forward.11} parent=0 // loop_header
    %s13 = sphi 0, %s17
    %p14 = scmp.ge.s32.totalorder %s13, 4
    %s23 = sphi 0, %s25
    %s26 = sphi 0, %s23
    %s27 = sphi 0, %s26
    %s43 = sphi 0, %s27
    %s47 = sphi 0, %s47
    %s49 = sphi 0, %s47
    %s50 = sphi 0, %s49
    %s64 = sphi 0, %s50
    %s70 = sphi 0, %s72
    %s73 = sphi 0, %s70
    %s74 = sphi 0, %s73
    %s90 = sphi 0, %s74
    %s94 = sphi 0, %s94
    %s96 = sphi 0, %s94
    %s97 = sphi 0, %s96
    %s111 = sphi 0, %s97
    %s115 = sphi 0, %s115
    %s117 = sphi 0, %s115
    %s118 = sphi 0, %s117
    %s132 = sphi 0, %s118
    %s136 = sphi 0, %s136
    %s138 = sphi 0, %s136
    %s139 = sphi 0, %s138
    %s153 = sphi 0, %s139
    %s157 = sphi 0, %s157
    %s159 = sphi 0, %s157
    %s160 = sphi 0, %s159
    %s174 = sphi 0, %s160
    %s180 = sphi 0, %s182
    %s183 = sphi 0, %s180
    %s184 = sphi 0, %s183
    %s200 = sphi 0, %s184
  $region4: #{dhcf_forward.11} parent=0 // loop_header_branch
    %16 = sbr.rel (%p14) target = $region8
  $region5: #{dhcf_forward.11} parent=0 // loop_body
    %s18 = ssub.s32 %s13, 1
    %s19 = ssub.s32 %s13, 2
    %s20 = sadd.s32 %s13, 1
    %s21 = ssub.s32 %s13, %s20
    %p22 = scmp.eq.s32.totalorder %s21, 0
    %s24 = sadd.s32 %s23, 1
    %s25 = scalar_select %p22, %s23, %s24
    %p28 = pneg %p22
    %p29 = scmp.eq.s32.totalorder %s13, 1
    %p30 = por %p28, %p29
    %p31 = scmp.ne.s32.totalorder %s23, %s26
    %p32 = scmp.eq.s32.totalorder %s13, 0
    %p33 = por %p31, %p32
    %p34 = scmp.ne.s32.totalorder %s23, %s26
    %p35 = scmp.eq.s32.totalorder %s18, 1
    %p36 = por %p34, %p35
    %p37 = scmp.ne.s32.totalorder %s26, %s27
    %p38 = scmp.eq.s32.totalorder %s18, 0
    %p39 = por %p37, %p38
    %p40 = scmp.ne.s32.totalorder %s26, %s27
    %p41 = scmp.eq.s32.totalorder %s19, 1
    %p42 = por %p40, %p41
    %p44 = scmp.ne.s32.totalorder %s27, %s43
    %p45 = scmp.eq.s32.totalorder %s19, 0
    %p46 = por %p44, %p45
    %s48 = sadd.s32 %s47, 1
    %p51 = scmp.eq.s32.totalorder %s13, 1
    %p52 = scmp.ne.s32.totalorder %s47, %s49
    %p53 = scmp.eq.s32.totalorder %s13, 0
    %p54 = por %p52, %p53
    %p55 = scmp.ne.s32.totalorder %s47, %s49
    %p56 = scmp.eq.s32.totalorder %s18, 1
    %p57 = por %p55, %p56
    %p58 = scmp.ne.s32.totalorder %s49, %s50
    %p59 = scmp.eq.s32.totalorder %s18, 0
    %p60 = por %p58, %p59
    %p61 = scmp.ne.s32.totalorder %s49, %s50
    %p62 = scmp.eq.s32.totalorder %s19, 1
    %p63 = por %p61, %p62
    %p65 = scmp.ne.s32.totalorder %s50, %s64
    %p66 = scmp.eq.s32.totalorder %s19, 0
    %p67 = por %p65, %p66
    %s68 = ssub.s32 %s13, %s20
    %p69 = scmp.eq.s32.totalorder %s68, 0
    %s71 = sadd.s32 %s70, 1
    %s72 = scalar_select %p69, %s70, %s71
    %p75 = pneg %p69
    %p76 = scmp.eq.s32.totalorder %s13, 1
    %p77 = por %p75, %p76
    %p78 = scmp.ne.s32.totalorder %s70, %s73
    %p79 = scmp.eq.s32.totalorder %s13, 0
    %p80 = por %p78, %p79
    %p81 = scmp.ne.s32.totalorder %s70, %s73
    %p82 = scmp.eq.s32.totalorder %s18, 1
    %p83 = por %p81, %p82
    %p84 = scmp.ne.s32.totalorder %s73, %s74
    %p85 = scmp.eq.s32.totalorder %s18, 0
    %p86 = por %p84, %p85
    %p87 = scmp.ne.s32.totalorder %s73, %s74
    %p88 = scmp.eq.s32.totalorder %s19, 1
    %p89 = por %p87, %p88
    %p91 = scmp.ne.s32.totalorder %s74, %s90
    %p92 = scmp.eq.s32.totalorder %s19, 0
    %p93 = por %p91, %p92
    %s95 = sadd.s32 %s94, 1
    %p98 = scmp.eq.s32.totalorder %s13, 1
    %p99 = scmp.ne.s32.totalorder %s94, %s96
    %p100 = scmp.eq.s32.totalorder %s13, 0
    %p101 = por %p99, %p100
    %p102 = scmp.ne.s32.totalorder %s94, %s96
    %p103 = scmp.eq.s32.totalorder %s18, 1
    %p104 = por %p102, %p103
    %p105 = scmp.ne.s32.totalorder %s96, %s97
    %p106 = scmp.eq.s32.totalorder %s18, 0
    %p107 = por %p105, %p106
    %p108 = scmp.ne.s32.totalorder %s96, %s97
    %p109 = scmp.eq.s32.totalorder %s19, 1
    %p110 = por %p108, %p109
    %p112 = scmp.ne.s32.totalorder %s97, %s111
    %p113 = scmp.eq.s32.totalorder %s19, 0
    %p114 = por %p112, %p113
    %s116 = sadd.s32 %s115, 1
    %p119 = scmp.eq.s32.totalorder %s13, 1
    %p120 = scmp.ne.s32.totalorder %s115, %s117
    %p121 = scmp.eq.s32.totalorder %s13, 0
    %p122 = por %p120, %p121
    %p123 = scmp.ne.s32.totalorder %s115, %s117
    %p124 = scmp.eq.s32.totalorder %s18, 1
    %p125 = por %p123, %p124
    %p126 = scmp.ne.s32.totalorder %s117, %s118
    %p127 = scmp.eq.s32.totalorder %s18, 0
    %p128 = por %p126, %p127
    %p129 = scmp.ne.s32.totalorder %s117, %s118
    %p130 = scmp.eq.s32.totalorder %s19, 1
    %p131 = por %p129, %p130
    %p133 = scmp.ne.s32.totalorder %s118, %s132
    %p134 = scmp.eq.s32.totalorder %s19, 0
    %p135 = por %p133, %p134
    %s137 = sadd.s32 %s136, 1
    %p140 = scmp.eq.s32.totalorder %s13, 1
    %p141 = scmp.ne.s32.totalorder %s136, %s138
    %p142 = scmp.eq.s32.totalorder %s13, 0
    %p143 = por %p141, %p142
    %p144 = scmp.ne.s32.totalorder %s136, %s138
    %p145 = scmp.eq.s32.totalorder %s18, 1
    %p146 = por %p144, %p145
    %p147 = scmp.ne.s32.totalorder %s138, %s139
    %p148 = scmp.eq.s32.totalorder %s18, 0
    %p149 = por %p147, %p148
    %p150 = scmp.ne.s32.totalorder %s138, %s139
    %p151 = scmp.eq.s32.totalorder %s19, 1
    %p152 = por %p150, %p151
    %p154 = scmp.ne.s32.totalorder %s139, %s153
    %p155 = scmp.eq.s32.totalorder %s19, 0
    %p156 = por %p154, %p155
    %s158 = sadd.s32 %s157, 1
    %p161 = scmp.eq.s32.totalorder %s13, 1
    %p162 = scmp.ne.s32.totalorder %s157, %s159
    %p163 = scmp.eq.s32.totalorder %s13, 0
    %p164 = por %p162, %p163
    %p165 = scmp.ne.s32.totalorder %s157, %s159
    %p166 = scmp.eq.s32.totalorder %s18, 1
    %p167 = por %p165, %p166
    %p168 = scmp.ne.s32.totalorder %s159, %s160
    %p169 = scmp.eq.s32.totalorder %s18, 0
    %p170 = por %p168, %p169
    %p171 = scmp.ne.s32.totalorder %s159, %s160
    %p172 = scmp.eq.s32.totalorder %s19, 1
    %p173 = por %p171, %p172
    %p175 = scmp.ne.s32.totalorder %s160, %s174
    %p176 = scmp.eq.s32.totalorder %s19, 0
    %p177 = por %p175, %p176
    %s178 = ssub.s32 %s13, %s20
    %p179 = scmp.eq.s32.totalorder %s178, 0
    %s181 = sadd.s32 %s180, 1
    %s182 = scalar_select %p179, %s180, %s181
    %p185 = pneg %p179
    %p186 = scmp.eq.s32.totalorder %s13, 1
    %p187 = por %p185, %p186
    %p188 = scmp.ne.s32.totalorder %s180, %s183
    %p189 = scmp.eq.s32.totalorder %s13, 0
    %p190 = por %p188, %p189
    %p191 = scmp.ne.s32.totalorder %s180, %s183
    %p192 = scmp.eq.s32.totalorder %s18, 1
    %p193 = por %p191, %p192
    %p194 = scmp.ne.s32.totalorder %s183, %s184
    %p195 = scmp.eq.s32.totalorder %s18, 0
    %p196 = por %p194, %p195
    %p197 = scmp.ne.s32.totalorder %s183, %s184
    %p198 = scmp.eq.s32.totalorder %s19, 1
    %p199 = por %p197, %p198
    %p201 = scmp.ne.s32.totalorder %s184, %s200
    %p202 = scmp.eq.s32.totalorder %s19, 0
    %p203 = por %p201, %p202
    %p204 = scmp.le.s32.totalorder 1, %s13
    %p205 = scmp.lt.s32.totalorder %s13, 3
    %p206 = pnand %p204, %p205
    %p207 = pneg %p206
    // Predicated region
    $region9: #{dhcf_forward.11} parent=5 // pred_check
      _
    $region10: #{dhcf_forward.11} parent=5 // pred_check_branch
      %209 = sbr.rel (%p206) target = $region12
    $region11: #{dhcf_forward.11} parent=5 // pred_region
      %s210 = ssub.s32 %s13, 1
      // Predicated region
      $region13: #{dhcf_forward.11} parent=11 // pred_check
        %p211 = pneg %p60
      $region14: #{dhcf_forward.11} parent=11 // pred_check_branch
        %213 = sbr.rel (%p211) target = $region16
      $region15: #{dhcf_forward.11} parent=11 // pred_region
        _
      $region16: #{dhcf_forward.11} parent=11 // pred_fallthru
        _
      // Predicated region
      $region17: #{dhcf_forward.11} parent=11 // pred_check
        %p214 = pneg %p107
      $region18: #{dhcf_forward.11} parent=11 // pred_check_branch
        %216 = sbr.rel (%p214) target = $region20
      $region19: #{dhcf_forward.11} parent=11 // pred_region
        _
      $region20: #{dhcf_forward.11} parent=11 // pred_fallthru
        _
      // Predicated region
      $region21: #{dhcf_forward.11} parent=11 // pred_check
        %p217 = pneg %p128
      $region22: #{dhcf_forward.11} parent=11 // pred_check_branch
        %219 = sbr.rel (%p217) target = $region24
      $region23: #{dhcf_forward.11} parent=11 // pred_region
        _
      $region24: #{dhcf_forward.11} parent=11 // pred_fallthru
        _
      // Predicated region
      $region25: #{dhcf_forward.11} parent=11 // pred_check
        %p220 = pneg %p149
      $region26: #{dhcf_forward.11} parent=11 // pred_check_branch
        %222 = sbr.rel (%p220) target = $region28
      $region27: #{dhcf_forward.11} parent=11 // pred_region
        _
      $region28: #{dhcf_forward.11} parent=11 // pred_fallthru
        _
      // Predicated region
      $region29: #{dhcf_forward.11} parent=11 // pred_check
        %p223 = pneg %p170
      $region30: #{dhcf_forward.11} parent=11 // pred_check_branch
        %225 = sbr.rel (%p223) target = $region32
      $region31: #{dhcf_forward.11} parent=11 // pred_region
        _
      $region32: #{dhcf_forward.11} parent=11 // pred_fallthru
        _
    $region12: #{dhcf_forward.11} parent=5 // pred_fallthru
      _
    %p226 = scmp.lt.s32.totalorder %s13, 2
    // Predicated region
    $region33: #{dhcf_forward.11} parent=5 // pred_check
      %p227 = pneg %p226
    $region34: #{dhcf_forward.11} parent=5 // pred_check_branch
      %229 = sbr.rel (%p227) target = $region36
    $region35: #{dhcf_forward.11} parent=5 // pred_region
      // Predicated region
      $region37: #{dhcf_forward.11} parent=35 // pred_check
        %p230 = pneg %p33
      $region38: #{dhcf_forward.11} parent=35 // pred_check_branch
        %232 = sbr.rel (%p230) target = $region40
      $region39: #{dhcf_forward.11} parent=35 // pred_region
        %s233 = smul.u32 8, %s13
        %p234 = scmp.lt.s32.totalorder %s233, 15
        %s235 = scalar_select %p234, %s233, 15
        %s236 = smul.addr %s235, 8
        %s237 = scalar_lea.vmem %s0, %s236
        %s238 = smul.u32 8, %s13
      $region40: #{dhcf_forward.11} parent=35 // pred_fallthru
        _
      // Predicated region
      $region41: #{dhcf_forward.11} parent=35 // pred_check
        %p239 = pneg %p80
      $region42: #{dhcf_forward.11} parent=35 // pred_check_branch
        %241 = sbr.rel (%p239) target = $region44
      $region43: #{dhcf_forward.11} parent=35 // pred_region
        %s242 = smul.u32 8, %s13
        %p243 = scmp.lt.s32.totalorder %s242, 15
        %s244 = scalar_select %p243, %s242, 15
        %s245 = smul.addr %s244, 8
        %s246 = scalar_lea.vmem %s2, %s245
        %s247 = smul.u32 8, %s13
      $region44: #{dhcf_forward.11} parent=35 // pred_fallthru
        _
    $region36: #{dhcf_forward.11} parent=5 // pred_fallthru
      _
    %p248 = scmp.le.s32.totalorder 1, %s13
    %p249 = scmp.lt.s32.totalorder %s13, 3
    %p250 = pnand %p248, %p249
    %p251 = pneg %p250
    // Predicated region
    $region45: #{dhcf_forward.11} parent=5 // pred_check
      _
    $region46: #{dhcf_forward.11} parent=5 // pred_check_branch
      %253 = sbr.rel (%p250) target = $region48
    $region47: #{dhcf_forward.11} parent=5 // pred_region
      %s254 = ssub.s32 %s13, 1
      %s255 = smul.u32 8, %s18
      %p256 = scmp.lt.s32.totalorder %s255, 15
      %s257 = scalar_select %p256, %s255, 15
      %s258 = smul.addr %s257, 8
      %s259 = scalar_lea.vmem %s0, %s258
      %p260 = pneg %p39
      %p261 = pneg %p36
      %p262 = pneg %p60
      %p263 = pneg %p57
      %s264 = smul.u32 8, %s18
      %p265 = scmp.lt.s32.totalorder %s264, 15
      %s266 = scalar_select %p265, %s264, 15
      %s267 = smul.addr %s266, 8
      %s268 = scalar_lea.vmem %s2, %s267
      %p269 = pneg %p86
      %p270 = pneg %p83
      %p271 = pneg %p107
      %p272 = pneg %p104
      %p273 = pneg %p128
      %p274 = pneg %p125
      %p275 = pneg %p149
      %p276 = pneg %p146
      %p277 = pneg %p170
      %p278 = pneg %p167
      %p279 = pneg %p196
      %p280 = pneg %p193
      %s281 = smul.u32 8, %s18
      %p282 = scmp.lt.s32.totalorder %s281, 15
      %s283 = scalar_select %p282, %s281, 15
      %s284 = smul.addr %s283, 8
      %s285 = scalar_lea.vmem %s7, %s284
      %s286 = smul.u32 8, %s18
      %p287 = scmp.lt.s32.totalorder %s286, 15
      %s288 = scalar_select %p287, %s286, 15
      %s289 = smul.addr %s288, 8
      %s290 = scalar_lea.vmem %s0, %s289
      %s291 = smul.u32 8, %s18
      %s292 = smul.u32 8, %s18
      %p293 = scmp.lt.s32.totalorder %s292, 15
      %s294 = scalar_select %p293, %s292, 15
      %s295 = smul.addr %s294, 8
      %s296 = scalar_lea.vmem %s2, %s295
      %s297 = smul.u32 8, %s18
      %s298 = smul.u32 8, %s18
      %p299 = scmp.lt.s32.totalorder %s298, 15
      %s300 = scalar_select %p299, %s298, 15
      %s301 = smul.addr %s300, 8
      %s302 = scalar_lea.vmem %s7, %s301
      %s303 = smul.u32 8, %s18
      %v304 = vld [vmem:[%s290] sm:$0xff]
      %v305 = vld [vmem:[%s290 + $0x8] sm:$0xff]
      %v306 = vld [vmem:[%s290 + $0x10] sm:$0xff]
      %v307 = vld [vmem:[%s290 + $0x18] sm:$0xff]
      %v308 = vld [vmem:[%s290 + $0x20] sm:$0xff]
      %v309 = vld [vmem:[%s290 + $0x28] sm:$0xff]
      %v310 = vld [vmem:[%s290 + $0x30] sm:$0xff]
      %v311 = vld [vmem:[%s290 + $0x38] sm:$0xff]
      %v312 = vld [vmem:[%s1] sm:$0xff]
      %v313 = vld [vmem:[%s1 + $0x8] sm:$0xff]
      %v314 = vld [vmem:[%s1 + $0x10] sm:$0xff]
      %v315 = vld [vmem:[%s1 + $0x18] sm:$0xff]
      %v316 = vld [vmem:[%s1 + $0x20] sm:$0xff]
      %v317 = vld [vmem:[%s1 + $0x28] sm:$0xff]
      %v318 = vld [vmem:[%s1 + $0x30] sm:$0xff]
      %v319 = vld [vmem:[%s1 + $0x38] sm:$0xff]
      %vm320 = vcmask 523264
      %v322 = vsel %vm320, %v304, 0
      %v325 = vsel %vm320, %v305, 0
      %v328 = vsel %vm320, %v306, 0
      %v331 = vsel %vm320, %v307, 0
      %v334 = vsel %vm320, %v308, 0
      %v337 = vsel %vm320, %v309, 0
      %v340 = vsel %vm320, %v310, 0
      %v343 = vsel %vm320, %v311, 0
      %345 = vmatprep.subr.mxu0 0.0
      %346 = vmatpush1.msra.mxu0 %v312
      %347 = vmatprep.subr.mxu0 0.0
      %348 = vmatpush1.msra.mxu0 %v313
      %349 = vmatprep.subr.mxu0 0.0
      %350 = vmatpush1.msra.mxu0 %v314
      %351 = vmatprep.subr.mxu0 0.0
      %352 = vmatpush1.msra.mxu0 %v315
      %353 = vmatprep.subr.mxu0 0.0
      %354 = vmatpush1.msra.mxu0 %v316
      %355 = vmatprep.subr.mxu0 0.0
      %356 = vmatpush1.msra.mxu0 %v317
      %357 = vmatprep.subr.mxu0 0.0
      %358 = vmatpush1.msra.mxu0 %v318
      %359 = vmatprep.subr.mxu0 0.0
      %360 = vmatpush1.msra.mxu0 %v319
      %361 = vmatprep.subr.mxu0 0.0
      %362 = vmatpush1.msra.mxu0 0.0
      %363 = vmatprep.subr.mxu0 0.0
      %364 = vmatpush1.msra.mxu0 0.0
      %365 = vmatprep.subr.mxu0 0.0
      %366 = vmatpush1.msra.mxu0 0.0
      %367 = vmatprep.subr.mxu0 0.0
      %368 = vmatpush1.msra.mxu0 0.0
      %369 = vmatprep.subr.mxu0 0.0
      %370 = vmatpush1.msra.mxu0 0.0
      %371 = vmatprep.subr.mxu0 0.0
      %372 = vmatpush1.msra.mxu0 0.0
      %373 = vmatprep.subr.mxu0 0.0
      %374 = vmatpush1.msra.mxu0 0.0
      %375 = vmatprep.subr.mxu0 0.0
      %376 = vmatpush1.msra.mxu0 0.0
      %377 = vmatprep.subr.mxu0 0.0
      %378 = vmatpush1.msra.mxu0 0.0
      %379 = vmatprep.subr.mxu0 0.0
      %380 = vmatpush1.msra.mxu0 0.0
      %381 = vmatprep.subr.mxu0 0.0
      %382 = vmatpush1.msra.mxu0 0.0
      %383 = vmatprep.subr.mxu0 0.0
      %384 = vmatpush1.msra.mxu0 0.0
      %385 = vmatprep.subr.mxu0 0.0
      %386 = vmatpush1.msra.mxu0 0.0
      %387 = vmatprep.subr.mxu0 0.0
      %388 = vmatpush1.msra.mxu0 0.0
      %389 = vmatprep.subr.mxu0 0.0
      %390 = vmatpush1.msra.mxu0 0.0
      %391 = vmatprep.subr.mxu0 0.0
      %392 = vmatpush1.msra.mxu0 0.0
      %393 = vmatprep.subr.mxu0 0.0
      %394 = vmatpush1.msra.mxu0 0.0
      %395 = vmatprep.subr.mxu0 0.0
      %396 = vmatpush1.msra.mxu0 0.0
      %397 = vmatprep.subr.mxu0 0.0
      %398 = vmatpush1.msra.mxu0 0.0
      %399 = vmatprep.subr.mxu0 0.0
      %400 = vmatpush1.msra.mxu0 0.0
      %401 = vmatprep.subr.mxu0 0.0
      %402 = vmatpush1.msra.mxu0 0.0
      %403 = vmatprep.subr.mxu0 0.0
      %404 = vmatpush1.msra.mxu0 0.0
      %405 = vmatprep.subr.mxu0 0.0
      %406 = vmatpush1.msra.mxu0 0.0
      %407 = vmatprep.subr.mxu0 0.0
      %408 = vmatpush1.msra.mxu0 0.0
      %409 = vmatprep.mubr.f32.mxu0 0.0
      %410 = vmatmul.mubr.f32.gmra.mrb[0].mxu0 %v322
      %v411 = vpop.f32.mrb[0].mxu0
      %v412 = vadd.f32 0.0, %v411
      %v413 = vpop.f32.mrb[0].mxu0
      %414 = vmatprep.mubr.f32.mxu0 0.0
      %415 = vmatmul.mubr.f32.gmra.mrb[0].mxu0 %v325
      %v416 = vpop.f32.mrb[0].mxu0
      %v417 = vadd.f32 0.0, %v416
      %v418 = vpop.f32.mrb[0].mxu0
      %419 = vmatprep.mubr.f32.mxu0 0.0
      %420 = vmatmul.mubr.f32.gmra.mrb[0].mxu0 %v328
      %v421 = vpop.f32.mrb[0].mxu0
      %v422 = vadd.f32 0.0, %v421
      %v423 = vpop.f32.mrb[0].mxu0
      %424 = vmatprep.mubr.f32.mxu0 0.0
      %425 = vmatmul.mubr.f32.gmra.mrb[0].mxu0 %v331
      %v426 = vpop.f32.mrb[0].mxu0
      %v427 = vadd.f32 0.0, %v426
      %v428 = vpop.f32.mrb[0].mxu0
      %429 = vmatprep.mubr.f32.mxu0 0.0
      %430 = vmatmul.mubr.f32.gmra.mrb[0].mxu0 %v334
      %v431 = vpop.f32.mrb[0].mxu0
      %v432 = vadd.f32 0.0, %v431
      %v433 = vpop.f32.mrb[0].mxu0
      %434 = vmatprep.mubr.f32.mxu0 0.0
      %435 = vmatmul.mubr.f32.gmra.mrb[0].mxu0 %v337
      %v436 = vpop.f32.mrb[0].mxu0
      %v437 = vadd.f32 0.0, %v436
      %v438 = vpop.f32.mrb[0].mxu0
      %439 = vmatprep.mubr.f32.mxu0 0.0
      %440 = vmatmul.mubr.f32.gmra.mrb[0].mxu0 %v340
      %v441 = vpop.f32.mrb[0].mxu0
      %v442 = vadd.f32 0.0, %v441
      %v443 = vpop.f32.mrb[0].mxu0
      %444 = vmatprep.mubr.f32.mxu0 0.0
      %445 = vmatmul.mubr.f32.gmra.mrb[0].mxu0 %v343
      %v446 = vpop.f32.mrb[0].mxu0
      %v447 = vadd.f32 0.0, %v446
      %v448 = vpop.f32.mrb[0].mxu0
      %449 = vdwg.mxu0
      %v450 = vld [vmem:[%s3] sm:$0xff]
      %v451 = vld [vmem:[%s3 + $0x8] sm:$0xff]
      %v452 = vld [vmem:[%s3 + $0x10] sm:$0xff]
      %v453 = vld [vmem:[%s3 + $0x18] sm:$0xff]
      %v454 = vld [vmem:[%s4] sm:$0x1]
      %v456 = vlaneseq
      %v457 = vshrl.u32 %v456, 7
      %v458 = vsub.s32 0, %v457
      %v459 = vrot.slane %v454, %v458
      %vm461 = vcmask 261120
      %v463 = vsel %vm461, %v412, 0
      %v466 = vsel %vm461, %v417, 0
      %v469 = vsel %vm461, %v422, 0
      %v472 = vsel %vm461, %v427, 0
      %v475 = vsel %vm461, %v432, 0
      %v478 = vsel %vm461, %v437, 0
      %v481 = vsel %vm461, %v442, 0
      %v484 = vsel %vm461, %v447, 0
      %486 = vmatprep.subr.mxu0 0.0
      %487 = vmatpush1.msra.mxu0 %v450
      %488 = vmatprep.subr.mxu0 0.0
      %489 = vmatpush1.msra.mxu0 %v451
      %490 = vmatprep.subr.mxu0 0.0
      %491 = vmatpush1.msra.mxu0 %v452
      %492 = vmatprep.subr.mxu0 0.0
      %493 = vmatpush1.msra.mxu0 %v453
      %494 = vmatprep.subr.mxu0 0.0
      %495 = vmatpush1.msra.mxu0 0.0
      %496 = vmatprep.subr.mxu0 0.0
      %497 = vmatpush1.msra.mxu0 0.0
      %498 = vmatprep.subr.mxu0 0.0
      %499 = vmatpush1.msra.mxu0 0.0
      %500 = vmatprep.subr.mxu0 0.0
      %501 = vmatpush1.msra.mxu0 0.0
      %502 = vmatprep.subr.mxu0 0.0
      %503 = vmatpush1.msra.mxu0 0.0
      %504 = vmatprep.subr.mxu0 0.0
      %505 = vmatpush1.msra.mxu0 0.0
      %506 = vmatprep.subr.mxu0 0.0
      %507 = vmatpush1.msra.mxu0 0.0
      %508 = vmatprep.subr.mxu0 0.0
      %509 = vmatpush1.msra.mxu0 0.0
      %510 = vmatprep.subr.mxu0 0.0
      %511 = vmatpush1.msra.mxu0 0.0
      %512 = vmatprep.subr.mxu0 0.0
      %513 = vmatpush1.msra.mxu0 0.0
      %514 = vmatprep.subr.mxu0 0.0
      %515 = vmatpush1.msra.mxu0 0.0
      %516 = vmatprep.subr.mxu0 0.0
      %517 = vmatpush1.msra.mxu0 0.0
      %518 = vmatprep.subr.mxu0 0.0
      %519 = vmatpush1.msra.mxu0 0.0
      %520 = vmatprep.subr.mxu0 0.0
      %521 = vmatpush1.msra.mxu0 0.0
      %522 = vmatprep.subr.mxu0 0.0
      %523 = vmatpush1.msra.mxu0 0.0
      %524 = vmatprep.subr.mxu0 0.0
      %525 = vmatpush1.msra.mxu0 0.0
      %526 = vmatprep.subr.mxu0 0.0
      %527 = vmatpush1.msra.mxu0 0.0
      %528 = vmatprep.subr.mxu0 0.0
      %529 = vmatpush1.msra.mxu0 0.0
      %530 = vmatprep.subr.mxu0 0.0
      %531 = vmatpush1.msra.mxu0 0.0
      %532 = vmatprep.subr.mxu0 0.0
      %533 = vmatpush1.msra.mxu0 0.0
      %534 = vmatprep.subr.mxu0 0.0
      %535 = vmatpush1.msra.mxu0 0.0
      %536 = vmatprep.subr.mxu0 0.0
      %537 = vmatpush1.msra.mxu0 0.0
      %538 = vmatprep.subr.mxu0 0.0
      %539 = vmatpush1.msra.mxu0 0.0
      %540 = vmatprep.subr.mxu0 0.0
      %541 = vmatpush1.msra.mxu0 0.0
      %542 = vmatprep.subr.mxu0 0.0
      %543 = vmatpush1.msra.mxu0 0.0
      %544 = vmatprep.subr.mxu0 0.0
      %545 = vmatpush1.msra.mxu0 0.0
      %546 = vmatprep.subr.mxu0 0.0
      %547 = vmatpush1.msra.mxu0 0.0
      %548 = vmatprep.subr.mxu0 0.0
      %549 = vmatpush1.msra.mxu0 0.0
      %550 = vmatprep.mubr.f32.mxu0 0.0
      %551 = vmatmul.mubr.f32.gmra.mrb[0].mxu0 %v463
      %v552 = vpop.f32.mrb[0].mxu0
      %v553 = vadd.f32 %v459, %v552
      %v554 = vpop.f32.mrb[0].mxu0
      %555 = vmatprep.mubr.f32.mxu0 0.0
      %556 = vmatmul.mubr.f32.gmra.mrb[0].mxu0 %v466
      %v557 = vpop.f32.mrb[0].mxu0
      %v558 = vadd.f32 %v459, %v557
      %v559 = vpop.f32.mrb[0].mxu0
      %560 = vmatprep.mubr.f32.mxu0 0.0
      %561 = vmatmul.mubr.f32.gmra.mrb[0].mxu0 %v469
      %v562 = vpop.f32.mrb[0].mxu0
      %v563 = vadd.f32 %v459, %v562
      %v564 = vpop.f32.mrb[0].mxu0
      %565 = vmatprep.mubr.f32.mxu0 0.0
      %566 = vmatmul.mubr.f32.gmra.mrb[0].mxu0 %v472
      %v567 = vpop.f32.mrb[0].mxu0
      %v568 = vadd.f32 %v459, %v567
      %v569 = vpop.f32.mrb[0].mxu0
      %570 = vmatprep.mubr.f32.mxu0 0.0
      %571 = vmatmul.mubr.f32.gmra.mrb[0].mxu0 %v475
      %v572 = vpop.f32.mrb[0].mxu0
      %v573 = vadd.f32 %v459, %v572
      %v574 = vpop.f32.mrb[0].mxu0
      %575 = vmatprep.mubr.f32.mxu0 0.0
      %576 = vmatmul.mubr.f32.gmra.mrb[0].mxu0 %v478
      %v577 = vpop.f32.mrb[0].mxu0
      %v578 = vadd.f32 %v459, %v577
      %v579 = vpop.f32.mrb[0].mxu0
      %580 = vmatprep.mubr.f32.mxu0 0.0
      %581 = vmatmul.mubr.f32.gmra.mrb[0].mxu0 %v481
      %v582 = vpop.f32.mrb[0].mxu0
      %v583 = vadd.f32 %v459, %v582
      %v584 = vpop.f32.mrb[0].mxu0
      %585 = vmatprep.mubr.f32.mxu0 0.0
      %586 = vmatmul.mubr.f32.gmra.mrb[0].mxu0 %v484
      %v587 = vpop.f32.mrb[0].mxu0
      %v588 = vadd.f32 %v459, %v587
      %v589 = vpop.f32.mrb[0].mxu0
      %590 = vdwg.mxu0
      %v591 = vld [vmem:[%s296] sm:$0xff]
      %v592 = vld [vmem:[%s296 + $0x8] sm:$0xff]
      %v593 = vld [vmem:[%s296 + $0x10] sm:$0xff]
      %v594 = vld [vmem:[%s296 + $0x18] sm:$0xff]
      %v595 = vld [vmem:[%s296 + $0x20] sm:$0xff]
      %v596 = vld [vmem:[%s296 + $0x28] sm:$0xff]
      %v597 = vld [vmem:[%s296 + $0x30] sm:$0xff]
      %v598 = vld [vmem:[%s296 + $0x38] sm:$0xff]
      %v599 = vadd.f32 %v553, %v591
      %v600 = vadd.f32 %v558, %v592
      %v601 = vadd.f32 %v563, %v593
      %v602 = vadd.f32 %v568, %v594
      %v603 = vadd.f32 %v573, %v595
      %v604 = vadd.f32 %v578, %v596
      %v605 = vadd.f32 %v583, %v597
      %v606 = vadd.f32 %v588, %v598
      %v607 = vmax.f32 %v599, 0.0
      %v608 = vmax.f32 %v600, 0.0
      %v609 = vmax.f32 %v601, 0.0
      %v610 = vmax.f32 %v602, 0.0
      %v611 = vmax.f32 %v603, 0.0
      %v612 = vmax.f32 %v604, 0.0
      %v613 = vmax.f32 %v605, 0.0
      %v614 = vmax.f32 %v606, 0.0
      %v615 = vld [vmem:[%s5] sm:$0xff]
      %v616 = vld [vmem:[%s5 + $0x8] sm:$0xff]
      %v617 = vld [vmem:[%s5 + $0x10] sm:$0xff]
      %v618 = vld [vmem:[%s5 + $0x18] sm:$0xff]
      %v619 = vld [vmem:[%s6] sm:$0x1]
      %v621 = vlaneseq
      %v622 = vshrl.u32 %v621, 7
      %v623 = vsub.s32 0, %v622
      %v624 = vrot.slane %v619, %v623
      %v627 = vsel %vm461, %v607, 0
      %v630 = vsel %vm461, %v608, 0
      %v633 = vsel %vm461, %v609, 0
      %v636 = vsel %vm461, %v610, 0
      %v639 = vsel %vm461, %v611, 0
      %v642 = vsel %vm461, %v612, 0
      %v645 = vsel %vm461, %v613, 0
      %v648 = vsel %vm461, %v614, 0
      %650 = vmatprep.subr.mxu0 0.0
      %651 = vmatpush1.msra.mxu0 %v615
      %652 = vmatprep.subr.mxu0 0.0
      %653 = vmatpush1.msra.mxu0 %v616
      %654 = vmatprep.subr.mxu0 0.0
      %655 = vmatpush1.msra.mxu0 %v617
      %656 = vmatprep.subr.mxu0 0.0
      %657 = vmatpush1.msra.mxu0 %v618
      %658 = vmatprep.subr.mxu0 0.0
      %659 = vmatpush1.msra.mxu0 0.0
      %660 = vmatprep.subr.mxu0 0.0
      %661 = vmatpush1.msra.mxu0 0.0
      %662 = vmatprep.subr.mxu0 0.0
      %663 = vmatpush1.msra.mxu0 0.0
      %664 = vmatprep.subr.mxu0 0.0
      %665 = vmatpush1.msra.mxu0 0.0
      %666 = vmatprep.subr.mxu0 0.0
      %667 = vmatpush1.msra.mxu0 0.0
      %668 = vmatprep.subr.mxu0 0.0
      %669 = vmatpush1.msra.mxu0 0.0
      %670 = vmatprep.subr.mxu0 0.0
      %671 = vmatpush1.msra.mxu0 0.0
      %672 = vmatprep.subr.mxu0 0.0
      %673 = vmatpush1.msra.mxu0 0.0
      %674 = vmatprep.subr.mxu0 0.0
      %675 = vmatpush1.msra.mxu0 0.0
      %676 = vmatprep.subr.mxu0 0.0
      %677 = vmatpush1.msra.mxu0 0.0
      %678 = vmatprep.subr.mxu0 0.0
      %679 = vmatpush1.msra.mxu0 0.0
      %680 = vmatprep.subr.mxu0 0.0
      %681 = vmatpush1.msra.mxu0 0.0
      %682 = vmatprep.subr.mxu0 0.0
      %683 = vmatpush1.msra.mxu0 0.0
      %684 = vmatprep.subr.mxu0 0.0
      %685 = vmatpush1.msra.mxu0 0.0
      %686 = vmatprep.subr.mxu0 0.0
      %687 = vmatpush1.msra.mxu0 0.0
      %688 = vmatprep.subr.mxu0 0.0
      %689 = vmatpush1.msra.mxu0 0.0
      %690 = vmatprep.subr.mxu0 0.0
      %691 = vmatpush1.msra.mxu0 0.0
      %692 = vmatprep.subr.mxu0 0.0
      %693 = vmatpush1.msra.mxu0 0.0
      %694 = vmatprep.subr.mxu0 0.0
      %695 = vmatpush1.msra.mxu0 0.0
      %696 = vmatprep.subr.mxu0 0.0
      %697 = vmatpush1.msra.mxu0 0.0
      %698 = vmatprep.subr.mxu0 0.0
      %699 = vmatpush1.msra.mxu0 0.0
      %700 = vmatprep.subr.mxu0 0.0
      %701 = vmatpush1.msra.mxu0 0.0
      %702 = vmatprep.subr.mxu0 0.0
      %703 = vmatpush1.msra.mxu0 0.0
      %704 = vmatprep.subr.mxu0 0.0
      %705 = vmatpush1.msra.mxu0 0.0
      %706 = vmatprep.subr.mxu0 0.0
      %707 = vmatpush1.msra.mxu0 0.0
      %708 = vmatprep.subr.mxu0 0.0
      %709 = vmatpush1.msra.mxu0 0.0
      %710 = vmatprep.subr.mxu0 0.0
      %711 = vmatpush1.msra.mxu0 0.0
      %712 = vmatprep.subr.mxu0 0.0
      %713 = vmatpush1.msra.mxu0 0.0
      %714 = vmatprep.mubr.f32.mxu0 0.0
      %715 = vmatmul.mubr.f32.gmra.mrb[0].mxu0 %v627
      %v716 = vpop.f32.mrb[0].mxu0
      %v717 = vadd.f32 %v624, %v716
      %v718 = vpop.f32.mrb[0].mxu0
      %719 = vmatprep.mubr.f32.mxu0 0.0
      %720 = vmatmul.mubr.f32.gmra.mrb[0].mxu0 %v630
      %v721 = vpop.f32.mrb[0].mxu0
      %v722 = vadd.f32 %v624, %v721
      %v723 = vpop.f32.mrb[0].mxu0
      %724 = vmatprep.mubr.f32.mxu0 0.0
      %725 = vmatmul.mubr.f32.gmra.mrb[0].mxu0 %v633
      %v726 = vpop.f32.mrb[0].mxu0
      %v727 = vadd.f32 %v624, %v726
      %v728 = vpop.f32.mrb[0].mxu0
      %729 = vmatprep.mubr.f32.mxu0 0.0
      %730 = vmatmul.mubr.f32.gmra.mrb[0].mxu0 %v636
      %v731 = vpop.f32.mrb[0].mxu0
      %v732 = vadd.f32 %v624, %v731
      %v733 = vpop.f32.mrb[0].mxu0
      %734 = vmatprep.mubr.f32.mxu0 0.0
      %735 = vmatmul.mubr.f32.gmra.mrb[0].mxu0 %v639
      %v736 = vpop.f32.mrb[0].mxu0
      %v737 = vadd.f32 %v624, %v736
      %v738 = vpop.f32.mrb[0].mxu0
      %739 = vmatprep.mubr.f32.mxu0 0.0
      %740 = vmatmul.mubr.f32.gmra.mrb[0].mxu0 %v642
      %v741 = vpop.f32.mrb[0].mxu0
      %v742 = vadd.f32 %v624, %v741
      %v743 = vpop.f32.mrb[0].mxu0
      %744 = vmatprep.mubr.f32.mxu0 0.0
      %745 = vmatmul.mubr.f32.gmra.mrb[0].mxu0 %v645
      %v746 = vpop.f32.mrb[0].mxu0
      %v747 = vadd.f32 %v624, %v746
      %v748 = vpop.f32.mrb[0].mxu0
      %749 = vmatprep.mubr.f32.mxu0 0.0
      %750 = vmatmul.mubr.f32.gmra.mrb[0].mxu0 %v648
      %v751 = vpop.f32.mrb[0].mxu0
      %v752 = vadd.f32 %v624, %v751
      %v753 = vpop.f32.mrb[0].mxu0
      %754 = vdwg.mxu0
      %vm755 = vcmask 130048
      %756 = vst.msk [vmem:[%s302] sm:$0xff] %vm755, %v717
      %757 = vst.msk [vmem:[%s302 + $0x8] sm:$0xff] %vm755, %v722
      %758 = vst.msk [vmem:[%s302 + $0x10] sm:$0xff] %vm755, %v727
      %759 = vst.msk [vmem:[%s302 + $0x18] sm:$0xff] %vm755, %v732
      %760 = vst.msk [vmem:[%s302 + $0x20] sm:$0xff] %vm755, %v737
      %761 = vst.msk [vmem:[%s302 + $0x28] sm:$0xff] %vm755, %v742
      %762 = vst.msk [vmem:[%s302 + $0x30] sm:$0xff] %vm755, %v747
      %763 = vst.msk [vmem:[%s302 + $0x38] sm:$0xff] %vm755, %v752
      %s764 = smul.u32 8, %s18
      %p765 = scmp.lt.s32.totalorder %s764, 15
      %s766 = scalar_select %p765, %s764, 15
      %s767 = smul.addr %s766, 8
      %s768 = scalar_lea.vmem %s7, %s767
      // Predicated region
      $region49: #{dhcf_forward.11} parent=47 // pred_check
        %p769 = pneg %p193
      $region50: #{dhcf_forward.11} parent=47 // pred_check_branch
        %771 = sbr.rel (%p769) target = $region52
      $region51: #{dhcf_forward.11} parent=47 // pred_region
        %s772 = smul.u32 8, %s18
      $region52: #{dhcf_forward.11} parent=47 // pred_fallthru
        _
    $region48: #{dhcf_forward.11} parent=5 // pred_fallthru
      _
    %p773 = scmp.le.s32.totalorder 2, %s13
    // Predicated region
    $region53: #{dhcf_forward.11} parent=5 // pred_check
      %p774 = pneg %p773
    $region54: #{dhcf_forward.11} parent=5 // pred_check_branch
      %776 = sbr.rel (%p774) target = $region56
    $region55: #{dhcf_forward.11} parent=5 // pred_region
      %s777 = ssub.s32 %s13, 2
      // Predicated region
      $region57: #{dhcf_forward.11} parent=55 // pred_check
        %p778 = pneg %p199
      $region58: #{dhcf_forward.11} parent=55 // pred_check_branch
        %780 = sbr.rel (%p778) target = $region60
      $region59: #{dhcf_forward.11} parent=55 // pred_region
        %s781 = smul.u32 8, %s19
        %p782 = scmp.lt.s32.totalorder %s781, 15
        %s783 = scalar_select %p782, %s781, 15
        %s784 = smul.addr %s783, 8
        %s785 = scalar_lea.vmem %s7, %s784
      $region60: #{dhcf_forward.11} parent=55 // pred_fallthru
        _
    $region56: #{dhcf_forward.11} parent=5 // pred_fallthru
      _
  $region6: #{dhcf_forward.11} parent=0 // loop_footer
    %s17 = sadd.s32 1, %s13
  $region7: #{dhcf_forward.11} parent=0 // loop_footer_branch
    %12 = sbr.rel target = $region3
  $region8: #{dhcf_forward.11} parent=0 // loop_exit
    _

</llo_original>
